<compile_context>
chip_gen: v7x
topology: tpu7x:2x2x1
jax: 0.10.0
libtpu: 0.0.40
codegen_flags: <defaults>
</compile_context>

<pallas_src>
import jax
import jax.numpy as jnp
import numpy as np
from jax.experimental import pallas as pl
from jax.experimental.pallas import tpu as pltpu

# Layer widths: encoder 1000 -> ... -> 8, decoder 8 -> ... -> 1000
DIMS = [1000, 512, 256, 128, 64, 32, 16, 8, 16, 32, 64, 128, 256, 512, 1000]
N_LAYERS = len(DIMS) - 1            # 14 Linear layers
# No ReLU after the last encoder layer (idx 6) and the last decoder layer (idx 13)
NO_RELU = (6, N_LAYERS - 1)

FEAT_IN_PAD = 1024                  # lane-pad 1000 -> 1024 (input / layer-0 K)
FEAT_OUT_PAD = 1024                 # lane-pad 1000 -> 1024 (layer-13 N / output)
TB_MAX = 256                        # batch tile: fills v6e/v7x MXU rows,
                                    # keeps VMEM well inside the 32 MiB default


def ae_kernel(x_ref, *refs):
    """refs = [W_0..W_13 (bf16, pre-transposed), b_0..b_13 (f32), out_ref]."""
    w_refs = refs[:N_LAYERS]
    b_refs = refs[N_LAYERS:2 * N_LAYERS]
    out_ref = refs[2 * N_LAYERS]

    h = x_ref[...].astype(jnp.bfloat16)                      # (TB, 1024) bf16
    for i in range(N_LAYERS):
        acc = jnp.dot(h, w_refs[i][...],
                      preferred_element_type=jnp.float32)    # MXU, f32 acc
        acc = acc + b_refs[i][...]                           # bias in f32
        if i not in NO_RELU:
            acc = jnp.maximum(acc, 0.0)                      # ReLU on the VPU
        h = acc if i == N_LAYERS - 1 else acc.astype(jnp.bfloat16)
    out_ref[...] = h                                         # (TB, 1024) f32


def autoencoder_forward(x, params):
    """x: (B, 1000) f32. params: list of (W_(in,out) f32, b_(1,out) f32)."""
    B = x.shape[0]
    assert x.shape[1] == DIMS[0]

    # ---- parameter prep (layout plumbing only): pad edges, cast to bf16 ----
    weights, biases = [], []
    for i, (W, b) in enumerate(params):
        if i == 0:                                    # pad contraction rows
            W = jnp.pad(W, ((0, FEAT_IN_PAD - DIMS[0]), (0, 0)))
        if i == N_LAYERS - 1:                         # pad output cols + bias
            W = jnp.pad(W, ((0, 0), (0, FEAT_OUT_PAD - DIMS[-1])))
            b = jnp.pad(b, ((0, 0), (0, FEAT_OUT_PAD - DIMS[-1])))
        weights.append(W.astype(jnp.bfloat16))
        biases.append(b.astype(jnp.float32))

    # ---- batch tiling: pad batch to a multiple of the tile ----
    B8 = max(8, -(-B // 8) * 8)
    if B8 <= TB_MAX:
        TB, B_pad = B8, B8
    else:
        TB = TB_MAX
        B_pad = -(-B8 // TB) * TB
    x_pad = jnp.pad(x.astype(jnp.float32),
                    ((0, B_pad - B), (0, FEAT_IN_PAD - DIMS[0])))

    grid = (B_pad // TB,)
    x_spec = pl.BlockSpec((TB, FEAT_IN_PAD), lambda i: (i, 0))
    o_spec = pl.BlockSpec((TB, FEAT_OUT_PAD), lambda i: (i, 0))
    # Full-array blocks with constant index_map -> weights/biases stay resident
    # in VMEM across grid steps (no re-DMA).
    w_specs = [pl.BlockSpec(w.shape, lambda i: (0, 0)) for w in weights]
    b_specs = [pl.BlockSpec(b.shape, lambda i: (0, 0)) for b in biases]

    flops = 2 * B_pad * sum(DIMS[i] * DIMS[i + 1] for i in range(N_LAYERS))
    bytes_accessed = (sum(w.size * 2 for w in weights)      # bf16 weights
                      + sum(b.size * 4 for b in biases)     # f32 biases
                      + x_pad.size * 4                      # activations in
                      + B_pad * FEAT_OUT_PAD * 4)           # activations out

    out_pad = pl.pallas_call(
        ae_kernel,
        out_shape=jax.ShapeDtypeStruct((B_pad, FEAT_OUT_PAD), jnp.float32),
        grid=grid,
        in_specs=[x_spec] + w_specs + b_specs,
        out_specs=o_spec,
        compiler_params=pltpu.CompilerParams(
            dimension_semantics=("parallel",)),
        cost_estimate=pl.CostEstimate(
            flops=flops, transcendentals=0, bytes_accessed=bytes_accessed),
    )(x_pad, *weights, *biases)

    return out_pad[:B, :DIMS[-1]]


def init_params(key):
    """Deterministic init mimicking PyTorch's default U(-1/sqrt(fan_in), ...)."""
    params = []
    for i in range(N_LAYERS):
        fan_in, fan_out = DIMS[i], DIMS[i + 1]
        key, kw, kb = jax.random.split(key, 3)
        bound = 1.0 / np.sqrt(fan_in)
        # Stored pre-transposed: (in, out) so the kernel computes x @ W + b.
        W = jax.random.uniform(kw, (fan_in, fan_out), jnp.float32, -bound, bound)
        b = jax.random.uniform(kb, (1, fan_out), jnp.float32, -bound, bound)
        params.append((W, b))
    return params


def reference_forward_f32(x, params):
    h = x
    for i, (W, b) in enumerate(params):
        h = h @ W + b
        if i not in NO_RELU:
            h = jnp.maximum(h, 0.0)
    return h


def reference_forward_mixed(x, params):
    """Same numerics as the kernel: bf16 weights/activations, f32 accumulate."""
    h = x.astype(jnp.bfloat16)
    for i, (W, b) in enumerate(params):
        acc = jnp.dot(h, W.astype(jnp.bfloat16),
                      preferred_element_type=jnp.float32) + b
        if i not in NO_RELU:
            acc = jnp.maximum(acc, 0.0)
        h = acc if i == len(params) - 1 else acc.astype(jnp.bfloat16)
    return h


if __name__ == "__main__":
    key = jax.random.PRNGKey(0)
    key, kx = jax.random.split(key)

    batch = 8
    x = jax.random.normal(kx, (batch, DIMS[0]), jnp.float32)
    params = init_params(key)

    out = jax.block_until_ready(autoencoder_forward(x, params))

    # Exact-numerics reference (bf16 weights/acts, f32 accumulate) -> tight.
    ref = jax.block_until_ready(reference_forward_mixed(x, params))
    np.testing.assert_allclose(np.asarray(out), np.asarray(ref),
                               rtol=2e-3, atol=2e-3)

    # Loose sanity check against the full-f32 model (bf16 rounding only).
    ref32 = jax.block_until_ready(reference_forward_f32(x, params))
    max_err = float(jnp.max(jnp.abs(out - ref32)))
    assert max_err < 0.15, f"deviation from f32 reference too large: {max_err}"

    print("KERNEL_OK")
</pallas_src>

<mosaic_0001>
module attributes {stable_mosaic.version = 11 : i64} {
  func.func @ae_kernel(%arg0: i32, %arg1: memref<8x1024xf32, #tpu.memory_space<vmem>>, %arg2: memref<1024x512xbf16, #tpu.memory_space<vmem>>, %arg3: memref<512x256xbf16, #tpu.memory_space<vmem>>, %arg4: memref<256x128xbf16, #tpu.memory_space<vmem>>, %arg5: memref<128x64xbf16, #tpu.memory_space<vmem>>, %arg6: memref<64x32xbf16, #tpu.memory_space<vmem>>, %arg7: memref<32x16xbf16, #tpu.memory_space<vmem>>, %arg8: memref<16x8xbf16, #tpu.memory_space<vmem>>, %arg9: memref<8x16xbf16, #tpu.memory_space<vmem>>, %arg10: memref<16x32xbf16, #tpu.memory_space<vmem>>, %arg11: memref<32x64xbf16, #tpu.memory_space<vmem>>, %arg12: memref<64x128xbf16, #tpu.memory_space<vmem>>, %arg13: memref<128x256xbf16, #tpu.memory_space<vmem>>, %arg14: memref<256x512xbf16, #tpu.memory_space<vmem>>, %arg15: memref<512x1024xbf16, #tpu.memory_space<vmem>>, %arg16: memref<1x512xf32, #tpu.memory_space<vmem>>, %arg17: memref<1x256xf32, #tpu.memory_space<vmem>>, %arg18: memref<1x128xf32, #tpu.memory_space<vmem>>, %arg19: memref<1x64xf32, #tpu.memory_space<vmem>>, %arg20: memref<1x32xf32, #tpu.memory_space<vmem>>, %arg21: memref<1x16xf32, #tpu.memory_space<vmem>>, %arg22: memref<1x8xf32, #tpu.memory_space<vmem>>, %arg23: memref<1x16xf32, #tpu.memory_space<vmem>>, %arg24: memref<1x32xf32, #tpu.memory_space<vmem>>, %arg25: memref<1x64xf32, #tpu.memory_space<vmem>>, %arg26: memref<1x128xf32, #tpu.memory_space<vmem>>, %arg27: memref<1x256xf32, #tpu.memory_space<vmem>>, %arg28: memref<1x512xf32, #tpu.memory_space<vmem>>, %arg29: memref<1x1024xf32, #tpu.memory_space<vmem>>, %arg30: memref<8x1024xf32, #tpu.memory_space<vmem>>) attributes {dimension_semantics = [#tpu.dimension_semantics<parallel>], iteration_bounds = array<i64: 1>, scalar_prefetch = 0 : i64, scratch_operands = 0 : i64, tpu.core_type = #tpu.core_type<tc>, window_params = [{transform_indices = @transform_0, window_bounds = array<i64: 8, 1024>}, {pipeline_mode = #tpu.pipeline_mode<synchronous>, transform_indices = @transform_1, window_bounds = array<i64: 1024, 512>}, {pipeline_mode = #tpu.pipeline_mode<synchronous>, transform_indices = @transform_2, window_bounds = array<i64: 512, 256>}, {pipeline_mode = #tpu.pipeline_mode<synchronous>, transform_indices = @transform_3, window_bounds = array<i64: 256, 128>}, {pipeline_mode = #tpu.pipeline_mode<synchronous>, transform_indices = @transform_4, window_bounds = array<i64: 128, 64>}, {pipeline_mode = #tpu.pipeline_mode<synchronous>, transform_indices = @transform_5, window_bounds = array<i64: 64, 32>}, {pipeline_mode = #tpu.pipeline_mode<synchronous>, transform_indices = @transform_6, window_bounds = array<i64: 32, 16>}, {pipeline_mode = #tpu.pipeline_mode<synchronous>, transform_indices = @transform_7, window_bounds = array<i64: 16, 8>}, {pipeline_mode = #tpu.pipeline_mode<synchronous>, transform_indices = @transform_8, window_bounds = array<i64: 8, 16>}, {pipeline_mode = #tpu.pipeline_mode<synchronous>, transform_indices = @transform_9, window_bounds = array<i64: 16, 32>}, {pipeline_mode = #tpu.pipeline_mode<synchronous>, transform_indices = @transform_10, window_bounds = array<i64: 32, 64>}, {pipeline_mode = #tpu.pipeline_mode<synchronous>, transform_indices = @transform_11, window_bounds = array<i64: 64, 128>}, {pipeline_mode = #tpu.pipeline_mode<synchronous>, transform_indices = @transform_12, window_bounds = array<i64: 128, 256>}, {pipeline_mode = #tpu.pipeline_mode<synchronous>, transform_indices = @transform_13, window_bounds = array<i64: 256, 512>}, {pipeline_mode = #tpu.pipeline_mode<synchronous>, transform_indices = @transform_14, window_bounds = array<i64: 512, 1024>}, {pipeline_mode = #tpu.pipeline_mode<synchronous>, transform_indices = @transform_15, window_bounds = array<i64: 1, 512>}, {pipeline_mode = #tpu.pipeline_mode<synchronous>, transform_indices = @transform_16, window_bounds = array<i64: 1, 256>}, {pipeline_mode = #tpu.pipeline_mode<synchronous>, transform_indices = @transform_17, window_bounds = array<i64: 1, 128>}, {pipeline_mode = #tpu.pipeline_mode<synchronous>, transform_indices = @transform_18, window_bounds = array<i64: 1, 64>}, {pipeline_mode = #tpu.pipeline_mode<synchronous>, transform_indices = @transform_19, window_bounds = array<i64: 1, 32>}, {pipeline_mode = #tpu.pipeline_mode<synchronous>, transform_indices = @transform_20, window_bounds = array<i64: 1, 16>}, {pipeline_mode = #tpu.pipeline_mode<synchronous>, transform_indices = @transform_21, window_bounds = array<i64: 1, 8>}, {pipeline_mode = #tpu.pipeline_mode<synchronous>, transform_indices = @transform_22, window_bounds = array<i64: 1, 16>}, {pipeline_mode = #tpu.pipeline_mode<synchronous>, transform_indices = @transform_23, window_bounds = array<i64: 1, 32>}, {pipeline_mode = #tpu.pipeline_mode<synchronous>, transform_indices = @transform_24, window_bounds = array<i64: 1, 64>}, {pipeline_mode = #tpu.pipeline_mode<synchronous>, transform_indices = @transform_25, window_bounds = array<i64: 1, 128>}, {pipeline_mode = #tpu.pipeline_mode<synchronous>, transform_indices = @transform_26, window_bounds = array<i64: 1, 256>}, {pipeline_mode = #tpu.pipeline_mode<synchronous>, transform_indices = @transform_27, window_bounds = array<i64: 1, 512>}, {pipeline_mode = #tpu.pipeline_mode<synchronous>, transform_indices = @transform_28, window_bounds = array<i64: 1, 1024>}, {transform_indices = @transform_29, window_bounds = array<i64: 8, 1024>}]} {
    %c0 = arith.constant 0 : index
    %c0_0 = arith.constant 0 : index
    %0 = vector.load %arg1[%c0, %c0_0] : memref<8x1024xf32, #tpu.memory_space<vmem>>, vector<8x1024xf32>
    %1 = arith.truncf %0 : vector<8x1024xf32> to vector<8x1024xbf16>
    %c0_1 = arith.constant 0 : index
    %c0_2 = arith.constant 0 : index
    %2 = vector.load %arg2[%c0_1, %c0_2] : memref<1024x512xbf16, #tpu.memory_space<vmem>>, vector<1024x512xbf16>
    %cst = arith.constant dense<0.000000e+00> : vector<8x512xf32>
    %3 = tpu.matmul %1, %2, %cst {dimension_numbers = #tpu.dot_dimension_numbers<[1], [0], [0], [1], [0, 0, 1, 1], [], []>} : vector<8x1024xbf16>, vector<1024x512xbf16>, vector<8x512xf32> -> vector<8x512xf32>
    %c0_3 = arith.constant 0 : index
    %c0_4 = arith.constant 0 : index
    %4 = vector.load %arg16[%c0_3, %c0_4] : memref<1x512xf32, #tpu.memory_space<vmem>>, vector<1x512xf32>
    %5 = vector.broadcast %4 : vector<1x512xf32> to vector<8x512xf32>
    %6 = arith.addf %3, %5 : vector<8x512xf32>
    %cst_5 = arith.constant 0.000000e+00 : f32
    %7 = vector.broadcast %cst_5 : f32 to vector<8x512xf32>
    %8 = arith.maximumf %6, %7 : vector<8x512xf32>
    %9 = arith.truncf %8 : vector<8x512xf32> to vector<8x512xbf16>
    %c0_6 = arith.constant 0 : index
    %c0_7 = arith.constant 0 : index
    %10 = vector.load %arg3[%c0_6, %c0_7] : memref<512x256xbf16, #tpu.memory_space<vmem>>, vector<512x256xbf16>
    %cst_8 = arith.constant dense<0.000000e+00> : vector<8x256xf32>
    %11 = tpu.matmul %9, %10, %cst_8 {dimension_numbers = #tpu.dot_dimension_numbers<[1], [0], [0], [1], [0, 0, 1, 1], [], []>} : vector<8x512xbf16>, vector<512x256xbf16>, vector<8x256xf32> -> vector<8x256xf32>
    %c0_9 = arith.constant 0 : index
    %c0_10 = arith.constant 0 : index
    %12 = vector.load %arg17[%c0_9, %c0_10] : memref<1x256xf32, #tpu.memory_space<vmem>>, vector<1x256xf32>
    %13 = vector.broadcast %12 : vector<1x256xf32> to vector<8x256xf32>
    %14 = arith.addf %11, %13 : vector<8x256xf32>
    %cst_11 = arith.constant 0.000000e+00 : f32
    %15 = vector.broadcast %cst_11 : f32 to vector<8x256xf32>
    %16 = arith.maximumf %14, %15 : vector<8x256xf32>
    %17 = arith.truncf %16 : vector<8x256xf32> to vector<8x256xbf16>
    %c0_12 = arith.constant 0 : index
    %c0_13 = arith.constant 0 : index
    %18 = vector.load %arg4[%c0_12, %c0_13] : memref<256x128xbf16, #tpu.memory_space<vmem>>, vector<256x128xbf16>
    %cst_14 = arith.constant dense<0.000000e+00> : vector<8x128xf32>
    %19 = tpu.matmul %17, %18, %cst_14 {dimension_numbers = #tpu.dot_dimension_numbers<[1], [0], [0], [1], [0, 0, 1, 1], [], []>} : vector<8x256xbf16>, vector<256x128xbf16>, vector<8x128xf32> -> vector<8x128xf32>
    %c0_15 = arith.constant 0 : index
    %c0_16 = arith.constant 0 : index
    %20 = vector.load %arg18[%c0_15, %c0_16] : memref<1x128xf32, #tpu.memory_space<vmem>>, vector<1x128xf32>
    %21 = vector.broadcast %20 : vector<1x128xf32> to vector<8x128xf32>
    %22 = arith.addf %19, %21 : vector<8x128xf32>
    %cst_17 = arith.constant 0.000000e+00 : f32
    %23 = vector.broadcast %cst_17 : f32 to vector<8x128xf32>
    %24 = arith.maximumf %22, %23 : vector<8x128xf32>
    %25 = arith.truncf %24 : vector<8x128xf32> to vector<8x128xbf16>
    %c0_18 = arith.constant 0 : index
    %c0_19 = arith.constant 0 : index
    %26 = vector.load %arg5[%c0_18, %c0_19] : memref<128x64xbf16, #tpu.memory_space<vmem>>, vector<128x64xbf16>
    %cst_20 = arith.constant dense<0.000000e+00> : vector<8x64xf32>
    %27 = tpu.matmul %25, %26, %cst_20 {dimension_numbers = #tpu.dot_dimension_numbers<[1], [0], [0], [1], [0, 0, 1, 1], [], []>} : vector<8x128xbf16>, vector<128x64xbf16>, vector<8x64xf32> -> vector<8x64xf32>
    %c0_21 = arith.constant 0 : index
    %c0_22 = arith.constant 0 : index
    %28 = vector.load %arg19[%c0_21, %c0_22] : memref<1x64xf32, #tpu.memory_space<vmem>>, vector<1x64xf32>
    %29 = vector.broadcast %28 : vector<1x64xf32> to vector<8x64xf32>
    %30 = arith.addf %27, %29 : vector<8x64xf32>
    %cst_23 = arith.constant 0.000000e+00 : f32
    %31 = vector.broadcast %cst_23 : f32 to vector<8x64xf32>
    %32 = arith.maximumf %30, %31 : vector<8x64xf32>
    %33 = arith.truncf %32 : vector<8x64xf32> to vector<8x64xbf16>
    %c0_24 = arith.constant 0 : index
    %c0_25 = arith.constant 0 : index
    %34 = vector.load %arg6[%c0_24, %c0_25] : memref<64x32xbf16, #tpu.memory_space<vmem>>, vector<64x32xbf16>
    %cst_26 = arith.constant dense<0.000000e+00> : vector<8x32xf32>
    %35 = tpu.matmul %33, %34, %cst_26 {dimension_numbers = #tpu.dot_dimension_numbers<[1], [0], [0], [1], [0, 0, 1, 1], [], []>} : vector<8x64xbf16>, vector<64x32xbf16>, vector<8x32xf32> -> vector<8x32xf32>
    %c0_27 = arith.constant 0 : index
    %c0_28 = arith.constant 0 : index
    %36 = vector.load %arg20[%c0_27, %c0_28] : memref<1x32xf32, #tpu.memory_space<vmem>>, vector<1x32xf32>
    %37 = vector.broadcast %36 : vector<1x32xf32> to vector<8x32xf32>
    %38 = arith.addf %35, %37 : vector<8x32xf32>
    %cst_29 = arith.constant 0.000000e+00 : f32
    %39 = vector.broadcast %cst_29 : f32 to vector<8x32xf32>
    %40 = arith.maximumf %38, %39 : vector<8x32xf32>
    %41 = arith.truncf %40 : vector<8x32xf32> to vector<8x32xbf16>
    %c0_30 = arith.constant 0 : index
    %c0_31 = arith.constant 0 : index
    %42 = vector.load %arg7[%c0_30, %c0_31] : memref<32x16xbf16, #tpu.memory_space<vmem>>, vector<32x16xbf16>
    %cst_32 = arith.constant dense<0.000000e+00> : vector<8x16xf32>
    %43 = tpu.matmul %41, %42, %cst_32 {dimension_numbers = #tpu.dot_dimension_numbers<[1], [0], [0], [1], [0, 0, 1, 1], [], []>} : vector<8x32xbf16>, vector<32x16xbf16>, vector<8x16xf32> -> vector<8x16xf32>
    %c0_33 = arith.constant 0 : index
    %c0_34 = arith.constant 0 : index
    %44 = vector.load %arg21[%c0_33, %c0_34] : memref<1x16xf32, #tpu.memory_space<vmem>>, vector<1x16xf32>
    %45 = vector.broadcast %44 : vector<1x16xf32> to vector<8x16xf32>
    %46 = arith.addf %43, %45 : vector<8x16xf32>
    %cst_35 = arith.constant 0.000000e+00 : f32
    %47 = vector.broadcast %cst_35 : f32 to vector<8x16xf32>
    %48 = arith.maximumf %46, %47 : vector<8x16xf32>
    %49 = arith.truncf %48 : vector<8x16xf32> to vector<8x16xbf16>
    %c0_36 = arith.constant 0 : index
    %c0_37 = arith.constant 0 : index
    %50 = vector.load %arg8[%c0_36, %c0_37] : memref<16x8xbf16, #tpu.memory_space<vmem>>, vector<16x8xbf16>
    %cst_38 = arith.constant dense<0.000000e+00> : vector<8x8xf32>
    %51 = tpu.matmul %49, %50, %cst_38 {dimension_numbers = #tpu.dot_dimension_numbers<[1], [0], [0], [1], [0, 0, 1, 1], [], []>} : vector<8x16xbf16>, vector<16x8xbf16>, vector<8x8xf32> -> vector<8x8xf32>
    %c0_39 = arith.constant 0 : index
    %c0_40 = arith.constant 0 : index
    %52 = vector.load %arg22[%c0_39, %c0_40] : memref<1x8xf32, #tpu.memory_space<vmem>>, vector<1x8xf32>
    %53 = vector.broadcast %52 : vector<1x8xf32> to vector<8x8xf32>
    %54 = arith.addf %51, %53 : vector<8x8xf32>
    %55 = arith.truncf %54 : vector<8x8xf32> to vector<8x8xbf16>
    %c0_41 = arith.constant 0 : index
    %c0_42 = arith.constant 0 : index
    %56 = vector.load %arg9[%c0_41, %c0_42] : memref<8x16xbf16, #tpu.memory_space<vmem>>, vector<8x16xbf16>
    %cst_43 = arith.constant dense<0.000000e+00> : vector<8x16xf32>
    %57 = tpu.matmul %55, %56, %cst_43 {dimension_numbers = #tpu.dot_dimension_numbers<[1], [0], [0], [1], [0, 0, 1, 1], [], []>} : vector<8x8xbf16>, vector<8x16xbf16>, vector<8x16xf32> -> vector<8x16xf32>
    %c0_44 = arith.constant 0 : index
    %c0_45 = arith.constant 0 : index
    %58 = vector.load %arg23[%c0_44, %c0_45] : memref<1x16xf32, #tpu.memory_space<vmem>>, vector<1x16xf32>
    %59 = vector.broadcast %58 : vector<1x16xf32> to vector<8x16xf32>
    %60 = arith.addf %57, %59 : vector<8x16xf32>
    %cst_46 = arith.constant 0.000000e+00 : f32
    %61 = vector.broadcast %cst_46 : f32 to vector<8x16xf32>
    %62 = arith.maximumf %60, %61 : vector<8x16xf32>
    %63 = arith.truncf %62 : vector<8x16xf32> to vector<8x16xbf16>
    %c0_47 = arith.constant 0 : index
    %c0_48 = arith.constant 0 : index
    %64 = vector.load %arg10[%c0_47, %c0_48] : memref<16x32xbf16, #tpu.memory_space<vmem>>, vector<16x32xbf16>
    %cst_49 = arith.constant dense<0.000000e+00> : vector<8x32xf32>
    %65 = tpu.matmul %63, %64, %cst_49 {dimension_numbers = #tpu.dot_dimension_numbers<[1], [0], [0], [1], [0, 0, 1, 1], [], []>} : vector<8x16xbf16>, vector<16x32xbf16>, vector<8x32xf32> -> vector<8x32xf32>
    %c0_50 = arith.constant 0 : index
    %c0_51 = arith.constant 0 : index
    %66 = vector.load %arg24[%c0_50, %c0_51] : memref<1x32xf32, #tpu.memory_space<vmem>>, vector<1x32xf32>
    %67 = vector.broadcast %66 : vector<1x32xf32> to vector<8x32xf32>
    %68 = arith.addf %65, %67 : vector<8x32xf32>
    %cst_52 = arith.constant 0.000000e+00 : f32
    %69 = vector.broadcast %cst_52 : f32 to vector<8x32xf32>
    %70 = arith.maximumf %68, %69 : vector<8x32xf32>
    %71 = arith.truncf %70 : vector<8x32xf32> to vector<8x32xbf16>
    %c0_53 = arith.constant 0 : index
    %c0_54 = arith.constant 0 : index
    %72 = vector.load %arg11[%c0_53, %c0_54] : memref<32x64xbf16, #tpu.memory_space<vmem>>, vector<32x64xbf16>
    %cst_55 = arith.constant dense<0.000000e+00> : vector<8x64xf32>
    %73 = tpu.matmul %71, %72, %cst_55 {dimension_numbers = #tpu.dot_dimension_numbers<[1], [0], [0], [1], [0, 0, 1, 1], [], []>} : vector<8x32xbf16>, vector<32x64xbf16>, vector<8x64xf32> -> vector<8x64xf32>
    %c0_56 = arith.constant 0 : index
    %c0_57 = arith.constant 0 : index
    %74 = vector.load %arg25[%c0_56, %c0_57] : memref<1x64xf32, #tpu.memory_space<vmem>>, vector<1x64xf32>
    %75 = vector.broadcast %74 : vector<1x64xf32> to vector<8x64xf32>
    %76 = arith.addf %73, %75 : vector<8x64xf32>
    %cst_58 = arith.constant 0.000000e+00 : f32
    %77 = vector.broadcast %cst_58 : f32 to vector<8x64xf32>
    %78 = arith.maximumf %76, %77 : vector<8x64xf32>
    %79 = arith.truncf %78 : vector<8x64xf32> to vector<8x64xbf16>
    %c0_59 = arith.constant 0 : index
    %c0_60 = arith.constant 0 : index
    %80 = vector.load %arg12[%c0_59, %c0_60] : memref<64x128xbf16, #tpu.memory_space<vmem>>, vector<64x128xbf16>
    %cst_61 = arith.constant dense<0.000000e+00> : vector<8x128xf32>
    %81 = tpu.matmul %79, %80, %cst_61 {dimension_numbers = #tpu.dot_dimension_numbers<[1], [0], [0], [1], [0, 0, 1, 1], [], []>} : vector<8x64xbf16>, vector<64x128xbf16>, vector<8x128xf32> -> vector<8x128xf32>
    %c0_62 = arith.constant 0 : index
    %c0_63 = arith.constant 0 : index
    %82 = vector.load %arg26[%c0_62, %c0_63] : memref<1x128xf32, #tpu.memory_space<vmem>>, vector<1x128xf32>
    %83 = vector.broadcast %82 : vector<1x128xf32> to vector<8x128xf32>
    %84 = arith.addf %81, %83 : vector<8x128xf32>
    %cst_64 = arith.constant 0.000000e+00 : f32
    %85 = vector.broadcast %cst_64 : f32 to vector<8x128xf32>
    %86 = arith.maximumf %84, %85 : vector<8x128xf32>
    %87 = arith.truncf %86 : vector<8x128xf32> to vector<8x128xbf16>
    %c0_65 = arith.constant 0 : index
    %c0_66 = arith.constant 0 : index
    %88 = vector.load %arg13[%c0_65, %c0_66] : memref<128x256xbf16, #tpu.memory_space<vmem>>, vector<128x256xbf16>
    %cst_67 = arith.constant dense<0.000000e+00> : vector<8x256xf32>
    %89 = tpu.matmul %87, %88, %cst_67 {dimension_numbers = #tpu.dot_dimension_numbers<[1], [0], [0], [1], [0, 0, 1, 1], [], []>} : vector<8x128xbf16>, vector<128x256xbf16>, vector<8x256xf32> -> vector<8x256xf32>
    %c0_68 = arith.constant 0 : index
    %c0_69 = arith.constant 0 : index
    %90 = vector.load %arg27[%c0_68, %c0_69] : memref<1x256xf32, #tpu.memory_space<vmem>>, vector<1x256xf32>
    %91 = vector.broadcast %90 : vector<1x256xf32> to vector<8x256xf32>
    %92 = arith.addf %89, %91 : vector<8x256xf32>
    %cst_70 = arith.constant 0.000000e+00 : f32
    %93 = vector.broadcast %cst_70 : f32 to vector<8x256xf32>
    %94 = arith.maximumf %92, %93 : vector<8x256xf32>
    %95 = arith.truncf %94 : vector<8x256xf32> to vector<8x256xbf16>
    %c0_71 = arith.constant 0 : index
    %c0_72 = arith.constant 0 : index
    %96 = vector.load %arg14[%c0_71, %c0_72] : memref<256x512xbf16, #tpu.memory_space<vmem>>, vector<256x512xbf16>
    %cst_73 = arith.constant dense<0.000000e+00> : vector<8x512xf32>
    %97 = tpu.matmul %95, %96, %cst_73 {dimension_numbers = #tpu.dot_dimension_numbers<[1], [0], [0], [1], [0, 0, 1, 1], [], []>} : vector<8x256xbf16>, vector<256x512xbf16>, vector<8x512xf32> -> vector<8x512xf32>
    %c0_74 = arith.constant 0 : index
    %c0_75 = arith.constant 0 : index
    %98 = vector.load %arg28[%c0_74, %c0_75] : memref<1x512xf32, #tpu.memory_space<vmem>>, vector<1x512xf32>
    %99 = vector.broadcast %98 : vector<1x512xf32> to vector<8x512xf32>
    %100 = arith.addf %97, %99 : vector<8x512xf32>
    %cst_76 = arith.constant 0.000000e+00 : f32
    %101 = vector.broadcast %cst_76 : f32 to vector<8x512xf32>
    %102 = arith.maximumf %100, %101 : vector<8x512xf32>
    %103 = arith.truncf %102 : vector<8x512xf32> to vector<8x512xbf16>
    %c0_77 = arith.constant 0 : index
    %c0_78 = arith.constant 0 : index
    %104 = vector.load %arg15[%c0_77, %c0_78] : memref<512x1024xbf16, #tpu.memory_space<vmem>>, vector<512x1024xbf16>
    %cst_79 = arith.constant dense<0.000000e+00> : vector<8x1024xf32>
    %105 = tpu.matmul %103, %104, %cst_79 {dimension_numbers = #tpu.dot_dimension_numbers<[1], [0], [0], [1], [0, 0, 1, 1], [], []>} : vector<8x512xbf16>, vector<512x1024xbf16>, vector<8x1024xf32> -> vector<8x1024xf32>
    %c0_80 = arith.constant 0 : index
    %c0_81 = arith.constant 0 : index
    %106 = vector.load %arg29[%c0_80, %c0_81] : memref<1x1024xf32, #tpu.memory_space<vmem>>, vector<1x1024xf32>
    %107 = vector.broadcast %106 : vector<1x1024xf32> to vector<8x1024xf32>
    %108 = arith.addf %105, %107 : vector<8x1024xf32>
    %c0_82 = arith.constant 0 : index
    %c0_83 = arith.constant 0 : index
    %109 = vector.load %arg30[%c0_82, %c0_83] : memref<8x1024xf32, #tpu.memory_space<vmem>>, vector<8x1024xf32>
    tpu.vector_store %arg30[%c0_82, %c0_83], %108 {strides = array<i32>} : memref<8x1024xf32, #tpu.memory_space<vmem>>, vector<8x1024xf32>,
    return
  }
  func.func @transform_0(%arg0: i32) -> (i32, i32) {
    %c0_i32 = arith.constant 0 : i32
    %c0_i32_0 = arith.constant 0 : i32
    return %arg0, %c0_i32 : i32, i32
  }
  func.func @transform_1(%arg0: i32) -> (i32, i32) {
    %c0_i32 = arith.constant 0 : i32
    %c0_i32_0 = arith.constant 0 : i32
    %c0_i32_1 = arith.constant 0 : i32
    return %c0_i32, %c0_i32_0 : i32, i32
  }
  func.func @transform_2(%arg0: i32) -> (i32, i32) {
    %c0_i32 = arith.constant 0 : i32
    %c0_i32_0 = arith.constant 0 : i32
    %c0_i32_1 = arith.constant 0 : i32
    return %c0_i32, %c0_i32_0 : i32, i32
  }
  func.func @transform_3(%arg0: i32) -> (i32, i32) {
    %c0_i32 = arith.constant 0 : i32
    %c0_i32_0 = arith.constant 0 : i32
    %c0_i32_1 = arith.constant 0 : i32
    return %c0_i32, %c0_i32_0 : i32, i32
  }
  func.func @transform_4(%arg0: i32) -> (i32, i32) {
    %c0_i32 = arith.constant 0 : i32
    %c0_i32_0 = arith.constant 0 : i32
    %c0_i32_1 = arith.constant 0 : i32
    return %c0_i32, %c0_i32_0 : i32, i32
  }
  func.func @transform_5(%arg0: i32) -> (i32, i32) {
    %c0_i32 = arith.constant 0 : i32
    %c0_i32_0 = arith.constant 0 : i32
    %c0_i32_1 = arith.constant 0 : i32
    return %c0_i32, %c0_i32_0 : i32, i32
  }
  func.func @transform_6(%arg0: i32) -> (i32, i32) {
    %c0_i32 = arith.constant 0 : i32
    %c0_i32_0 = arith.constant 0 : i32
    %c0_i32_1 = arith.constant 0 : i32
    return %c0_i32, %c0_i32_0 : i32, i32
  }
  func.func @transform_7(%arg0: i32) -> (i32, i32) {
    %c0_i32 = arith.constant 0 : i32
    %c0_i32_0 = arith.constant 0 : i32
    %c0_i32_1 = arith.constant 0 : i32
    return %c0_i32, %c0_i32_0 : i32, i32
  }
  func.func @transform_8(%arg0: i32) -> (i32, i32) {
    %c0_i32 = arith.constant 0 : i32
    %c0_i32_0 = arith.constant 0 : i32
    %c0_i32_1 = arith.constant 0 : i32
    return %c0_i32, %c0_i32_0 : i32, i32
  }
  func.func @transform_9(%arg0: i32) -> (i32, i32) {
    %c0_i32 = arith.constant 0 : i32
    %c0_i32_0 = arith.constant 0 : i32
    %c0_i32_1 = arith.constant 0 : i32
    return %c0_i32, %c0_i32_0 : i32, i32
  }
  func.func @transform_10(%arg0: i32) -> (i32, i32) {
    %c0_i32 = arith.constant 0 : i32
    %c0_i32_0 = arith.constant 0 : i32
    %c0_i32_1 = arith.constant 0 : i32
    return %c0_i32, %c0_i32_0 : i32, i32
  }
  func.func @transform_11(%arg0: i32) -> (i32, i32) {
    %c0_i32 = arith.constant 0 : i32
    %c0_i32_0 = arith.constant 0 : i32
    %c0_i32_1 = arith.constant 0 : i32
    return %c0_i32, %c0_i32_0 : i32, i32
  }
  func.func @transform_12(%arg0: i32) -> (i32, i32) {
    %c0_i32 = arith.constant 0 : i32
    %c0_i32_0 = arith.constant 0 : i32
    %c0_i32_1 = arith.constant 0 : i32
    return %c0_i32, %c0_i32_0 : i32, i32
  }
  func.func @transform_13(%arg0: i32) -> (i32, i32) {
    %c0_i32 = arith.constant 0 : i32
    %c0_i32_0 = arith.constant 0 : i32
    %c0_i32_1 = arith.constant 0 : i32
    return %c0_i32, %c0_i32_0 : i32, i32
  }
  func.func @transform_14(%arg0: i32) -> (i32, i32) {
    %c0_i32 = arith.constant 0 : i32
    %c0_i32_0 = arith.constant 0 : i32
    %c0_i32_1 = arith.constant 0 : i32
    return %c0_i32, %c0_i32_0 : i32, i32
  }
  func.func @transform_15(%arg0: i32) -> (i32, i32) {
    %c0_i32 = arith.constant 0 : i32
    %c0_i32_0 = arith.constant 0 : i32
    %c0_i32_1 = arith.constant 0 : i32
    return %c0_i32, %c0_i32_0 : i32, i32
  }
  func.func @transform_16(%arg0: i32) -> (i32, i32) {
    %c0_i32 = arith.constant 0 : i32
    %c0_i32_0 = arith.constant 0 : i32
    %c0_i32_1 = arith.constant 0 : i32
    return %c0_i32, %c0_i32_0 : i32, i32
  }
  func.func @transform_17(%arg0: i32) -> (i32, i32) {
    %c0_i32 = arith.constant 0 : i32
    %c0_i32_0 = arith.constant 0 : i32
    %c0_i32_1 = arith.constant 0 : i32
    return %c0_i32, %c0_i32_0 : i32, i32
  }
  func.func @transform_18(%arg0: i32) -> (i32, i32) {
    %c0_i32 = arith.constant 0 : i32
    %c0_i32_0 = arith.constant 0 : i32
    %c0_i32_1 = arith.constant 0 : i32
    return %c0_i32, %c0_i32_0 : i32, i32
  }
  func.func @transform_19(%arg0: i32) -> (i32, i32) {
    %c0_i32 = arith.constant 0 : i32
    %c0_i32_0 = arith.constant 0 : i32
    %c0_i32_1 = arith.constant 0 : i32
    return %c0_i32, %c0_i32_0 : i32, i32
  }
  func.func @transform_20(%arg0: i32) -> (i32, i32) {
    %c0_i32 = arith.constant 0 : i32
    %c0_i32_0 = arith.constant 0 : i32
    %c0_i32_1 = arith.constant 0 : i32
    return %c0_i32, %c0_i32_0 : i32, i32
  }
  func.func @transform_21(%arg0: i32) -> (i32, i32) {
    %c0_i32 = arith.constant 0 : i32
    %c0_i32_0 = arith.constant 0 : i32
    %c0_i32_1 = arith.constant 0 : i32
    return %c0_i32, %c0_i32_0 : i32, i32
  }
  func.func @transform_22(%arg0: i32) -> (i32, i32) {
    %c0_i32 = arith.constant 0 : i32
    %c0_i32_0 = arith.constant 0 : i32
    %c0_i32_1 = arith.constant 0 : i32
    return %c0_i32, %c0_i32_0 : i32, i32
  }
  func.func @transform_23(%arg0: i32) -> (i32, i32) {
    %c0_i32 = arith.constant 0 : i32
    %c0_i32_0 = arith.constant 0 : i32
    %c0_i32_1 = arith.constant 0 : i32
    return %c0_i32, %c0_i32_0 : i32, i32
  }
  func.func @transform_24(%arg0: i32) -> (i32, i32) {
    %c0_i32 = arith.constant 0 : i32
    %c0_i32_0 = arith.constant 0 : i32
    %c0_i32_1 = arith.constant 0 : i32
    return %c0_i32, %c0_i32_0 : i32, i32
  }
  func.func @transform_25(%arg0: i32) -> (i32, i32) {
    %c0_i32 = arith.constant 0 : i32
    %c0_i32_0 = arith.constant 0 : i32
    %c0_i32_1 = arith.constant 0 : i32
    return %c0_i32, %c0_i32_0 : i32, i32
  }
  func.func @transform_26(%arg0: i32) -> (i32, i32) {
    %c0_i32 = arith.constant 0 : i32
    %c0_i32_0 = arith.constant 0 : i32
    %c0_i32_1 = arith.constant 0 : i32
    return %c0_i32, %c0_i32_0 : i32, i32
  }
  func.func @transform_27(%arg0: i32) -> (i32, i32) {
    %c0_i32 = arith.constant 0 : i32
    %c0_i32_0 = arith.constant 0 : i32
    %c0_i32_1 = arith.constant 0 : i32
    return %c0_i32, %c0_i32_0 : i32, i32
  }
  func.func @transform_28(%arg0: i32) -> (i32, i32) {
    %c0_i32 = arith.constant 0 : i32
    %c0_i32_0 = arith.constant 0 : i32
    %c0_i32_1 = arith.constant 0 : i32
    return %c0_i32, %c0_i32_0 : i32, i32
  }
  func.func @transform_29(%arg0: i32) -> (i32, i32) {
    %c0_i32 = arith.constant 0 : i32
    %c0_i32_0 = arith.constant 0 : i32
    return %arg0, %c0_i32 : i32, i32
  }
}

</mosaic_0001>

<llo_original>
// kernel: tpu_custom_call.1
$region0: #{tpu_custom_call.1}
  #allocation0 [shape = 'u32[]', space=smem, size = 0x4, offset = 0x4, fixed_abs, tag = 'smem constant byte address 0x4 - core index']
  #allocation1 [shape = 'u32[144,128]{1,0:T(1,128)}', space=vmem, size = 0x12000, scoped, tag = 'internal scratch']
  %s0 = inlined_call_operand.smem [shape: u32[30], index: -1, kind: input, shape index: {}]
  %s1 = sld [smem:[%s0]]
  %s2 = scalar_lea.smem %s0, 1
  %s3 = sld [smem:[%s2]]
  %s4 = scalar_lea.smem %s0, 2
  %s5 = sld [smem:[%s4]]
  %s6 = scalar_lea.smem %s0, 3
  %s7 = sld [smem:[%s6]]
  %s8 = scalar_lea.smem %s0, 4
  %s9 = sld [smem:[%s8]]
  %s10 = scalar_lea.smem %s0, 5
  %s11 = sld [smem:[%s10]]
  %s12 = scalar_lea.smem %s0, 6
  %s13 = sld [smem:[%s12]]
  %s14 = scalar_lea.smem %s0, 7
  %s15 = sld [smem:[%s14]]
  %s16 = scalar_lea.smem %s0, 8
  %s17 = sld [smem:[%s16]]
  %s18 = scalar_lea.smem %s0, 9
  %s19 = sld [smem:[%s18]]
  %s20 = scalar_lea.smem %s0, 10
  %s21 = sld [smem:[%s20]]
  %s22 = scalar_lea.smem %s0, 11
  %s23 = sld [smem:[%s22]]
  %s24 = scalar_lea.smem %s0, 12
  %s25 = sld [smem:[%s24]]
  %s26 = scalar_lea.smem %s0, 13
  %s27 = sld [smem:[%s26]]
  %s28 = scalar_lea.smem %s0, 14
  %s29 = sld [smem:[%s28]]
  %s30 = scalar_lea.smem %s0, 15
  %s31 = sld [smem:[%s30]]
  %s32 = scalar_lea.smem %s0, 16
  %s33 = sld [smem:[%s32]]
  %s34 = scalar_lea.smem %s0, 17
  %s35 = sld [smem:[%s34]]
  %s36 = scalar_lea.smem %s0, 18
  %s37 = sld [smem:[%s36]]
  %s38 = scalar_lea.smem %s0, 19
  %s39 = sld [smem:[%s38]]
  %s40 = scalar_lea.smem %s0, 20
  %s41 = sld [smem:[%s40]]
  %s42 = scalar_lea.smem %s0, 21
  %s43 = sld [smem:[%s42]]
  %s44 = scalar_lea.smem %s0, 22
  %s45 = sld [smem:[%s44]]
  %s46 = scalar_lea.smem %s0, 23
  %s47 = sld [smem:[%s46]]
  %s48 = scalar_lea.smem %s0, 24
  %s49 = sld [smem:[%s48]]
  %s50 = scalar_lea.smem %s0, 25
  %s51 = sld [smem:[%s50]]
  %s52 = scalar_lea.smem %s0, 26
  %s53 = sld [smem:[%s52]]
  %s54 = scalar_lea.smem %s0, 27
  %s55 = sld [smem:[%s54]]
  %s56 = scalar_lea.smem %s0, 28
  %s57 = sld [smem:[%s56]]
  %s58 = scalar_lea.smem %s0, 29
  %s59 = sld [smem:[%s58]]
  %s60 = sld [smem:[#allocation0]]
  $region158: #{tpu_custom_call.1} parent=0
    _
  %s62 = ssub.s32 1, %s60
  %s63 = scalar_select 0, %s62, %s60
  $region1: #{tpu_custom_call.1} parent=0
    #allocation2 [shape = 'u8[32768]{0}', space=vmem, size = 0x8000, scoped, tag = 'input window, operand 0, single buffered']
    #allocation3 [shape = 's32[1]{0}', space=sflag, size = 0x4, scoped, tag = 'scoped memory for tpu_custom_call.1']
    #allocation4 [shape = 's32[1]{0}', space=sflag, size = 0x4, scoped, tag = 'scoped memory for tpu_custom_call.1']
    #allocation5 [shape = 'u8[1048576]{0}', space=vmem, size = 0x100000, scoped, tag = 'input window, operand 1, single buffered']
    #allocation6 [shape = 's32[1]{0}', space=sflag, size = 0x4, scoped, tag = 'scoped memory for tpu_custom_call.1']
    #allocation7 [shape = 'u8[262144]{0}', space=vmem, size = 0x40000, scoped, tag = 'input window, operand 2, single buffered']
    #allocation8 [shape = 'u8[2048]{0}', space=vmem, size = 0x800, scoped, tag = 'input window, operand 8, single buffered']
    #allocation9 [shape = 's32[1]{0}', space=sflag, size = 0x4, scoped, tag = 'scoped memory for tpu_custom_call.1']
    #allocation10 [shape = 'u8[4096]{0}', space=vmem, size = 0x1000, scoped, tag = 'input window, operand 9, single buffered']
    #allocation11 [shape = 'u8[65536]{0}', space=vmem, size = 0x10000, scoped, tag = 'input window, operand 12, single buffered']
    #allocation12 [shape = 's32[1]{0}', space=sflag, size = 0x4, scoped, tag = 'scoped memory for tpu_custom_call.1']
    #allocation13 [shape = 'u8[262144]{0}', space=vmem, size = 0x40000, scoped, tag = 'input window, operand 13, single buffered']
    #allocation14 [shape = 'u8[1048576]{0}', space=vmem, size = 0x100000, scoped, tag = 'input window, operand 14, single buffered']
    #allocation15 [shape = 's32[1]{0}', space=sflag, size = 0x4, scoped, tag = 'scoped memory for tpu_custom_call.1']
    #allocation16 [shape = 'u8[32768]{0}', space=vmem, size = 0x8000, scoped, tag = 'output window, operand 0, single buffered']
    %64 = vsyncpa [#allocation3], 0
    %65 = vsyncpa [#allocation6], 0
    %66 = vsyncpa [#allocation9], 0
    %67 = vsyncpa [#allocation12], 0
    %68 = vsyncpa [#allocation15], 0
    %69 = vsyncpa [#allocation4], 0
    // Predicated region
    $region2: #{tpu_custom_call.1} parent=1 // pred_check
      _
    $region3: #{tpu_custom_call.1} parent=1 // pred_check_branch
      %71 = sbr.rel (0) target = $region5
    $region4: #{tpu_custom_call.1} parent=1 // pred_region
      %s73 = ssub.s32 1024, 1024
      %74 = vsyncadd [#allocation3], %s73
      %s76 = sshll.u32 [#allocation2], 4
      %s77 = int_to_ptr.vmem [resolvable:$true] %s76
      %79 = dma.hbm_to_vmem [thread:$0]  %s1, 1024, %s77, [#allocation3]
    $region5: #{tpu_custom_call.1} parent=1 // pred_fallthru
      _
    // Predicated region
    $region6: #{tpu_custom_call.1} parent=1 // pred_check
      _
    $region7: #{tpu_custom_call.1} parent=1 // pred_check_branch
      %81 = sbr.rel (0) target = $region9
    $region8: #{tpu_custom_call.1} parent=1 // pred_region
      %s83 = ssub.s32 32768, 32768
      %84 = vsyncadd [#allocation6], %s83
      %s85 = sshll.u32 [#allocation5], 4
      %s86 = int_to_ptr.vmem [resolvable:$true] %s85
      %91 = dma.hbm_to_vmem [thread:$0]  %s3, 32768, %s86, [#allocation6], 256, 256, 16
    $region9: #{tpu_custom_call.1} parent=1 // pred_fallthru
      _
    // Predicated region
    $region10: #{tpu_custom_call.1} parent=1 // pred_check
      _
    $region11: #{tpu_custom_call.1} parent=1 // pred_check_branch
      %93 = sbr.rel (0) target = $region13
    $region12: #{tpu_custom_call.1} parent=1 // pred_region
      %s95 = ssub.s32 8192, 8192
      %96 = vsyncadd [#allocation6], %s95
      %s97 = sshll.u32 [#allocation7], 4
      %s98 = int_to_ptr.vmem [resolvable:$true] %s97
      %103 = dma.hbm_to_vmem [thread:$0]  %s5, 8192, %s98, [#allocation6], 128, 128, 8
    $region13: #{tpu_custom_call.1} parent=1 // pred_fallthru
      _
    // Predicated region
    $region14: #{tpu_custom_call.1} parent=1 // pred_check
      _
    $region15: #{tpu_custom_call.1} parent=1 // pred_check_branch
      %105 = sbr.rel (0) target = $region17
    $region16: #{tpu_custom_call.1} parent=1 // pred_region
      _
    $region17: #{tpu_custom_call.1} parent=1 // pred_fallthru
      _
    // Predicated region
    $region18: #{tpu_custom_call.1} parent=1 // pred_check
      _
    $region19: #{tpu_custom_call.1} parent=1 // pred_check_branch
      %107 = sbr.rel (0) target = $region21
    $region20: #{tpu_custom_call.1} parent=1 // pred_region
      _
    $region21: #{tpu_custom_call.1} parent=1 // pred_fallthru
      _
    // Predicated region
    $region22: #{tpu_custom_call.1} parent=1 // pred_check
      _
    $region23: #{tpu_custom_call.1} parent=1 // pred_check_branch
      %109 = sbr.rel (0) target = $region25
    $region24: #{tpu_custom_call.1} parent=1 // pred_region
      _
    $region25: #{tpu_custom_call.1} parent=1 // pred_fallthru
      _
    // Predicated region
    $region26: #{tpu_custom_call.1} parent=1 // pred_check
      _
    $region27: #{tpu_custom_call.1} parent=1 // pred_check_branch
      %111 = sbr.rel (0) target = $region29
    $region28: #{tpu_custom_call.1} parent=1 // pred_region
      _
    $region29: #{tpu_custom_call.1} parent=1 // pred_fallthru
      _
    // Predicated region
    $region30: #{tpu_custom_call.1} parent=1 // pred_check
      _
    $region31: #{tpu_custom_call.1} parent=1 // pred_check_branch
      %113 = sbr.rel (0) target = $region33
    $region32: #{tpu_custom_call.1} parent=1 // pred_region
      _
    $region33: #{tpu_custom_call.1} parent=1 // pred_fallthru
      _
    // Predicated region
    $region34: #{tpu_custom_call.1} parent=1 // pred_check
      _
    $region35: #{tpu_custom_call.1} parent=1 // pred_check_branch
      %115 = sbr.rel (0) target = $region37
    $region36: #{tpu_custom_call.1} parent=1 // pred_region
      %s117 = ssub.s32 64, 64
      %118 = vsyncadd [#allocation9], %s117
      %s120 = sshll.u32 [#allocation8], 4
      %s121 = int_to_ptr.vmem [resolvable:$true] %s120
      %123 = dma.hbm_to_vmem [thread:$0]  %s17, 64, %s121, [#allocation9]
    $region37: #{tpu_custom_call.1} parent=1 // pred_fallthru
      _
    // Predicated region
    $region38: #{tpu_custom_call.1} parent=1 // pred_check
      _
    $region39: #{tpu_custom_call.1} parent=1 // pred_check_branch
      %125 = sbr.rel (0) target = $region41
    $region40: #{tpu_custom_call.1} parent=1 // pred_region
      %s127 = ssub.s32 128, 128
      %128 = vsyncadd [#allocation9], %s127
      %s129 = sshll.u32 [#allocation10], 4
      %s130 = int_to_ptr.vmem [resolvable:$true] %s129
      %135 = dma.hbm_to_vmem [thread:$0]  %s19, 128, %s130, [#allocation9], 64, 64, 4
    $region41: #{tpu_custom_call.1} parent=1 // pred_fallthru
      _
    // Predicated region
    $region42: #{tpu_custom_call.1} parent=1 // pred_check
      _
    $region43: #{tpu_custom_call.1} parent=1 // pred_check_branch
      %137 = sbr.rel (0) target = $region45
    $region44: #{tpu_custom_call.1} parent=1 // pred_region
      _
    $region45: #{tpu_custom_call.1} parent=1 // pred_fallthru
      _
    // Predicated region
    $region46: #{tpu_custom_call.1} parent=1 // pred_check
      _
    $region47: #{tpu_custom_call.1} parent=1 // pred_check_branch
      %139 = sbr.rel (0) target = $region49
    $region48: #{tpu_custom_call.1} parent=1 // pred_region
      _
    $region49: #{tpu_custom_call.1} parent=1 // pred_fallthru
      _
    // Predicated region
    $region50: #{tpu_custom_call.1} parent=1 // pred_check
      _
    $region51: #{tpu_custom_call.1} parent=1 // pred_check_branch
      %141 = sbr.rel (0) target = $region53
    $region52: #{tpu_custom_call.1} parent=1 // pred_region
      %s143 = ssub.s32 2048, 2048
      %144 = vsyncadd [#allocation12], %s143
      %s145 = sshll.u32 [#allocation11], 4
      %s146 = int_to_ptr.vmem [resolvable:$true] %s145
      %151 = dma.hbm_to_vmem [thread:$0]  %s25, 2048, %s146, [#allocation12], 128, 128, 8
    $region53: #{tpu_custom_call.1} parent=1 // pred_fallthru
      _
    // Predicated region
    $region54: #{tpu_custom_call.1} parent=1 // pred_check
      _
    $region55: #{tpu_custom_call.1} parent=1 // pred_check_branch
      %153 = sbr.rel (0) target = $region57
    $region56: #{tpu_custom_call.1} parent=1 // pred_region
      %s155 = ssub.s32 8192, 8192
      %156 = vsyncadd [#allocation12], %s155
      %s157 = sshll.u32 [#allocation13], 4
      %s158 = int_to_ptr.vmem [resolvable:$true] %s157
      %163 = dma.hbm_to_vmem [thread:$0]  %s27, 8192, %s158, [#allocation12], 256, 256, 16
    $region57: #{tpu_custom_call.1} parent=1 // pred_fallthru
      _
    // Predicated region
    $region58: #{tpu_custom_call.1} parent=1 // pred_check
      _
    $region59: #{tpu_custom_call.1} parent=1 // pred_check_branch
      %165 = sbr.rel (0) target = $region61
    $region60: #{tpu_custom_call.1} parent=1 // pred_region
      %s167 = ssub.s32 32768, 32768
      %168 = vsyncadd [#allocation15], %s167
      %s169 = sshll.u32 [#allocation14], 4
      %s170 = int_to_ptr.vmem [resolvable:$true] %s169
      %175 = dma.hbm_to_vmem [thread:$0]  %s29, 32768, %s170, [#allocation15], 512, 512, 32
    $region61: #{tpu_custom_call.1} parent=1 // pred_fallthru
      _
    // Predicated region
    $region62: #{tpu_custom_call.1} parent=1 // pred_check
      _
    $region63: #{tpu_custom_call.1} parent=1 // pred_check_branch
      %177 = sbr.rel (0) target = $region65
    $region64: #{tpu_custom_call.1} parent=1 // pred_region
      _
    $region65: #{tpu_custom_call.1} parent=1 // pred_fallthru
      _
    // Predicated region
    $region66: #{tpu_custom_call.1} parent=1 // pred_check
      _
    $region67: #{tpu_custom_call.1} parent=1 // pred_check_branch
      %179 = sbr.rel (0) target = $region69
    $region68: #{tpu_custom_call.1} parent=1 // pred_region
      _
    $region69: #{tpu_custom_call.1} parent=1 // pred_fallthru
      _
    // Predicated region
    $region70: #{tpu_custom_call.1} parent=1 // pred_check
      _
    $region71: #{tpu_custom_call.1} parent=1 // pred_check_branch
      %181 = sbr.rel (0) target = $region73
    $region72: #{tpu_custom_call.1} parent=1 // pred_region
      _
    $region73: #{tpu_custom_call.1} parent=1 // pred_fallthru
      _
    // Predicated region
    $region74: #{tpu_custom_call.1} parent=1 // pred_check
      _
    $region75: #{tpu_custom_call.1} parent=1 // pred_check_branch
      %183 = sbr.rel (0) target = $region77
    $region76: #{tpu_custom_call.1} parent=1 // pred_region
      _
    $region77: #{tpu_custom_call.1} parent=1 // pred_fallthru
      _
    // Predicated region
    $region78: #{tpu_custom_call.1} parent=1 // pred_check
      _
    $region79: #{tpu_custom_call.1} parent=1 // pred_check_branch
      %185 = sbr.rel (0) target = $region81
    $region80: #{tpu_custom_call.1} parent=1 // pred_region
      _
    $region81: #{tpu_custom_call.1} parent=1 // pred_fallthru
      _
    // Predicated region
    $region82: #{tpu_custom_call.1} parent=1 // pred_check
      _
    $region83: #{tpu_custom_call.1} parent=1 // pred_check_branch
      %187 = sbr.rel (0) target = $region85
    $region84: #{tpu_custom_call.1} parent=1 // pred_region
      _
    $region85: #{tpu_custom_call.1} parent=1 // pred_fallthru
      _
    // Predicated region
    $region86: #{tpu_custom_call.1} parent=1 // pred_check
      _
    $region87: #{tpu_custom_call.1} parent=1 // pred_check_branch
      %189 = sbr.rel (0) target = $region89
    $region88: #{tpu_custom_call.1} parent=1 // pred_region
      _
    $region89: #{tpu_custom_call.1} parent=1 // pred_fallthru
      _
    // Predicated region
    $region90: #{tpu_custom_call.1} parent=1 // pred_check
      _
    $region91: #{tpu_custom_call.1} parent=1 // pred_check_branch
      %191 = sbr.rel (0) target = $region93
    $region92: #{tpu_custom_call.1} parent=1 // pred_region
      _
    $region93: #{tpu_custom_call.1} parent=1 // pred_fallthru
      _
    // Predicated region
    $region94: #{tpu_custom_call.1} parent=1 // pred_check
      _
    $region95: #{tpu_custom_call.1} parent=1 // pred_check_branch
      %193 = sbr.rel (0) target = $region97
    $region96: #{tpu_custom_call.1} parent=1 // pred_region
      _
    $region97: #{tpu_custom_call.1} parent=1 // pred_fallthru
      _
    // Predicated region
    $region98: #{tpu_custom_call.1} parent=1 // pred_check
      _
    $region99: #{tpu_custom_call.1} parent=1 // pred_check_branch
      %195 = sbr.rel (0) target = $region101
    $region100: #{tpu_custom_call.1} parent=1 // pred_region
      _
    $region101: #{tpu_custom_call.1} parent=1 // pred_fallthru
      _
    // Predicated region
    $region102: #{tpu_custom_call.1} parent=1 // pred_check
      _
    $region103: #{tpu_custom_call.1} parent=1 // pred_check_branch
      %197 = sbr.rel (0) target = $region105
    $region104: #{tpu_custom_call.1} parent=1 // pred_region
      _
    $region105: #{tpu_custom_call.1} parent=1 // pred_fallthru
      _
    // Predicated region
    $region106: #{tpu_custom_call.1} parent=1 // pred_check
      _
    $region107: #{tpu_custom_call.1} parent=1 // pred_check_branch
      %199 = sbr.rel (0) target = $region109
    $region108: #{tpu_custom_call.1} parent=1 // pred_region
      _
    $region109: #{tpu_custom_call.1} parent=1 // pred_fallthru
      _
    // Predicated region
    $region110: #{tpu_custom_call.1} parent=1 // pred_check
      _
    $region111: #{tpu_custom_call.1} parent=1 // pred_check_branch
      %201 = sbr.rel (0) target = $region113
    $region112: #{tpu_custom_call.1} parent=1 // pred_region
      _
    $region113: #{tpu_custom_call.1} parent=1 // pred_fallthru
      _
    // Predicated region
    $region114: #{tpu_custom_call.1} parent=1 // pred_check
      _
    $region115: #{tpu_custom_call.1} parent=1 // pred_check_branch
      %203 = sbr.rel (0) target = $region117
    $region116: #{tpu_custom_call.1} parent=1 // pred_region
      _
    $region117: #{tpu_custom_call.1} parent=1 // pred_fallthru
      _
    // Predicated region
    $region118: #{tpu_custom_call.1} parent=1 // pred_check
      _
    $region119: #{tpu_custom_call.1} parent=1 // pred_check_branch
      %205 = sbr.rel (0) target = $region121
    $region120: #{tpu_custom_call.1} parent=1 // pred_region
      %206 = dma.done [#allocation3], 1024
    $region121: #{tpu_custom_call.1} parent=1 // pred_fallthru
      _
    // Predicated region
    $region122: #{tpu_custom_call.1} parent=1 // pred_check
      _
    $region123: #{tpu_custom_call.1} parent=1 // pred_check_branch
      %208 = sbr.rel (0) target = $region125
    $region124: #{tpu_custom_call.1} parent=1 // pred_region
      %209 = dma.done [#allocation6], 32768
    $region125: #{tpu_custom_call.1} parent=1 // pred_fallthru
      _
    // Predicated region
    $region126: #{tpu_custom_call.1} parent=1 // pred_check
      _
    $region127: #{tpu_custom_call.1} parent=1 // pred_check_branch
      %211 = sbr.rel (0) target = $region129
    $region128: #{tpu_custom_call.1} parent=1 // pred_region
      %212 = dma.done [#allocation6], 8192
    $region129: #{tpu_custom_call.1} parent=1 // pred_fallthru
      _
    // Predicated region
    $region130: #{tpu_custom_call.1} parent=1 // pred_check
      _
    $region131: #{tpu_custom_call.1} parent=1 // pred_check_branch
      %214 = sbr.rel (0) target = $region133
    $region132: #{tpu_custom_call.1} parent=1 // pred_region
      %215 = dma.done [#allocation9], 64
    $region133: #{tpu_custom_call.1} parent=1 // pred_fallthru
      _
    // Predicated region
    $region134: #{tpu_custom_call.1} parent=1 // pred_check
      _
    $region135: #{tpu_custom_call.1} parent=1 // pred_check_branch
      %217 = sbr.rel (0) target = $region137
    $region136: #{tpu_custom_call.1} parent=1 // pred_region
      %218 = dma.done [#allocation9], 128
    $region137: #{tpu_custom_call.1} parent=1 // pred_fallthru
      _
    // Predicated region
    $region138: #{tpu_custom_call.1} parent=1 // pred_check
      _
    $region139: #{tpu_custom_call.1} parent=1 // pred_check_branch
      %220 = sbr.rel (0) target = $region141
    $region140: #{tpu_custom_call.1} parent=1 // pred_region
      %221 = dma.done [#allocation12], 2048
    $region141: #{tpu_custom_call.1} parent=1 // pred_fallthru
      _
    // Predicated region
    $region142: #{tpu_custom_call.1} parent=1 // pred_check
      _
    $region143: #{tpu_custom_call.1} parent=1 // pred_check_branch
      %223 = sbr.rel (0) target = $region145
    $region144: #{tpu_custom_call.1} parent=1 // pred_region
      %224 = dma.done [#allocation12], 8192
    $region145: #{tpu_custom_call.1} parent=1 // pred_fallthru
      _
    // Predicated region
    $region146: #{tpu_custom_call.1} parent=1 // pred_check
      _
    $region147: #{tpu_custom_call.1} parent=1 // pred_check_branch
      %226 = sbr.rel (0) target = $region149
    $region148: #{tpu_custom_call.1} parent=1 // pred_region
      %227 = dma.done [#allocation15], 32768
    $region149: #{tpu_custom_call.1} parent=1 // pred_fallthru
      _
    %v229 = vld [vmem:[#allocation2] sm:$0xff]
    %v230 = vld [vmem:[#allocation2 + $0x8] sm:$0xff]
    %v231 = vld [vmem:[#allocation2 + $0x10] sm:$0xff]
    %v232 = vld [vmem:[#allocation2 + $0x18] sm:$0xff]
    %v233 = vld [vmem:[#allocation2 + $0x20] sm:$0xff]
    %v234 = vld [vmem:[#allocation2 + $0x28] sm:$0xff]
    %v235 = vld [vmem:[#allocation2 + $0x30] sm:$0xff]
    %v236 = vld [vmem:[#allocation2 + $0x38] sm:$0xff]
    %v237 = vpack.c.bf16 %v229, %v229
    %v238 = vpack.c.bf16 %v230, %v230
    %v239 = vpack.c.bf16 %v231, %v231
    %v240 = vpack.c.bf16 %v232, %v232
    %v241 = vpack.c.bf16 %v233, %v233
    %v242 = vpack.c.bf16 %v234, %v234
    %v243 = vpack.c.bf16 %v235, %v235
    %v244 = vpack.c.bf16 %v236, %v236
    %v245 = vld [vmem:[#allocation5] sm:$0xff]
    %v246 = vld [vmem:[#allocation5 + $0x8] sm:$0xff]
    %v247 = vld [vmem:[#allocation5 + $0x10] sm:$0xff]
    %v248 = vld [vmem:[#allocation5 + $0x18] sm:$0xff]
    %v249 = vld [vmem:[#allocation5 + $0x20] sm:$0xff]
    %v250 = vld [vmem:[#allocation5 + $0x28] sm:$0xff]
    %v251 = vld [vmem:[#allocation5 + $0x30] sm:$0xff]
    %v252 = vld [vmem:[#allocation5 + $0x38] sm:$0xff]
    %v253 = vld [vmem:[#allocation5 + $0x40] sm:$0xff]
    %v254 = vld [vmem:[#allocation5 + $0x48] sm:$0xff]
    %v255 = vld [vmem:[#allocation5 + $0x50] sm:$0xff]
    %v256 = vld [vmem:[#allocation5 + $0x58] sm:$0xff]
    %v257 = vld [vmem:[#allocation5 + $0x60] sm:$0xff]
    %v258 = vld [vmem:[#allocation5 + $0x68] sm:$0xff]
    %v259 = vld [vmem:[#allocation5 + $0x70] sm:$0xff]
    %v260 = vld [vmem:[#allocation5 + $0x78] sm:$0xff]
    %v261 = vld [vmem:[#allocation5 + $0x80] sm:$0xff]
    %v262 = vld [vmem:[#allocation5 + $0x88] sm:$0xff]
    %v263 = vld [vmem:[#allocation5 + $0x90] sm:$0xff]
    %v264 = vld [vmem:[#allocation5 + $0x98] sm:$0xff]
    %v265 = vld [vmem:[#allocation5 + $0xa0] sm:$0xff]
    %v266 = vld [vmem:[#allocation5 + $0xa8] sm:$0xff]
    %v267 = vld [vmem:[#allocation5 + $0xb0] sm:$0xff]
    %v268 = vld [vmem:[#allocation5 + $0xb8] sm:$0xff]
    %v269 = vld [vmem:[#allocation5 + $0xc0] sm:$0xff]
    %v270 = vld [vmem:[#allocation5 + $0xc8] sm:$0xff]
    %v271 = vld [vmem:[#allocation5 + $0xd0] sm:$0xff]
    %v272 = vld [vmem:[#allocation5 + $0xd8] sm:$0xff]
    %v273 = vld [vmem:[#allocation5 + $0xe0] sm:$0xff]
    %v274 = vld [vmem:[#allocation5 + $0xe8] sm:$0xff]
    %v275 = vld [vmem:[#allocation5 + $0xf0] sm:$0xff]
    %v276 = vld [vmem:[#allocation5 + $0xf8] sm:$0xff]
    %v277 = vld [vmem:[#allocation5 + $0x100] sm:$0xff]
    %v278 = vld [vmem:[#allocation5 + $0x108] sm:$0xff]
    %v279 = vld [vmem:[#allocation5 + $0x110] sm:$0xff]
    %v280 = vld [vmem:[#allocation5 + $0x118] sm:$0xff]
    %v281 = vld [vmem:[#allocation5 + $0x120] sm:$0xff]
    %v282 = vld [vmem:[#allocation5 + $0x128] sm:$0xff]
    %v283 = vld [vmem:[#allocation5 + $0x130] sm:$0xff]
    %v284 = vld [vmem:[#allocation5 + $0x138] sm:$0xff]
    %v285 = vld [vmem:[#allocation5 + $0x140] sm:$0xff]
    %v286 = vld [vmem:[#allocation5 + $0x148] sm:$0xff]
    %v287 = vld [vmem:[#allocation5 + $0x150] sm:$0xff]
    %v288 = vld [vmem:[#allocation5 + $0x158] sm:$0xff]
    %v289 = vld [vmem:[#allocation5 + $0x160] sm:$0xff]
    %v290 = vld [vmem:[#allocation5 + $0x168] sm:$0xff]
    %v291 = vld [vmem:[#allocation5 + $0x170] sm:$0xff]
    %v292 = vld [vmem:[#allocation5 + $0x178] sm:$0xff]
    %v293 = vld [vmem:[#allocation5 + $0x180] sm:$0xff]
    %v294 = vld [vmem:[#allocation5 + $0x188] sm:$0xff]
    %v295 = vld [vmem:[#allocation5 + $0x190] sm:$0xff]
    %v296 = vld [vmem:[#allocation5 + $0x198] sm:$0xff]
    %v297 = vld [vmem:[#allocation5 + $0x1a0] sm:$0xff]
    %v298 = vld [vmem:[#allocation5 + $0x1a8] sm:$0xff]
    %v299 = vld [vmem:[#allocation5 + $0x1b0] sm:$0xff]
    %v300 = vld [vmem:[#allocation5 + $0x1b8] sm:$0xff]
    %v301 = vld [vmem:[#allocation5 + $0x1c0] sm:$0xff]
    %v302 = vld [vmem:[#allocation5 + $0x1c8] sm:$0xff]
    %v303 = vld [vmem:[#allocation5 + $0x1d0] sm:$0xff]
    %v304 = vld [vmem:[#allocation5 + $0x1d8] sm:$0xff]
    %v305 = vld [vmem:[#allocation5 + $0x1e0] sm:$0xff]
    %v306 = vld [vmem:[#allocation5 + $0x1e8] sm:$0xff]
    %v307 = vld [vmem:[#allocation5 + $0x1f0] sm:$0xff]
    %v308 = vld [vmem:[#allocation5 + $0x1f8] sm:$0xff]
    %v309 = vld [vmem:[#allocation5 + $0x200] sm:$0xff]
    %v310 = vld [vmem:[#allocation5 + $0x208] sm:$0xff]
    %v311 = vld [vmem:[#allocation5 + $0x210] sm:$0xff]
    %v312 = vld [vmem:[#allocation5 + $0x218] sm:$0xff]
    %v313 = vld [vmem:[#allocation5 + $0x220] sm:$0xff]
    %v314 = vld [vmem:[#allocation5 + $0x228] sm:$0xff]
    %v315 = vld [vmem:[#allocation5 + $0x230] sm:$0xff]
    %v316 = vld [vmem:[#allocation5 + $0x238] sm:$0xff]
    %v317 = vld [vmem:[#allocation5 + $0x240] sm:$0xff]
    %v318 = vld [vmem:[#allocation5 + $0x248] sm:$0xff]
    %v319 = vld [vmem:[#allocation5 + $0x250] sm:$0xff]
    %v320 = vld [vmem:[#allocation5 + $0x258] sm:$0xff]
    %v321 = vld [vmem:[#allocation5 + $0x260] sm:$0xff]
    %v322 = vld [vmem:[#allocation5 + $0x268] sm:$0xff]
    %v323 = vld [vmem:[#allocation5 + $0x270] sm:$0xff]
    %v324 = vld [vmem:[#allocation5 + $0x278] sm:$0xff]
    %v325 = vld [vmem:[#allocation5 + $0x280] sm:$0xff]
    %v326 = vld [vmem:[#allocation5 + $0x288] sm:$0xff]
    %v327 = vld [vmem:[#allocation5 + $0x290] sm:$0xff]
    %v328 = vld [vmem:[#allocation5 + $0x298] sm:$0xff]
    %v329 = vld [vmem:[#allocation5 + $0x2a0] sm:$0xff]
    %v330 = vld [vmem:[#allocation5 + $0x2a8] sm:$0xff]
    %v331 = vld [vmem:[#allocation5 + $0x2b0] sm:$0xff]
    %v332 = vld [vmem:[#allocation5 + $0x2b8] sm:$0xff]
    %v333 = vld [vmem:[#allocation5 + $0x2c0] sm:$0xff]
    %v334 = vld [vmem:[#allocation5 + $0x2c8] sm:$0xff]
    %v335 = vld [vmem:[#allocation5 + $0x2d0] sm:$0xff]
    %v336 = vld [vmem:[#allocation5 + $0x2d8] sm:$0xff]
    %v337 = vld [vmem:[#allocation5 + $0x2e0] sm:$0xff]
    %v338 = vld [vmem:[#allocation5 + $0x2e8] sm:$0xff]
    %v339 = vld [vmem:[#allocation5 + $0x2f0] sm:$0xff]
    %v340 = vld [vmem:[#allocation5 + $0x2f8] sm:$0xff]
    %v341 = vld [vmem:[#allocation5 + $0x300] sm:$0xff]
    %v342 = vld [vmem:[#allocation5 + $0x308] sm:$0xff]
    %v343 = vld [vmem:[#allocation5 + $0x310] sm:$0xff]
    %v344 = vld [vmem:[#allocation5 + $0x318] sm:$0xff]
    %v345 = vld [vmem:[#allocation5 + $0x320] sm:$0xff]
    %v346 = vld [vmem:[#allocation5 + $0x328] sm:$0xff]
    %v347 = vld [vmem:[#allocation5 + $0x330] sm:$0xff]
    %v348 = vld [vmem:[#allocation5 + $0x338] sm:$0xff]
    %v349 = vld [vmem:[#allocation5 + $0x340] sm:$0xff]
    %v350 = vld [vmem:[#allocation5 + $0x348] sm:$0xff]
    %v351 = vld [vmem:[#allocation5 + $0x350] sm:$0xff]
    %v352 = vld [vmem:[#allocation5 + $0x358] sm:$0xff]
    %v353 = vld [vmem:[#allocation5 + $0x360] sm:$0xff]
    %v354 = vld [vmem:[#allocation5 + $0x368] sm:$0xff]
    %v355 = vld [vmem:[#allocation5 + $0x370] sm:$0xff]
    %v356 = vld [vmem:[#allocation5 + $0x378] sm:$0xff]
    %v357 = vld [vmem:[#allocation5 + $0x380] sm:$0xff]
    %v358 = vld [vmem:[#allocation5 + $0x388] sm:$0xff]
    %v359 = vld [vmem:[#allocation5 + $0x390] sm:$0xff]
    %v360 = vld [vmem:[#allocation5 + $0x398] sm:$0xff]
    %v361 = vld [vmem:[#allocation5 + $0x3a0] sm:$0xff]
    %v362 = vld [vmem:[#allocation5 + $0x3a8] sm:$0xff]
    %v363 = vld [vmem:[#allocation5 + $0x3b0] sm:$0xff]
    %v364 = vld [vmem:[#allocation5 + $0x3b8] sm:$0xff]
    %v365 = vld [vmem:[#allocation5 + $0x3c0] sm:$0xff]
    %v366 = vld [vmem:[#allocation5 + $0x3c8] sm:$0xff]
    %v367 = vld [vmem:[#allocation5 + $0x3d0] sm:$0xff]
    %v368 = vld [vmem:[#allocation5 + $0x3d8] sm:$0xff]
    %v369 = vld [vmem:[#allocation5 + $0x3e0] sm:$0xff]
    %v370 = vld [vmem:[#allocation5 + $0x3e8] sm:$0xff]
    %v371 = vld [vmem:[#allocation5 + $0x3f0] sm:$0xff]
    %v372 = vld [vmem:[#allocation5 + $0x3f8] sm:$0xff]
    %v373 = vld [vmem:[#allocation5 + $0x400] sm:$0xff]
    %v374 = vld [vmem:[#allocation5 + $0x408] sm:$0xff]
    %v375 = vld [vmem:[#allocation5 + $0x410] sm:$0xff]
    %v376 = vld [vmem:[#allocation5 + $0x418] sm:$0xff]
    %v377 = vld [vmem:[#allocation5 + $0x420] sm:$0xff]
    %v378 = vld [vmem:[#allocation5 + $0x428] sm:$0xff]
    %v379 = vld [vmem:[#allocation5 + $0x430] sm:$0xff]
    %v380 = vld [vmem:[#allocation5 + $0x438] sm:$0xff]
    %v381 = vld [vmem:[#allocation5 + $0x440] sm:$0xff]
    %v382 = vld [vmem:[#allocation5 + $0x448] sm:$0xff]
    %v383 = vld [vmem:[#allocation5 + $0x450] sm:$0xff]
    %v384 = vld [vmem:[#allocation5 + $0x458] sm:$0xff]
    %v385 = vld [vmem:[#allocation5 + $0x460] sm:$0xff]
    %v386 = vld [vmem:[#allocation5 + $0x468] sm:$0xff]
    %v387 = vld [vmem:[#allocation5 + $0x470] sm:$0xff]
    %v388 = vld [vmem:[#allocation5 + $0x478] sm:$0xff]
    %v389 = vld [vmem:[#allocation5 + $0x480] sm:$0xff]
    %v390 = vld [vmem:[#allocation5 + $0x488] sm:$0xff]
    %v391 = vld [vmem:[#allocation5 + $0x490] sm:$0xff]
    %v392 = vld [vmem:[#allocation5 + $0x498] sm:$0xff]
    %v393 = vld [vmem:[#allocation5 + $0x4a0] sm:$0xff]
    %v394 = vld [vmem:[#allocation5 + $0x4a8] sm:$0xff]
    %v395 = vld [vmem:[#allocation5 + $0x4b0] sm:$0xff]
    %v396 = vld [vmem:[#allocation5 + $0x4b8] sm:$0xff]
    %v397 = vld [vmem:[#allocation5 + $0x4c0] sm:$0xff]
    %v398 = vld [vmem:[#allocation5 + $0x4c8] sm:$0xff]
    %v399 = vld [vmem:[#allocation5 + $0x4d0] sm:$0xff]
    %v400 = vld [vmem:[#allocation5 + $0x4d8] sm:$0xff]
    %v401 = vld [vmem:[#allocation5 + $0x4e0] sm:$0xff]
    %v402 = vld [vmem:[#allocation5 + $0x4e8] sm:$0xff]
    %v403 = vld [vmem:[#allocation5 + $0x4f0] sm:$0xff]
    %v404 = vld [vmem:[#allocation5 + $0x4f8] sm:$0xff]
    %v405 = vld [vmem:[#allocation5 + $0x500] sm:$0xff]
    %v406 = vld [vmem:[#allocation5 + $0x508] sm:$0xff]
    %v407 = vld [vmem:[#allocation5 + $0x510] sm:$0xff]
    %v408 = vld [vmem:[#allocation5 + $0x518] sm:$0xff]
    %v409 = vld [vmem:[#allocation5 + $0x520] sm:$0xff]
    %v410 = vld [vmem:[#allocation5 + $0x528] sm:$0xff]
    %v411 = vld [vmem:[#allocation5 + $0x530] sm:$0xff]
    %v412 = vld [vmem:[#allocation5 + $0x538] sm:$0xff]
    %v413 = vld [vmem:[#allocation5 + $0x540] sm:$0xff]
    %v414 = vld [vmem:[#allocation5 + $0x548] sm:$0xff]
    %v415 = vld [vmem:[#allocation5 + $0x550] sm:$0xff]
    %v416 = vld [vmem:[#allocation5 + $0x558] sm:$0xff]
    %v417 = vld [vmem:[#allocation5 + $0x560] sm:$0xff]
    %v418 = vld [vmem:[#allocation5 + $0x568] sm:$0xff]
    %v419 = vld [vmem:[#allocation5 + $0x570] sm:$0xff]
    %v420 = vld [vmem:[#allocation5 + $0x578] sm:$0xff]
    %v421 = vld [vmem:[#allocation5 + $0x580] sm:$0xff]
    %v422 = vld [vmem:[#allocation5 + $0x588] sm:$0xff]
    %v423 = vld [vmem:[#allocation5 + $0x590] sm:$0xff]
    %v424 = vld [vmem:[#allocation5 + $0x598] sm:$0xff]
    %v425 = vld [vmem:[#allocation5 + $0x5a0] sm:$0xff]
    %v426 = vld [vmem:[#allocation5 + $0x5a8] sm:$0xff]
    %v427 = vld [vmem:[#allocation5 + $0x5b0] sm:$0xff]
    %v428 = vld [vmem:[#allocation5 + $0x5b8] sm:$0xff]
    %v429 = vld [vmem:[#allocation5 + $0x5c0] sm:$0xff]
    %v430 = vld [vmem:[#allocation5 + $0x5c8] sm:$0xff]
    %v431 = vld [vmem:[#allocation5 + $0x5d0] sm:$0xff]
    %v432 = vld [vmem:[#allocation5 + $0x5d8] sm:$0xff]
    %v433 = vld [vmem:[#allocation5 + $0x5e0] sm:$0xff]
    %v434 = vld [vmem:[#allocation5 + $0x5e8] sm:$0xff]
    %v435 = vld [vmem:[#allocation5 + $0x5f0] sm:$0xff]
    %v436 = vld [vmem:[#allocation5 + $0x5f8] sm:$0xff]
    %v437 = vld [vmem:[#allocation5 + $0x600] sm:$0xff]
    %v438 = vld [vmem:[#allocation5 + $0x608] sm:$0xff]
    %v439 = vld [vmem:[#allocation5 + $0x610] sm:$0xff]
    %v440 = vld [vmem:[#allocation5 + $0x618] sm:$0xff]
    %v441 = vld [vmem:[#allocation5 + $0x620] sm:$0xff]
    %v442 = vld [vmem:[#allocation5 + $0x628] sm:$0xff]
    %v443 = vld [vmem:[#allocation5 + $0x630] sm:$0xff]
    %v444 = vld [vmem:[#allocation5 + $0x638] sm:$0xff]
    %v445 = vld [vmem:[#allocation5 + $0x640] sm:$0xff]
    %v446 = vld [vmem:[#allocation5 + $0x648] sm:$0xff]
    %v447 = vld [vmem:[#allocation5 + $0x650] sm:$0xff]
    %v448 = vld [vmem:[#allocation5 + $0x658] sm:$0xff]
    %v449 = vld [vmem:[#allocation5 + $0x660] sm:$0xff]
    %v450 = vld [vmem:[#allocation5 + $0x668] sm:$0xff]
    %v451 = vld [vmem:[#allocation5 + $0x670] sm:$0xff]
    %v452 = vld [vmem:[#allocation5 + $0x678] sm:$0xff]
    %v453 = vld [vmem:[#allocation5 + $0x680] sm:$0xff]
    %v454 = vld [vmem:[#allocation5 + $0x688] sm:$0xff]
    %v455 = vld [vmem:[#allocation5 + $0x690] sm:$0xff]
    %v456 = vld [vmem:[#allocation5 + $0x698] sm:$0xff]
    %v457 = vld [vmem:[#allocation5 + $0x6a0] sm:$0xff]
    %v458 = vld [vmem:[#allocation5 + $0x6a8] sm:$0xff]
    %v459 = vld [vmem:[#allocation5 + $0x6b0] sm:$0xff]
    %v460 = vld [vmem:[#allocation5 + $0x6b8] sm:$0xff]
    %v461 = vld [vmem:[#allocation5 + $0x6c0] sm:$0xff]
    %v462 = vld [vmem:[#allocation5 + $0x6c8] sm:$0xff]
    %v463 = vld [vmem:[#allocation5 + $0x6d0] sm:$0xff]
    %v464 = vld [vmem:[#allocation5 + $0x6d8] sm:$0xff]
    %v465 = vld [vmem:[#allocation5 + $0x6e0] sm:$0xff]
    %v466 = vld [vmem:[#allocation5 + $0x6e8] sm:$0xff]
    %v467 = vld [vmem:[#allocation5 + $0x6f0] sm:$0xff]
    %v468 = vld [vmem:[#allocation5 + $0x6f8] sm:$0xff]
    %v469 = vld [vmem:[#allocation5 + $0x700] sm:$0xff]
    %v470 = vld [vmem:[#allocation5 + $0x708] sm:$0xff]
    %v471 = vld [vmem:[#allocation5 + $0x710] sm:$0xff]
    %v472 = vld [vmem:[#allocation5 + $0x718] sm:$0xff]
    %v473 = vld [vmem:[#allocation5 + $0x720] sm:$0xff]
    %v474 = vld [vmem:[#allocation5 + $0x728] sm:$0xff]
    %v475 = vld [vmem:[#allocation5 + $0x730] sm:$0xff]
    %v476 = vld [vmem:[#allocation5 + $0x738] sm:$0xff]
    %v477 = vld [vmem:[#allocation5 + $0x740] sm:$0xff]
    %v478 = vld [vmem:[#allocation5 + $0x748] sm:$0xff]
    %v479 = vld [vmem:[#allocation5 + $0x750] sm:$0xff]
    %v480 = vld [vmem:[#allocation5 + $0x758] sm:$0xff]
    %v481 = vld [vmem:[#allocation5 + $0x760] sm:$0xff]
    %v482 = vld [vmem:[#allocation5 + $0x768] sm:$0xff]
    %v483 = vld [vmem:[#allocation5 + $0x770] sm:$0xff]
    %v484 = vld [vmem:[#allocation5 + $0x778] sm:$0xff]
    %v485 = vld [vmem:[#allocation5 + $0x780] sm:$0xff]
    %v486 = vld [vmem:[#allocation5 + $0x788] sm:$0xff]
    %v487 = vld [vmem:[#allocation5 + $0x790] sm:$0xff]
    %v488 = vld [vmem:[#allocation5 + $0x798] sm:$0xff]
    %v489 = vld [vmem:[#allocation5 + $0x7a0] sm:$0xff]
    %v490 = vld [vmem:[#allocation5 + $0x7a8] sm:$0xff]
    %v491 = vld [vmem:[#allocation5 + $0x7b0] sm:$0xff]
    %v492 = vld [vmem:[#allocation5 + $0x7b8] sm:$0xff]
    %v493 = vld [vmem:[#allocation5 + $0x7c0] sm:$0xff]
    %v494 = vld [vmem:[#allocation5 + $0x7c8] sm:$0xff]
    %v495 = vld [vmem:[#allocation5 + $0x7d0] sm:$0xff]
    %v496 = vld [vmem:[#allocation5 + $0x7d8] sm:$0xff]
    %v497 = vld [vmem:[#allocation5 + $0x7e0] sm:$0xff]
    %v498 = vld [vmem:[#allocation5 + $0x7e8] sm:$0xff]
    %v499 = vld [vmem:[#allocation5 + $0x7f0] sm:$0xff]
    %v500 = vld [vmem:[#allocation5 + $0x7f8] sm:$0xff]
    %v501 = vld [vmem:[%s31] sm:$0xf]
    %v503 = vlaneseq
    %v504 = vshrl.u32 %v503, 7
    %v505 = vsub.s32 0, %v504
    %v506 = vrot.slane %v501, %v505
    %v507 = vlaneseq
    %v508 = vshrl.u32 %v507, 7
    %v509 = vsub.s32 1, %v508
    %v510 = vrot.slane %v501, %v509
    %v511 = vlaneseq
    %v512 = vshrl.u32 %v511, 7
    %v513 = vsub.s32 2, %v512
    %v514 = vrot.slane %v501, %v513
    %v515 = vlaneseq
    %v516 = vshrl.u32 %v515, 7
    %v517 = vsub.s32 3, %v516
    %v518 = vrot.slane %v501, %v517
    %v779 = vunpack.c.l.b16 %v245
    %v780 = vunpack.c.h.b16 %v245
    %v781 = vunpack.c.l.b16 %v246
    %v782 = vunpack.c.h.b16 %v246
    %v783 = vunpack.c.l.b16 %v247
    %v784 = vunpack.c.h.b16 %v247
    %v785 = vunpack.c.l.b16 %v248
    %v786 = vunpack.c.h.b16 %v248
    %v787 = vunpack.c.l.b16 %v249
    %v788 = vunpack.c.h.b16 %v249
    %v789 = vunpack.c.l.b16 %v250
    %v790 = vunpack.c.h.b16 %v250
    %v791 = vunpack.c.l.b16 %v251
    %v792 = vunpack.c.h.b16 %v251
    %v793 = vunpack.c.l.b16 %v252
    %v794 = vunpack.c.h.b16 %v252
    %v795 = vunpack.c.l.b16 %v253
    %v796 = vunpack.c.h.b16 %v253
    %v797 = vunpack.c.l.b16 %v254
    %v798 = vunpack.c.h.b16 %v254
    %v799 = vunpack.c.l.b16 %v255
    %v800 = vunpack.c.h.b16 %v255
    %v801 = vunpack.c.l.b16 %v256
    %v802 = vunpack.c.h.b16 %v256
    %v803 = vunpack.c.l.b16 %v257
    %v804 = vunpack.c.h.b16 %v257
    %v805 = vunpack.c.l.b16 %v258
    %v806 = vunpack.c.h.b16 %v258
    %v807 = vunpack.c.l.b16 %v259
    %v808 = vunpack.c.h.b16 %v259
    %v809 = vunpack.c.l.b16 %v260
    %v810 = vunpack.c.h.b16 %v260
    %v811 = vunpack.c.l.b16 %v261
    %v812 = vunpack.c.h.b16 %v261
    %v813 = vunpack.c.l.b16 %v262
    %v814 = vunpack.c.h.b16 %v262
    %v815 = vunpack.c.l.b16 %v263
    %v816 = vunpack.c.h.b16 %v263
    %v817 = vunpack.c.l.b16 %v264
    %v818 = vunpack.c.h.b16 %v264
    %v819 = vunpack.c.l.b16 %v265
    %v820 = vunpack.c.h.b16 %v265
    %v821 = vunpack.c.l.b16 %v266
    %v822 = vunpack.c.h.b16 %v266
    %v823 = vunpack.c.l.b16 %v267
    %v824 = vunpack.c.h.b16 %v267
    %v825 = vunpack.c.l.b16 %v268
    %v826 = vunpack.c.h.b16 %v268
    %v827 = vunpack.c.l.b16 %v269
    %v828 = vunpack.c.h.b16 %v269
    %v829 = vunpack.c.l.b16 %v270
    %v830 = vunpack.c.h.b16 %v270
    %v831 = vunpack.c.l.b16 %v271
    %v832 = vunpack.c.h.b16 %v271
    %v833 = vunpack.c.l.b16 %v272
    %v834 = vunpack.c.h.b16 %v272
    %v835 = vunpack.c.l.b16 %v273
    %v836 = vunpack.c.h.b16 %v273
    %v837 = vunpack.c.l.b16 %v274
    %v838 = vunpack.c.h.b16 %v274
    %v839 = vunpack.c.l.b16 %v275
    %v840 = vunpack.c.h.b16 %v275
    %v841 = vunpack.c.l.b16 %v276
    %v842 = vunpack.c.h.b16 %v276
    %v843 = vunpack.c.l.b16 %v277
    %v844 = vunpack.c.h.b16 %v277
    %v845 = vunpack.c.l.b16 %v278
    %v846 = vunpack.c.h.b16 %v278
    %v847 = vunpack.c.l.b16 %v279
    %v848 = vunpack.c.h.b16 %v279
    %v849 = vunpack.c.l.b16 %v280
    %v850 = vunpack.c.h.b16 %v280
    %v851 = vunpack.c.l.b16 %v281
    %v852 = vunpack.c.h.b16 %v281
    %v853 = vunpack.c.l.b16 %v282
    %v854 = vunpack.c.h.b16 %v282
    %v855 = vunpack.c.l.b16 %v283
    %v856 = vunpack.c.h.b16 %v283
    %v857 = vunpack.c.l.b16 %v284
    %v858 = vunpack.c.h.b16 %v284
    %v859 = vunpack.c.l.b16 %v285
    %v860 = vunpack.c.h.b16 %v285
    %v861 = vunpack.c.l.b16 %v286
    %v862 = vunpack.c.h.b16 %v286
    %v863 = vunpack.c.l.b16 %v287
    %v864 = vunpack.c.h.b16 %v287
    %v865 = vunpack.c.l.b16 %v288
    %v866 = vunpack.c.h.b16 %v288
    %v867 = vunpack.c.l.b16 %v289
    %v868 = vunpack.c.h.b16 %v289
    %v869 = vunpack.c.l.b16 %v290
    %v870 = vunpack.c.h.b16 %v290
    %v871 = vunpack.c.l.b16 %v291
    %v872 = vunpack.c.h.b16 %v291
    %v873 = vunpack.c.l.b16 %v292
    %v874 = vunpack.c.h.b16 %v292
    %v875 = vunpack.c.l.b16 %v293
    %v876 = vunpack.c.h.b16 %v293
    %v877 = vunpack.c.l.b16 %v294
    %v878 = vunpack.c.h.b16 %v294
    %v879 = vunpack.c.l.b16 %v295
    %v880 = vunpack.c.h.b16 %v295
    %v881 = vunpack.c.l.b16 %v296
    %v882 = vunpack.c.h.b16 %v296
    %v883 = vunpack.c.l.b16 %v297
    %v884 = vunpack.c.h.b16 %v297
    %v885 = vunpack.c.l.b16 %v298
    %v886 = vunpack.c.h.b16 %v298
    %v887 = vunpack.c.l.b16 %v299
    %v888 = vunpack.c.h.b16 %v299
    %v889 = vunpack.c.l.b16 %v300
    %v890 = vunpack.c.h.b16 %v300
    %v891 = vunpack.c.l.b16 %v301
    %v892 = vunpack.c.h.b16 %v301
    %v893 = vunpack.c.l.b16 %v302
    %v894 = vunpack.c.h.b16 %v302
    %v895 = vunpack.c.l.b16 %v303
    %v896 = vunpack.c.h.b16 %v303
    %v897 = vunpack.c.l.b16 %v304
    %v898 = vunpack.c.h.b16 %v304
    %v899 = vunpack.c.l.b16 %v305
    %v900 = vunpack.c.h.b16 %v305
    %v901 = vunpack.c.l.b16 %v306
    %v902 = vunpack.c.h.b16 %v306
    %v903 = vunpack.c.l.b16 %v307
    %v904 = vunpack.c.h.b16 %v307
    %v905 = vunpack.c.l.b16 %v308
    %v906 = vunpack.c.h.b16 %v308
    %v907 = vunpack.c.l.b16 %v309
    %v908 = vunpack.c.h.b16 %v309
    %v909 = vunpack.c.l.b16 %v310
    %v910 = vunpack.c.h.b16 %v310
    %v911 = vunpack.c.l.b16 %v311
    %v912 = vunpack.c.h.b16 %v311
    %v913 = vunpack.c.l.b16 %v312
    %v914 = vunpack.c.h.b16 %v312
    %v915 = vunpack.c.l.b16 %v313
    %v916 = vunpack.c.h.b16 %v313
    %v917 = vunpack.c.l.b16 %v314
    %v918 = vunpack.c.h.b16 %v314
    %v919 = vunpack.c.l.b16 %v315
    %v920 = vunpack.c.h.b16 %v315
    %v921 = vunpack.c.l.b16 %v316
    %v922 = vunpack.c.h.b16 %v316
    %v923 = vunpack.c.l.b16 %v317
    %v924 = vunpack.c.h.b16 %v317
    %v925 = vunpack.c.l.b16 %v318
    %v926 = vunpack.c.h.b16 %v318
    %v927 = vunpack.c.l.b16 %v319
    %v928 = vunpack.c.h.b16 %v319
    %v929 = vunpack.c.l.b16 %v320
    %v930 = vunpack.c.h.b16 %v320
    %v931 = vunpack.c.l.b16 %v321
    %v932 = vunpack.c.h.b16 %v321
    %v933 = vunpack.c.l.b16 %v322
    %v934 = vunpack.c.h.b16 %v322
    %v935 = vunpack.c.l.b16 %v323
    %v936 = vunpack.c.h.b16 %v323
    %v937 = vunpack.c.l.b16 %v324
    %v938 = vunpack.c.h.b16 %v324
    %v939 = vunpack.c.l.b16 %v325
    %v940 = vunpack.c.h.b16 %v325
    %v941 = vunpack.c.l.b16 %v326
    %v942 = vunpack.c.h.b16 %v326
    %v943 = vunpack.c.l.b16 %v327
    %v944 = vunpack.c.h.b16 %v327
    %v945 = vunpack.c.l.b16 %v328
    %v946 = vunpack.c.h.b16 %v328
    %v947 = vunpack.c.l.b16 %v329
    %v948 = vunpack.c.h.b16 %v329
    %v949 = vunpack.c.l.b16 %v330
    %v950 = vunpack.c.h.b16 %v330
    %v951 = vunpack.c.l.b16 %v331
    %v952 = vunpack.c.h.b16 %v331
    %v953 = vunpack.c.l.b16 %v332
    %v954 = vunpack.c.h.b16 %v332
    %v955 = vunpack.c.l.b16 %v333
    %v956 = vunpack.c.h.b16 %v333
    %v957 = vunpack.c.l.b16 %v334
    %v958 = vunpack.c.h.b16 %v334
    %v959 = vunpack.c.l.b16 %v335
    %v960 = vunpack.c.h.b16 %v335
    %v961 = vunpack.c.l.b16 %v336
    %v962 = vunpack.c.h.b16 %v336
    %v963 = vunpack.c.l.b16 %v337
    %v964 = vunpack.c.h.b16 %v337
    %v965 = vunpack.c.l.b16 %v338
    %v966 = vunpack.c.h.b16 %v338
    %v967 = vunpack.c.l.b16 %v339
    %v968 = vunpack.c.h.b16 %v339
    %v969 = vunpack.c.l.b16 %v340
    %v970 = vunpack.c.h.b16 %v340
    %v971 = vunpack.c.l.b16 %v341
    %v972 = vunpack.c.h.b16 %v341
    %v973 = vunpack.c.l.b16 %v342
    %v974 = vunpack.c.h.b16 %v342
    %v975 = vunpack.c.l.b16 %v343
    %v976 = vunpack.c.h.b16 %v343
    %v977 = vunpack.c.l.b16 %v344
    %v978 = vunpack.c.h.b16 %v344
    %v979 = vunpack.c.l.b16 %v345
    %v980 = vunpack.c.h.b16 %v345
    %v981 = vunpack.c.l.b16 %v346
    %v982 = vunpack.c.h.b16 %v346
    %v983 = vunpack.c.l.b16 %v347
    %v984 = vunpack.c.h.b16 %v347
    %v985 = vunpack.c.l.b16 %v348
    %v986 = vunpack.c.h.b16 %v348
    %v987 = vunpack.c.l.b16 %v349
    %v988 = vunpack.c.h.b16 %v349
    %v989 = vunpack.c.l.b16 %v350
    %v990 = vunpack.c.h.b16 %v350
    %v991 = vunpack.c.l.b16 %v351
    %v992 = vunpack.c.h.b16 %v351
    %v993 = vunpack.c.l.b16 %v352
    %v994 = vunpack.c.h.b16 %v352
    %v995 = vunpack.c.l.b16 %v353
    %v996 = vunpack.c.h.b16 %v353
    %v997 = vunpack.c.l.b16 %v354
    %v998 = vunpack.c.h.b16 %v354
    %v999 = vunpack.c.l.b16 %v355
    %v1000 = vunpack.c.h.b16 %v355
    %v1001 = vunpack.c.l.b16 %v356
    %v1002 = vunpack.c.h.b16 %v356
    %v1003 = vunpack.c.l.b16 %v357
    %v1004 = vunpack.c.h.b16 %v357
    %v1005 = vunpack.c.l.b16 %v358
    %v1006 = vunpack.c.h.b16 %v358
    %v1007 = vunpack.c.l.b16 %v359
    %v1008 = vunpack.c.h.b16 %v359
    %v1009 = vunpack.c.l.b16 %v360
    %v1010 = vunpack.c.h.b16 %v360
    %v1011 = vunpack.c.l.b16 %v361
    %v1012 = vunpack.c.h.b16 %v361
    %v1013 = vunpack.c.l.b16 %v362
    %v1014 = vunpack.c.h.b16 %v362
    %v1015 = vunpack.c.l.b16 %v363
    %v1016 = vunpack.c.h.b16 %v363
    %v1017 = vunpack.c.l.b16 %v364
    %v1018 = vunpack.c.h.b16 %v364
    %v1019 = vunpack.c.l.b16 %v365
    %v1020 = vunpack.c.h.b16 %v365
    %v1021 = vunpack.c.l.b16 %v366
    %v1022 = vunpack.c.h.b16 %v366
    %v1023 = vunpack.c.l.b16 %v367
    %v1024 = vunpack.c.h.b16 %v367
    %v1025 = vunpack.c.l.b16 %v368
    %v1026 = vunpack.c.h.b16 %v368
    %v1027 = vunpack.c.l.b16 %v369
    %v1028 = vunpack.c.h.b16 %v369
    %v1029 = vunpack.c.l.b16 %v370
    %v1030 = vunpack.c.h.b16 %v370
    %v1031 = vunpack.c.l.b16 %v371
    %v1032 = vunpack.c.h.b16 %v371
    %v1033 = vunpack.c.l.b16 %v372
    %v1034 = vunpack.c.h.b16 %v372
    %v1035 = vunpack.c.l.b16 %v373
    %v1036 = vunpack.c.h.b16 %v373
    %v1037 = vunpack.c.l.b16 %v374
    %v1038 = vunpack.c.h.b16 %v374
    %v1039 = vunpack.c.l.b16 %v375
    %v1040 = vunpack.c.h.b16 %v375
    %v1041 = vunpack.c.l.b16 %v376
    %v1042 = vunpack.c.h.b16 %v376
    %v1043 = vunpack.c.l.b16 %v377
    %v1044 = vunpack.c.h.b16 %v377
    %v1045 = vunpack.c.l.b16 %v378
    %v1046 = vunpack.c.h.b16 %v378
    %v1047 = vunpack.c.l.b16 %v379
    %v1048 = vunpack.c.h.b16 %v379
    %v1049 = vunpack.c.l.b16 %v380
    %v1050 = vunpack.c.h.b16 %v380
    %v1051 = vunpack.c.l.b16 %v381
    %v1052 = vunpack.c.h.b16 %v381
    %v1053 = vunpack.c.l.b16 %v382
    %v1054 = vunpack.c.h.b16 %v382
    %v1055 = vunpack.c.l.b16 %v383
    %v1056 = vunpack.c.h.b16 %v383
    %v1057 = vunpack.c.l.b16 %v384
    %v1058 = vunpack.c.h.b16 %v384
    %v1059 = vunpack.c.l.b16 %v385
    %v1060 = vunpack.c.h.b16 %v385
    %v1061 = vunpack.c.l.b16 %v386
    %v1062 = vunpack.c.h.b16 %v386
    %v1063 = vunpack.c.l.b16 %v387
    %v1064 = vunpack.c.h.b16 %v387
    %v1065 = vunpack.c.l.b16 %v388
    %v1066 = vunpack.c.h.b16 %v388
    %v1067 = vunpack.c.l.b16 %v389
    %v1068 = vunpack.c.h.b16 %v389
    %v1069 = vunpack.c.l.b16 %v390
    %v1070 = vunpack.c.h.b16 %v390
    %v1071 = vunpack.c.l.b16 %v391
    %v1072 = vunpack.c.h.b16 %v391
    %v1073 = vunpack.c.l.b16 %v392
    %v1074 = vunpack.c.h.b16 %v392
    %v1075 = vunpack.c.l.b16 %v393
    %v1076 = vunpack.c.h.b16 %v393
    %v1077 = vunpack.c.l.b16 %v394
    %v1078 = vunpack.c.h.b16 %v394
    %v1079 = vunpack.c.l.b16 %v395
    %v1080 = vunpack.c.h.b16 %v395
    %v1081 = vunpack.c.l.b16 %v396
    %v1082 = vunpack.c.h.b16 %v396
    %v1083 = vunpack.c.l.b16 %v397
    %v1084 = vunpack.c.h.b16 %v397
    %v1085 = vunpack.c.l.b16 %v398
    %v1086 = vunpack.c.h.b16 %v398
    %v1087 = vunpack.c.l.b16 %v399
    %v1088 = vunpack.c.h.b16 %v399
    %v1089 = vunpack.c.l.b16 %v400
    %v1090 = vunpack.c.h.b16 %v400
    %v1091 = vunpack.c.l.b16 %v401
    %v1092 = vunpack.c.h.b16 %v401
    %v1093 = vunpack.c.l.b16 %v402
    %v1094 = vunpack.c.h.b16 %v402
    %v1095 = vunpack.c.l.b16 %v403
    %v1096 = vunpack.c.h.b16 %v403
    %v1097 = vunpack.c.l.b16 %v404
    %v1098 = vunpack.c.h.b16 %v404
    %v1099 = vunpack.c.l.b16 %v405
    %v1100 = vunpack.c.h.b16 %v405
    %v1101 = vunpack.c.l.b16 %v406
    %v1102 = vunpack.c.h.b16 %v406
    %v1103 = vunpack.c.l.b16 %v407
    %v1104 = vunpack.c.h.b16 %v407
    %v1105 = vunpack.c.l.b16 %v408
    %v1106 = vunpack.c.h.b16 %v408
    %v1107 = vunpack.c.l.b16 %v409
    %v1108 = vunpack.c.h.b16 %v409
    %v1109 = vunpack.c.l.b16 %v410
    %v1110 = vunpack.c.h.b16 %v410
    %v1111 = vunpack.c.l.b16 %v411
    %v1112 = vunpack.c.h.b16 %v411
    %v1113 = vunpack.c.l.b16 %v412
    %v1114 = vunpack.c.h.b16 %v412
    %v1115 = vunpack.c.l.b16 %v413
    %v1116 = vunpack.c.h.b16 %v413
    %v1117 = vunpack.c.l.b16 %v414
    %v1118 = vunpack.c.h.b16 %v414
    %v1119 = vunpack.c.l.b16 %v415
    %v1120 = vunpack.c.h.b16 %v415
    %v1121 = vunpack.c.l.b16 %v416
    %v1122 = vunpack.c.h.b16 %v416
    %v1123 = vunpack.c.l.b16 %v417
    %v1124 = vunpack.c.h.b16 %v417
    %v1125 = vunpack.c.l.b16 %v418
    %v1126 = vunpack.c.h.b16 %v418
    %v1127 = vunpack.c.l.b16 %v419
    %v1128 = vunpack.c.h.b16 %v419
    %v1129 = vunpack.c.l.b16 %v420
    %v1130 = vunpack.c.h.b16 %v420
    %v1131 = vunpack.c.l.b16 %v421
    %v1132 = vunpack.c.h.b16 %v421
    %v1133 = vunpack.c.l.b16 %v422
    %v1134 = vunpack.c.h.b16 %v422
    %v1135 = vunpack.c.l.b16 %v423
    %v1136 = vunpack.c.h.b16 %v423
    %v1137 = vunpack.c.l.b16 %v424
    %v1138 = vunpack.c.h.b16 %v424
    %v1139 = vunpack.c.l.b16 %v425
    %v1140 = vunpack.c.h.b16 %v425
    %v1141 = vunpack.c.l.b16 %v426
    %v1142 = vunpack.c.h.b16 %v426
    %v1143 = vunpack.c.l.b16 %v427
    %v1144 = vunpack.c.h.b16 %v427
    %v1145 = vunpack.c.l.b16 %v428
    %v1146 = vunpack.c.h.b16 %v428
    %v1147 = vunpack.c.l.b16 %v429
    %v1148 = vunpack.c.h.b16 %v429
    %v1149 = vunpack.c.l.b16 %v430
    %v1150 = vunpack.c.h.b16 %v430
    %v1151 = vunpack.c.l.b16 %v431
    %v1152 = vunpack.c.h.b16 %v431
    %v1153 = vunpack.c.l.b16 %v432
    %v1154 = vunpack.c.h.b16 %v432
    %v1155 = vunpack.c.l.b16 %v433
    %v1156 = vunpack.c.h.b16 %v433
    %v1157 = vunpack.c.l.b16 %v434
    %v1158 = vunpack.c.h.b16 %v434
    %v1159 = vunpack.c.l.b16 %v435
    %v1160 = vunpack.c.h.b16 %v435
    %v1161 = vunpack.c.l.b16 %v436
    %v1162 = vunpack.c.h.b16 %v436
    %v1163 = vunpack.c.l.b16 %v437
    %v1164 = vunpack.c.h.b16 %v437
    %v1165 = vunpack.c.l.b16 %v438
    %v1166 = vunpack.c.h.b16 %v438
    %v1167 = vunpack.c.l.b16 %v439
    %v1168 = vunpack.c.h.b16 %v439
    %v1169 = vunpack.c.l.b16 %v440
    %v1170 = vunpack.c.h.b16 %v440
    %v1171 = vunpack.c.l.b16 %v441
    %v1172 = vunpack.c.h.b16 %v441
    %v1173 = vunpack.c.l.b16 %v442
    %v1174 = vunpack.c.h.b16 %v442
    %v1175 = vunpack.c.l.b16 %v443
    %v1176 = vunpack.c.h.b16 %v443
    %v1177 = vunpack.c.l.b16 %v444
    %v1178 = vunpack.c.h.b16 %v444
    %v1179 = vunpack.c.l.b16 %v445
    %v1180 = vunpack.c.h.b16 %v445
    %v1181 = vunpack.c.l.b16 %v446
    %v1182 = vunpack.c.h.b16 %v446
    %v1183 = vunpack.c.l.b16 %v447
    %v1184 = vunpack.c.h.b16 %v447
    %v1185 = vunpack.c.l.b16 %v448
    %v1186 = vunpack.c.h.b16 %v448
    %v1187 = vunpack.c.l.b16 %v449
    %v1188 = vunpack.c.h.b16 %v449
    %v1189 = vunpack.c.l.b16 %v450
    %v1190 = vunpack.c.h.b16 %v450
    %v1191 = vunpack.c.l.b16 %v451
    %v1192 = vunpack.c.h.b16 %v451
    %v1193 = vunpack.c.l.b16 %v452
    %v1194 = vunpack.c.h.b16 %v452
    %v1195 = vunpack.c.l.b16 %v453
    %v1196 = vunpack.c.h.b16 %v453
    %v1197 = vunpack.c.l.b16 %v454
    %v1198 = vunpack.c.h.b16 %v454
    %v1199 = vunpack.c.l.b16 %v455
    %v1200 = vunpack.c.h.b16 %v455
    %v1201 = vunpack.c.l.b16 %v456
    %v1202 = vunpack.c.h.b16 %v456
    %v1203 = vunpack.c.l.b16 %v457
    %v1204 = vunpack.c.h.b16 %v457
    %v1205 = vunpack.c.l.b16 %v458
    %v1206 = vunpack.c.h.b16 %v458
    %v1207 = vunpack.c.l.b16 %v459
    %v1208 = vunpack.c.h.b16 %v459
    %v1209 = vunpack.c.l.b16 %v460
    %v1210 = vunpack.c.h.b16 %v460
    %v1211 = vunpack.c.l.b16 %v461
    %v1212 = vunpack.c.h.b16 %v461
    %v1213 = vunpack.c.l.b16 %v462
    %v1214 = vunpack.c.h.b16 %v462
    %v1215 = vunpack.c.l.b16 %v463
    %v1216 = vunpack.c.h.b16 %v463
    %v1217 = vunpack.c.l.b16 %v464
    %v1218 = vunpack.c.h.b16 %v464
    %v1219 = vunpack.c.l.b16 %v465
    %v1220 = vunpack.c.h.b16 %v465
    %v1221 = vunpack.c.l.b16 %v466
    %v1222 = vunpack.c.h.b16 %v466
    %v1223 = vunpack.c.l.b16 %v467
    %v1224 = vunpack.c.h.b16 %v467
    %v1225 = vunpack.c.l.b16 %v468
    %v1226 = vunpack.c.h.b16 %v468
    %v1227 = vunpack.c.l.b16 %v469
    %v1228 = vunpack.c.h.b16 %v469
    %v1229 = vunpack.c.l.b16 %v470
    %v1230 = vunpack.c.h.b16 %v470
    %v1231 = vunpack.c.l.b16 %v471
    %v1232 = vunpack.c.h.b16 %v471
    %v1233 = vunpack.c.l.b16 %v472
    %v1234 = vunpack.c.h.b16 %v472
    %v1235 = vunpack.c.l.b16 %v473
    %v1236 = vunpack.c.h.b16 %v473
    %v1237 = vunpack.c.l.b16 %v474
    %v1238 = vunpack.c.h.b16 %v474
    %v1239 = vunpack.c.l.b16 %v475
    %v1240 = vunpack.c.h.b16 %v475
    %v1241 = vunpack.c.l.b16 %v476
    %v1242 = vunpack.c.h.b16 %v476
    %v1243 = vunpack.c.l.b16 %v477
    %v1244 = vunpack.c.h.b16 %v477
    %v1245 = vunpack.c.l.b16 %v478
    %v1246 = vunpack.c.h.b16 %v478
    %v1247 = vunpack.c.l.b16 %v479
    %v1248 = vunpack.c.h.b16 %v479
    %v1249 = vunpack.c.l.b16 %v480
    %v1250 = vunpack.c.h.b16 %v480
    %v1251 = vunpack.c.l.b16 %v481
    %v1252 = vunpack.c.h.b16 %v481
    %v1253 = vunpack.c.l.b16 %v482
    %v1254 = vunpack.c.h.b16 %v482
    %v1255 = vunpack.c.l.b16 %v483
    %v1256 = vunpack.c.h.b16 %v483
    %v1257 = vunpack.c.l.b16 %v484
    %v1258 = vunpack.c.h.b16 %v484
    %v1259 = vunpack.c.l.b16 %v485
    %v1260 = vunpack.c.h.b16 %v485
    %v1261 = vunpack.c.l.b16 %v486
    %v1262 = vunpack.c.h.b16 %v486
    %v1263 = vunpack.c.l.b16 %v487
    %v1264 = vunpack.c.h.b16 %v487
    %v1265 = vunpack.c.l.b16 %v488
    %v1266 = vunpack.c.h.b16 %v488
    %v1267 = vunpack.c.l.b16 %v489
    %v1268 = vunpack.c.h.b16 %v489
    %v1269 = vunpack.c.l.b16 %v490
    %v1270 = vunpack.c.h.b16 %v490
    %v1271 = vunpack.c.l.b16 %v491
    %v1272 = vunpack.c.h.b16 %v491
    %v1273 = vunpack.c.l.b16 %v492
    %v1274 = vunpack.c.h.b16 %v492
    %v1275 = vunpack.c.l.b16 %v493
    %v1276 = vunpack.c.h.b16 %v493
    %v1277 = vunpack.c.l.b16 %v494
    %v1278 = vunpack.c.h.b16 %v494
    %v1279 = vunpack.c.l.b16 %v495
    %v1280 = vunpack.c.h.b16 %v495
    %v1281 = vunpack.c.l.b16 %v496
    %v1282 = vunpack.c.h.b16 %v496
    %v1283 = vunpack.c.l.b16 %v497
    %v1284 = vunpack.c.h.b16 %v497
    %v1285 = vunpack.c.l.b16 %v498
    %v1286 = vunpack.c.h.b16 %v498
    %v1287 = vunpack.c.l.b16 %v499
    %v1288 = vunpack.c.h.b16 %v499
    %v1289 = vunpack.c.l.b16 %v500
    %v1290 = vunpack.c.h.b16 %v500
    %v1291 = vpack.c.b16 %v783, %v779
    %v1292 = vpack.c.b16 %v784, %v780
    %v1293 = vpack.c.b16 %v785, %v781
    %v1294 = vpack.c.b16 %v786, %v782
    %v1295 = vpack.c.b16 %v791, %v787
    %v1296 = vpack.c.b16 %v792, %v788
    %v1297 = vpack.c.b16 %v793, %v789
    %v1298 = vpack.c.b16 %v794, %v790
    %v1299 = vpack.c.b16 %v799, %v795
    %v1300 = vpack.c.b16 %v800, %v796
    %v1301 = vpack.c.b16 %v801, %v797
    %v1302 = vpack.c.b16 %v802, %v798
    %v1303 = vpack.c.b16 %v807, %v803
    %v1304 = vpack.c.b16 %v808, %v804
    %v1305 = vpack.c.b16 %v809, %v805
    %v1306 = vpack.c.b16 %v810, %v806
    %v1307 = vpack.c.b16 %v815, %v811
    %v1308 = vpack.c.b16 %v816, %v812
    %v1309 = vpack.c.b16 %v817, %v813
    %v1310 = vpack.c.b16 %v818, %v814
    %v1311 = vpack.c.b16 %v823, %v819
    %v1312 = vpack.c.b16 %v824, %v820
    %v1313 = vpack.c.b16 %v825, %v821
    %v1314 = vpack.c.b16 %v826, %v822
    %v1315 = vpack.c.b16 %v831, %v827
    %v1316 = vpack.c.b16 %v832, %v828
    %v1317 = vpack.c.b16 %v833, %v829
    %v1318 = vpack.c.b16 %v834, %v830
    %v1319 = vpack.c.b16 %v839, %v835
    %v1320 = vpack.c.b16 %v840, %v836
    %v1321 = vpack.c.b16 %v841, %v837
    %v1322 = vpack.c.b16 %v842, %v838
    %v1323 = vpack.c.b16 %v847, %v843
    %v1324 = vpack.c.b16 %v848, %v844
    %v1325 = vpack.c.b16 %v849, %v845
    %v1326 = vpack.c.b16 %v850, %v846
    %v1327 = vpack.c.b16 %v855, %v851
    %v1328 = vpack.c.b16 %v856, %v852
    %v1329 = vpack.c.b16 %v857, %v853
    %v1330 = vpack.c.b16 %v858, %v854
    %v1331 = vpack.c.b16 %v863, %v859
    %v1332 = vpack.c.b16 %v864, %v860
    %v1333 = vpack.c.b16 %v865, %v861
    %v1334 = vpack.c.b16 %v866, %v862
    %v1335 = vpack.c.b16 %v871, %v867
    %v1336 = vpack.c.b16 %v872, %v868
    %v1337 = vpack.c.b16 %v873, %v869
    %v1338 = vpack.c.b16 %v874, %v870
    %v1339 = vpack.c.b16 %v879, %v875
    %v1340 = vpack.c.b16 %v880, %v876
    %v1341 = vpack.c.b16 %v881, %v877
    %v1342 = vpack.c.b16 %v882, %v878
    %v1343 = vpack.c.b16 %v887, %v883
    %v1344 = vpack.c.b16 %v888, %v884
    %v1345 = vpack.c.b16 %v889, %v885
    %v1346 = vpack.c.b16 %v890, %v886
    %v1347 = vpack.c.b16 %v895, %v891
    %v1348 = vpack.c.b16 %v896, %v892
    %v1349 = vpack.c.b16 %v897, %v893
    %v1350 = vpack.c.b16 %v898, %v894
    %v1351 = vpack.c.b16 %v903, %v899
    %v1352 = vpack.c.b16 %v904, %v900
    %v1353 = vpack.c.b16 %v905, %v901
    %v1354 = vpack.c.b16 %v906, %v902
    %v1355 = vpack.c.b16 %v911, %v907
    %v1356 = vpack.c.b16 %v912, %v908
    %v1357 = vpack.c.b16 %v913, %v909
    %v1358 = vpack.c.b16 %v914, %v910
    %v1359 = vpack.c.b16 %v919, %v915
    %v1360 = vpack.c.b16 %v920, %v916
    %v1361 = vpack.c.b16 %v921, %v917
    %v1362 = vpack.c.b16 %v922, %v918
    %v1363 = vpack.c.b16 %v927, %v923
    %v1364 = vpack.c.b16 %v928, %v924
    %v1365 = vpack.c.b16 %v929, %v925
    %v1366 = vpack.c.b16 %v930, %v926
    %v1367 = vpack.c.b16 %v935, %v931
    %v1368 = vpack.c.b16 %v936, %v932
    %v1369 = vpack.c.b16 %v937, %v933
    %v1370 = vpack.c.b16 %v938, %v934
    %v1371 = vpack.c.b16 %v943, %v939
    %v1372 = vpack.c.b16 %v944, %v940
    %v1373 = vpack.c.b16 %v945, %v941
    %v1374 = vpack.c.b16 %v946, %v942
    %v1375 = vpack.c.b16 %v951, %v947
    %v1376 = vpack.c.b16 %v952, %v948
    %v1377 = vpack.c.b16 %v953, %v949
    %v1378 = vpack.c.b16 %v954, %v950
    %v1379 = vpack.c.b16 %v959, %v955
    %v1380 = vpack.c.b16 %v960, %v956
    %v1381 = vpack.c.b16 %v961, %v957
    %v1382 = vpack.c.b16 %v962, %v958
    %v1383 = vpack.c.b16 %v967, %v963
    %v1384 = vpack.c.b16 %v968, %v964
    %v1385 = vpack.c.b16 %v969, %v965
    %v1386 = vpack.c.b16 %v970, %v966
    %v1387 = vpack.c.b16 %v975, %v971
    %v1388 = vpack.c.b16 %v976, %v972
    %v1389 = vpack.c.b16 %v977, %v973
    %v1390 = vpack.c.b16 %v978, %v974
    %v1391 = vpack.c.b16 %v983, %v979
    %v1392 = vpack.c.b16 %v984, %v980
    %v1393 = vpack.c.b16 %v985, %v981
    %v1394 = vpack.c.b16 %v986, %v982
    %v1395 = vpack.c.b16 %v991, %v987
    %v1396 = vpack.c.b16 %v992, %v988
    %v1397 = vpack.c.b16 %v993, %v989
    %v1398 = vpack.c.b16 %v994, %v990
    %v1399 = vpack.c.b16 %v999, %v995
    %v1400 = vpack.c.b16 %v1000, %v996
    %v1401 = vpack.c.b16 %v1001, %v997
    %v1402 = vpack.c.b16 %v1002, %v998
    %v1403 = vpack.c.b16 %v1007, %v1003
    %v1404 = vpack.c.b16 %v1008, %v1004
    %v1405 = vpack.c.b16 %v1009, %v1005
    %v1406 = vpack.c.b16 %v1010, %v1006
    %v1407 = vpack.c.b16 %v1015, %v1011
    %v1408 = vpack.c.b16 %v1016, %v1012
    %v1409 = vpack.c.b16 %v1017, %v1013
    %v1410 = vpack.c.b16 %v1018, %v1014
    %v1411 = vpack.c.b16 %v1023, %v1019
    %v1412 = vpack.c.b16 %v1024, %v1020
    %v1413 = vpack.c.b16 %v1025, %v1021
    %v1414 = vpack.c.b16 %v1026, %v1022
    %v1415 = vpack.c.b16 %v1031, %v1027
    %v1416 = vpack.c.b16 %v1032, %v1028
    %v1417 = vpack.c.b16 %v1033, %v1029
    %v1418 = vpack.c.b16 %v1034, %v1030
    %v1419 = vpack.c.b16 %v1039, %v1035
    %v1420 = vpack.c.b16 %v1040, %v1036
    %v1421 = vpack.c.b16 %v1041, %v1037
    %v1422 = vpack.c.b16 %v1042, %v1038
    %v1423 = vpack.c.b16 %v1047, %v1043
    %v1424 = vpack.c.b16 %v1048, %v1044
    %v1425 = vpack.c.b16 %v1049, %v1045
    %v1426 = vpack.c.b16 %v1050, %v1046
    %v1427 = vpack.c.b16 %v1055, %v1051
    %v1428 = vpack.c.b16 %v1056, %v1052
    %v1429 = vpack.c.b16 %v1057, %v1053
    %v1430 = vpack.c.b16 %v1058, %v1054
    %v1431 = vpack.c.b16 %v1063, %v1059
    %v1432 = vpack.c.b16 %v1064, %v1060
    %v1433 = vpack.c.b16 %v1065, %v1061
    %v1434 = vpack.c.b16 %v1066, %v1062
    %v1435 = vpack.c.b16 %v1071, %v1067
    %v1436 = vpack.c.b16 %v1072, %v1068
    %v1437 = vpack.c.b16 %v1073, %v1069
    %v1438 = vpack.c.b16 %v1074, %v1070
    %v1439 = vpack.c.b16 %v1079, %v1075
    %v1440 = vpack.c.b16 %v1080, %v1076
    %v1441 = vpack.c.b16 %v1081, %v1077
    %v1442 = vpack.c.b16 %v1082, %v1078
    %v1443 = vpack.c.b16 %v1087, %v1083
    %v1444 = vpack.c.b16 %v1088, %v1084
    %v1445 = vpack.c.b16 %v1089, %v1085
    %v1446 = vpack.c.b16 %v1090, %v1086
    %v1447 = vpack.c.b16 %v1095, %v1091
    %v1448 = vpack.c.b16 %v1096, %v1092
    %v1449 = vpack.c.b16 %v1097, %v1093
    %v1450 = vpack.c.b16 %v1098, %v1094
    %v1451 = vpack.c.b16 %v1103, %v1099
    %v1452 = vpack.c.b16 %v1104, %v1100
    %v1453 = vpack.c.b16 %v1105, %v1101
    %v1454 = vpack.c.b16 %v1106, %v1102
    %v1455 = vpack.c.b16 %v1111, %v1107
    %v1456 = vpack.c.b16 %v1112, %v1108
    %v1457 = vpack.c.b16 %v1113, %v1109
    %v1458 = vpack.c.b16 %v1114, %v1110
    %v1459 = vpack.c.b16 %v1119, %v1115
    %v1460 = vpack.c.b16 %v1120, %v1116
    %v1461 = vpack.c.b16 %v1121, %v1117
    %v1462 = vpack.c.b16 %v1122, %v1118
    %v1463 = vpack.c.b16 %v1127, %v1123
    %v1464 = vpack.c.b16 %v1128, %v1124
    %v1465 = vpack.c.b16 %v1129, %v1125
    %v1466 = vpack.c.b16 %v1130, %v1126
    %v1467 = vpack.c.b16 %v1135, %v1131
    %v1468 = vpack.c.b16 %v1136, %v1132
    %v1469 = vpack.c.b16 %v1137, %v1133
    %v1470 = vpack.c.b16 %v1138, %v1134
    %v1471 = vpack.c.b16 %v1143, %v1139
    %v1472 = vpack.c.b16 %v1144, %v1140
    %v1473 = vpack.c.b16 %v1145, %v1141
    %v1474 = vpack.c.b16 %v1146, %v1142
    %v1475 = vpack.c.b16 %v1151, %v1147
    %v1476 = vpack.c.b16 %v1152, %v1148
    %v1477 = vpack.c.b16 %v1153, %v1149
    %v1478 = vpack.c.b16 %v1154, %v1150
    %v1479 = vpack.c.b16 %v1159, %v1155
    %v1480 = vpack.c.b16 %v1160, %v1156
    %v1481 = vpack.c.b16 %v1161, %v1157
    %v1482 = vpack.c.b16 %v1162, %v1158
    %v1483 = vpack.c.b16 %v1167, %v1163
    %v1484 = vpack.c.b16 %v1168, %v1164
    %v1485 = vpack.c.b16 %v1169, %v1165
    %v1486 = vpack.c.b16 %v1170, %v1166
    %v1487 = vpack.c.b16 %v1175, %v1171
    %v1488 = vpack.c.b16 %v1176, %v1172
    %v1489 = vpack.c.b16 %v1177, %v1173
    %v1490 = vpack.c.b16 %v1178, %v1174
    %v1491 = vpack.c.b16 %v1183, %v1179
    %v1492 = vpack.c.b16 %v1184, %v1180
    %v1493 = vpack.c.b16 %v1185, %v1181
    %v1494 = vpack.c.b16 %v1186, %v1182
    %v1495 = vpack.c.b16 %v1191, %v1187
    %v1496 = vpack.c.b16 %v1192, %v1188
    %v1497 = vpack.c.b16 %v1193, %v1189
    %v1498 = vpack.c.b16 %v1194, %v1190
    %v1499 = vpack.c.b16 %v1199, %v1195
    %v1500 = vpack.c.b16 %v1200, %v1196
    %v1501 = vpack.c.b16 %v1201, %v1197
    %v1502 = vpack.c.b16 %v1202, %v1198
    %v1503 = vpack.c.b16 %v1207, %v1203
    %v1504 = vpack.c.b16 %v1208, %v1204
    %v1505 = vpack.c.b16 %v1209, %v1205
    %v1506 = vpack.c.b16 %v1210, %v1206
    %v1507 = vpack.c.b16 %v1215, %v1211
    %v1508 = vpack.c.b16 %v1216, %v1212
    %v1509 = vpack.c.b16 %v1217, %v1213
    %v1510 = vpack.c.b16 %v1218, %v1214
    %v1511 = vpack.c.b16 %v1223, %v1219
    %v1512 = vpack.c.b16 %v1224, %v1220
    %v1513 = vpack.c.b16 %v1225, %v1221
    %v1514 = vpack.c.b16 %v1226, %v1222
    %v1515 = vpack.c.b16 %v1231, %v1227
    %v1516 = vpack.c.b16 %v1232, %v1228
    %v1517 = vpack.c.b16 %v1233, %v1229
    %v1518 = vpack.c.b16 %v1234, %v1230
    %v1519 = vpack.c.b16 %v1239, %v1235
    %v1520 = vpack.c.b16 %v1240, %v1236
    %v1521 = vpack.c.b16 %v1241, %v1237
    %v1522 = vpack.c.b16 %v1242, %v1238
    %v1523 = vpack.c.b16 %v1247, %v1243
    %v1524 = vpack.c.b16 %v1248, %v1244
    %v1525 = vpack.c.b16 %v1249, %v1245
    %v1526 = vpack.c.b16 %v1250, %v1246
    %v1527 = vpack.c.b16 %v1255, %v1251
    %v1528 = vpack.c.b16 %v1256, %v1252
    %v1529 = vpack.c.b16 %v1257, %v1253
    %v1530 = vpack.c.b16 %v1258, %v1254
    %v1531 = vpack.c.b16 %v1263, %v1259
    %v1532 = vpack.c.b16 %v1264, %v1260
    %v1533 = vpack.c.b16 %v1265, %v1261
    %v1534 = vpack.c.b16 %v1266, %v1262
    %v1535 = vpack.c.b16 %v1271, %v1267
    %v1536 = vpack.c.b16 %v1272, %v1268
    %v1537 = vpack.c.b16 %v1273, %v1269
    %v1538 = vpack.c.b16 %v1274, %v1270
    %v1539 = vpack.c.b16 %v1279, %v1275
    %v1540 = vpack.c.b16 %v1280, %v1276
    %v1541 = vpack.c.b16 %v1281, %v1277
    %v1542 = vpack.c.b16 %v1282, %v1278
    %v1543 = vpack.c.b16 %v1287, %v1283
    %v1544 = vpack.c.b16 %v1288, %v1284
    %v1545 = vpack.c.b16 %v1289, %v1285
    %v1546 = vpack.c.b16 %v1290, %v1286
    %1803 = vmatprep.subr.bf16.mxu0 %v1292
    %1804 = vmatpush1.bf16.msra.mxu0 %v1291
    %1805 = vmatprep.subr.bf16.mxu0 %v1296
    %1806 = vmatpush1.bf16.msra.mxu0 %v1295
    %1807 = vmatprep.subr.bf16.mxu0 %v1300
    %1808 = vmatpush1.bf16.msra.mxu0 %v1299
    %1809 = vmatprep.subr.bf16.mxu0 %v1304
    %1810 = vmatpush1.bf16.msra.mxu0 %v1303
    %1811 = vmatprep.subr.bf16.mxu0 %v1308
    %1812 = vmatpush1.bf16.msra.mxu0 %v1307
    %1813 = vmatprep.subr.bf16.mxu0 %v1312
    %1814 = vmatpush1.bf16.msra.mxu0 %v1311
    %1815 = vmatprep.subr.bf16.mxu0 %v1316
    %1816 = vmatpush1.bf16.msra.mxu0 %v1315
    %1817 = vmatprep.subr.bf16.mxu0 %v1320
    %1818 = vmatpush1.bf16.msra.mxu0 %v1319
    %1819 = vmatprep.subr.bf16.mxu0 %v1324
    %1820 = vmatpush1.bf16.msra.mxu0 %v1323
    %1821 = vmatprep.subr.bf16.mxu0 %v1328
    %1822 = vmatpush1.bf16.msra.mxu0 %v1327
    %1823 = vmatprep.subr.bf16.mxu0 %v1332
    %1824 = vmatpush1.bf16.msra.mxu0 %v1331
    %1825 = vmatprep.subr.bf16.mxu0 %v1336
    %1826 = vmatpush1.bf16.msra.mxu0 %v1335
    %1827 = vmatprep.subr.bf16.mxu0 %v1340
    %1828 = vmatpush1.bf16.msra.mxu0 %v1339
    %1829 = vmatprep.subr.bf16.mxu0 %v1344
    %1830 = vmatpush1.bf16.msra.mxu0 %v1343
    %1831 = vmatprep.subr.bf16.mxu0 %v1348
    %1832 = vmatpush1.bf16.msra.mxu0 %v1347
    %1833 = vmatprep.subr.bf16.mxu0 %v1352
    %1834 = vmatpush1.bf16.msra.mxu0 %v1351
    %1835 = vmatprep.mubr.bf16.mxu0 %v238
    %1836 = vmatmul.mubr.bf16.gmra.mrb[0].mxu0 %v237
    %v1837 = vpop.f32.mrb[0].mxu0
    %v1838 = vadd.f32 %v506, %v1837
    %v1839 = vpop.f32.mrb[0].mxu0
    %v1840 = vadd.f32 %v510, %v1839
    %v1841 = vpop.f32.mrb[0].mxu0
    %v1842 = vpop.f32.mrb[0].mxu0
    %1843 = vdwg.mxu0
    %1844 = vmatprep.subr.bf16.mxu0 %v1356
    %1845 = vmatpush1.bf16.msra.mxu0 %v1355
    %1846 = vmatprep.subr.bf16.mxu0 %v1360
    %1847 = vmatpush1.bf16.msra.mxu0 %v1359
    %1848 = vmatprep.subr.bf16.mxu0 %v1364
    %1849 = vmatpush1.bf16.msra.mxu0 %v1363
    %1850 = vmatprep.subr.bf16.mxu0 %v1368
    %1851 = vmatpush1.bf16.msra.mxu0 %v1367
    %1852 = vmatprep.subr.bf16.mxu0 %v1372
    %1853 = vmatpush1.bf16.msra.mxu0 %v1371
    %1854 = vmatprep.subr.bf16.mxu0 %v1376
    %1855 = vmatpush1.bf16.msra.mxu0 %v1375
    %1856 = vmatprep.subr.bf16.mxu0 %v1380
    %1857 = vmatpush1.bf16.msra.mxu0 %v1379
    %1858 = vmatprep.subr.bf16.mxu0 %v1384
    %1859 = vmatpush1.bf16.msra.mxu0 %v1383
    %1860 = vmatprep.subr.bf16.mxu0 %v1388
    %1861 = vmatpush1.bf16.msra.mxu0 %v1387
    %1862 = vmatprep.subr.bf16.mxu0 %v1392
    %1863 = vmatpush1.bf16.msra.mxu0 %v1391
    %1864 = vmatprep.subr.bf16.mxu0 %v1396
    %1865 = vmatpush1.bf16.msra.mxu0 %v1395
    %1866 = vmatprep.subr.bf16.mxu0 %v1400
    %1867 = vmatpush1.bf16.msra.mxu0 %v1399
    %1868 = vmatprep.subr.bf16.mxu0 %v1404
    %1869 = vmatpush1.bf16.msra.mxu0 %v1403
    %1870 = vmatprep.subr.bf16.mxu0 %v1408
    %1871 = vmatpush1.bf16.msra.mxu0 %v1407
    %1872 = vmatprep.subr.bf16.mxu0 %v1412
    %1873 = vmatpush1.bf16.msra.mxu0 %v1411
    %1874 = vmatprep.subr.bf16.mxu0 %v1416
    %1875 = vmatpush1.bf16.msra.mxu0 %v1415
    %1876 = vmatprep.mubr.bf16.mxu0 %v240
    %1877 = vmatmul.mubr.bf16.gmra.mrb[0].mxu0 %v239
    %v1878 = vpop.f32.mrb[0].mxu0
    %v1879 = vadd.f32 %v1838, %v1878
    %v1880 = vpop.f32.mrb[0].mxu0
    %v1881 = vadd.f32 %v1840, %v1880
    %v1882 = vpop.f32.mrb[0].mxu0
    %v1883 = vpop.f32.mrb[0].mxu0
    %1884 = vdwg.mxu0
    %1885 = vmatprep.subr.bf16.mxu0 %v1420
    %1886 = vmatpush1.bf16.msra.mxu0 %v1419
    %1887 = vmatprep.subr.bf16.mxu0 %v1424
    %1888 = vmatpush1.bf16.msra.mxu0 %v1423
    %1889 = vmatprep.subr.bf16.mxu0 %v1428
    %1890 = vmatpush1.bf16.msra.mxu0 %v1427
    %1891 = vmatprep.subr.bf16.mxu0 %v1432
    %1892 = vmatpush1.bf16.msra.mxu0 %v1431
    %1893 = vmatprep.subr.bf16.mxu0 %v1436
    %1894 = vmatpush1.bf16.msra.mxu0 %v1435
    %1895 = vmatprep.subr.bf16.mxu0 %v1440
    %1896 = vmatpush1.bf16.msra.mxu0 %v1439
    %1897 = vmatprep.subr.bf16.mxu0 %v1444
    %1898 = vmatpush1.bf16.msra.mxu0 %v1443
    %1899 = vmatprep.subr.bf16.mxu0 %v1448
    %1900 = vmatpush1.bf16.msra.mxu0 %v1447
    %1901 = vmatprep.subr.bf16.mxu0 %v1452
    %1902 = vmatpush1.bf16.msra.mxu0 %v1451
    %1903 = vmatprep.subr.bf16.mxu0 %v1456
    %1904 = vmatpush1.bf16.msra.mxu0 %v1455
    %1905 = vmatprep.subr.bf16.mxu0 %v1460
    %1906 = vmatpush1.bf16.msra.mxu0 %v1459
    %1907 = vmatprep.subr.bf16.mxu0 %v1464
    %1908 = vmatpush1.bf16.msra.mxu0 %v1463
    %1909 = vmatprep.subr.bf16.mxu0 %v1468
    %1910 = vmatpush1.bf16.msra.mxu0 %v1467
    %1911 = vmatprep.subr.bf16.mxu0 %v1472
    %1912 = vmatpush1.bf16.msra.mxu0 %v1471
    %1913 = vmatprep.subr.bf16.mxu0 %v1476
    %1914 = vmatpush1.bf16.msra.mxu0 %v1475
    %1915 = vmatprep.subr.bf16.mxu0 %v1480
    %1916 = vmatpush1.bf16.msra.mxu0 %v1479
    %1917 = vmatprep.mubr.bf16.mxu0 %v242
    %1918 = vmatmul.mubr.bf16.gmra.mrb[0].mxu0 %v241
    %v1919 = vpop.f32.mrb[0].mxu0
    %v1920 = vadd.f32 %v1879, %v1919
    %v1921 = vpop.f32.mrb[0].mxu0
    %v1922 = vadd.f32 %v1881, %v1921
    %v1923 = vpop.f32.mrb[0].mxu0
    %v1924 = vpop.f32.mrb[0].mxu0
    %1925 = vdwg.mxu0
    %1926 = vmatprep.subr.bf16.mxu0 %v1484
    %1927 = vmatpush1.bf16.msra.mxu0 %v1483
    %1928 = vmatprep.subr.bf16.mxu0 %v1488
    %1929 = vmatpush1.bf16.msra.mxu0 %v1487
    %1930 = vmatprep.subr.bf16.mxu0 %v1492
    %1931 = vmatpush1.bf16.msra.mxu0 %v1491
    %1932 = vmatprep.subr.bf16.mxu0 %v1496
    %1933 = vmatpush1.bf16.msra.mxu0 %v1495
    %1934 = vmatprep.subr.bf16.mxu0 %v1500
    %1935 = vmatpush1.bf16.msra.mxu0 %v1499
    %1936 = vmatprep.subr.bf16.mxu0 %v1504
    %1937 = vmatpush1.bf16.msra.mxu0 %v1503
    %1938 = vmatprep.subr.bf16.mxu0 %v1508
    %1939 = vmatpush1.bf16.msra.mxu0 %v1507
    %1940 = vmatprep.subr.bf16.mxu0 %v1512
    %1941 = vmatpush1.bf16.msra.mxu0 %v1511
    %1942 = vmatprep.subr.bf16.mxu0 %v1516
    %1943 = vmatpush1.bf16.msra.mxu0 %v1515
    %1944 = vmatprep.subr.bf16.mxu0 %v1520
    %1945 = vmatpush1.bf16.msra.mxu0 %v1519
    %1946 = vmatprep.subr.bf16.mxu0 %v1524
    %1947 = vmatpush1.bf16.msra.mxu0 %v1523
    %1948 = vmatprep.subr.bf16.mxu0 %v1528
    %1949 = vmatpush1.bf16.msra.mxu0 %v1527
    %1950 = vmatprep.subr.bf16.mxu0 %v1532
    %1951 = vmatpush1.bf16.msra.mxu0 %v1531
    %1952 = vmatprep.subr.bf16.mxu0 %v1536
    %1953 = vmatpush1.bf16.msra.mxu0 %v1535
    %1954 = vmatprep.subr.bf16.mxu0 %v1540
    %1955 = vmatpush1.bf16.msra.mxu0 %v1539
    %1956 = vmatprep.subr.bf16.mxu0 %v1544
    %1957 = vmatpush1.bf16.msra.mxu0 %v1543
    %1958 = vmatprep.mubr.bf16.mxu0 %v244
    %1959 = vmatmul.mubr.bf16.gmra.mrb[0].mxu0 %v243
    %v1960 = vpop.f32.mrb[0].mxu0
    %v1961 = vadd.f32 %v1920, %v1960
    %v1962 = vpop.f32.mrb[0].mxu0
    %v1963 = vadd.f32 %v1922, %v1962
    %v1964 = vpop.f32.mrb[0].mxu0
    %v1965 = vpop.f32.mrb[0].mxu0
    %1966 = vdwg.mxu0
    %1967 = vmatprep.subr.bf16.mxu0 %v1294
    %1968 = vmatpush1.bf16.msra.mxu0 %v1293
    %1969 = vmatprep.subr.bf16.mxu0 %v1298
    %1970 = vmatpush1.bf16.msra.mxu0 %v1297
    %1971 = vmatprep.subr.bf16.mxu0 %v1302
    %1972 = vmatpush1.bf16.msra.mxu0 %v1301
    %1973 = vmatprep.subr.bf16.mxu0 %v1306
    %1974 = vmatpush1.bf16.msra.mxu0 %v1305
    %1975 = vmatprep.subr.bf16.mxu0 %v1310
    %1976 = vmatpush1.bf16.msra.mxu0 %v1309
    %1977 = vmatprep.subr.bf16.mxu0 %v1314
    %1978 = vmatpush1.bf16.msra.mxu0 %v1313
    %1979 = vmatprep.subr.bf16.mxu0 %v1318
    %1980 = vmatpush1.bf16.msra.mxu0 %v1317
    %1981 = vmatprep.subr.bf16.mxu0 %v1322
    %1982 = vmatpush1.bf16.msra.mxu0 %v1321
    %1983 = vmatprep.subr.bf16.mxu0 %v1326
    %1984 = vmatpush1.bf16.msra.mxu0 %v1325
    %1985 = vmatprep.subr.bf16.mxu0 %v1330
    %1986 = vmatpush1.bf16.msra.mxu0 %v1329
    %1987 = vmatprep.subr.bf16.mxu0 %v1334
    %1988 = vmatpush1.bf16.msra.mxu0 %v1333
    %1989 = vmatprep.subr.bf16.mxu0 %v1338
    %1990 = vmatpush1.bf16.msra.mxu0 %v1337
    %1991 = vmatprep.subr.bf16.mxu0 %v1342
    %1992 = vmatpush1.bf16.msra.mxu0 %v1341
    %1993 = vmatprep.subr.bf16.mxu0 %v1346
    %1994 = vmatpush1.bf16.msra.mxu0 %v1345
    %1995 = vmatprep.subr.bf16.mxu0 %v1350
    %1996 = vmatpush1.bf16.msra.mxu0 %v1349
    %1997 = vmatprep.subr.bf16.mxu0 %v1354
    %1998 = vmatpush1.bf16.msra.mxu0 %v1353
    %1999 = vmatprep.mubr.bf16.mxu0 %v238
    %2000 = vmatmul.mubr.bf16.gmra.mrb[0].mxu0 %v237
    %v2001 = vpop.f32.mrb[0].mxu0
    %v2002 = vadd.f32 %v514, %v2001
    %v2003 = vpop.f32.mrb[0].mxu0
    %v2004 = vadd.f32 %v518, %v2003
    %v2005 = vpop.f32.mrb[0].mxu0
    %v2006 = vpop.f32.mrb[0].mxu0
    %2007 = vdwg.mxu0
    %2008 = vmatprep.subr.bf16.mxu0 %v1358
    %2009 = vmatpush1.bf16.msra.mxu0 %v1357
    %2010 = vmatprep.subr.bf16.mxu0 %v1362
    %2011 = vmatpush1.bf16.msra.mxu0 %v1361
    %2012 = vmatprep.subr.bf16.mxu0 %v1366
    %2013 = vmatpush1.bf16.msra.mxu0 %v1365
    %2014 = vmatprep.subr.bf16.mxu0 %v1370
    %2015 = vmatpush1.bf16.msra.mxu0 %v1369
    %2016 = vmatprep.subr.bf16.mxu0 %v1374
    %2017 = vmatpush1.bf16.msra.mxu0 %v1373
    %2018 = vmatprep.subr.bf16.mxu0 %v1378
    %2019 = vmatpush1.bf16.msra.mxu0 %v1377
    %2020 = vmatprep.subr.bf16.mxu0 %v1382
    %2021 = vmatpush1.bf16.msra.mxu0 %v1381
    %2022 = vmatprep.subr.bf16.mxu0 %v1386
    %2023 = vmatpush1.bf16.msra.mxu0 %v1385
    %2024 = vmatprep.subr.bf16.mxu0 %v1390
    %2025 = vmatpush1.bf16.msra.mxu0 %v1389
    %2026 = vmatprep.subr.bf16.mxu0 %v1394
    %2027 = vmatpush1.bf16.msra.mxu0 %v1393
    %2028 = vmatprep.subr.bf16.mxu0 %v1398
    %2029 = vmatpush1.bf16.msra.mxu0 %v1397
    %2030 = vmatprep.subr.bf16.mxu0 %v1402
    %2031 = vmatpush1.bf16.msra.mxu0 %v1401
    %2032 = vmatprep.subr.bf16.mxu0 %v1406
    %2033 = vmatpush1.bf16.msra.mxu0 %v1405
    %2034 = vmatprep.subr.bf16.mxu0 %v1410
    %2035 = vmatpush1.bf16.msra.mxu0 %v1409
    %2036 = vmatprep.subr.bf16.mxu0 %v1414
    %2037 = vmatpush1.bf16.msra.mxu0 %v1413
    %2038 = vmatprep.subr.bf16.mxu0 %v1418
    %2039 = vmatpush1.bf16.msra.mxu0 %v1417
    %2040 = vmatprep.mubr.bf16.mxu0 %v240
    %2041 = vmatmul.mubr.bf16.gmra.mrb[0].mxu0 %v239
    %v2042 = vpop.f32.mrb[0].mxu0
    %v2043 = vadd.f32 %v2002, %v2042
    %v2044 = vpop.f32.mrb[0].mxu0
    %v2045 = vadd.f32 %v2004, %v2044
    %v2046 = vpop.f32.mrb[0].mxu0
    %v2047 = vpop.f32.mrb[0].mxu0
    %2048 = vdwg.mxu0
    %2049 = vmatprep.subr.bf16.mxu0 %v1422
    %2050 = vmatpush1.bf16.msra.mxu0 %v1421
    %2051 = vmatprep.subr.bf16.mxu0 %v1426
    %2052 = vmatpush1.bf16.msra.mxu0 %v1425
    %2053 = vmatprep.subr.bf16.mxu0 %v1430
    %2054 = vmatpush1.bf16.msra.mxu0 %v1429
    %2055 = vmatprep.subr.bf16.mxu0 %v1434
    %2056 = vmatpush1.bf16.msra.mxu0 %v1433
    %2057 = vmatprep.subr.bf16.mxu0 %v1438
    %2058 = vmatpush1.bf16.msra.mxu0 %v1437
    %2059 = vmatprep.subr.bf16.mxu0 %v1442
    %2060 = vmatpush1.bf16.msra.mxu0 %v1441
    %2061 = vmatprep.subr.bf16.mxu0 %v1446
    %2062 = vmatpush1.bf16.msra.mxu0 %v1445
    %2063 = vmatprep.subr.bf16.mxu0 %v1450
    %2064 = vmatpush1.bf16.msra.mxu0 %v1449
    %2065 = vmatprep.subr.bf16.mxu0 %v1454
    %2066 = vmatpush1.bf16.msra.mxu0 %v1453
    %2067 = vmatprep.subr.bf16.mxu0 %v1458
    %2068 = vmatpush1.bf16.msra.mxu0 %v1457
    %2069 = vmatprep.subr.bf16.mxu0 %v1462
    %2070 = vmatpush1.bf16.msra.mxu0 %v1461
    %2071 = vmatprep.subr.bf16.mxu0 %v1466
    %2072 = vmatpush1.bf16.msra.mxu0 %v1465
    %2073 = vmatprep.subr.bf16.mxu0 %v1470
    %2074 = vmatpush1.bf16.msra.mxu0 %v1469
    %2075 = vmatprep.subr.bf16.mxu0 %v1474
    %2076 = vmatpush1.bf16.msra.mxu0 %v1473
    %2077 = vmatprep.subr.bf16.mxu0 %v1478
    %2078 = vmatpush1.bf16.msra.mxu0 %v1477
    %2079 = vmatprep.subr.bf16.mxu0 %v1482
    %2080 = vmatpush1.bf16.msra.mxu0 %v1481
    %2081 = vmatprep.mubr.bf16.mxu0 %v242
    %2082 = vmatmul.mubr.bf16.gmra.mrb[0].mxu0 %v241
    %v2083 = vpop.f32.mrb[0].mxu0
    %v2084 = vadd.f32 %v2043, %v2083
    %v2085 = vpop.f32.mrb[0].mxu0
    %v2086 = vadd.f32 %v2045, %v2085
    %v2087 = vpop.f32.mrb[0].mxu0
    %v2088 = vpop.f32.mrb[0].mxu0
    %2089 = vdwg.mxu0
    %2090 = vmatprep.subr.bf16.mxu0 %v1486
    %2091 = vmatpush1.bf16.msra.mxu0 %v1485
    %2092 = vmatprep.subr.bf16.mxu0 %v1490
    %2093 = vmatpush1.bf16.msra.mxu0 %v1489
    %2094 = vmatprep.subr.bf16.mxu0 %v1494
    %2095 = vmatpush1.bf16.msra.mxu0 %v1493
    %2096 = vmatprep.subr.bf16.mxu0 %v1498
    %2097 = vmatpush1.bf16.msra.mxu0 %v1497
    %2098 = vmatprep.subr.bf16.mxu0 %v1502
    %2099 = vmatpush1.bf16.msra.mxu0 %v1501
    %2100 = vmatprep.subr.bf16.mxu0 %v1506
    %2101 = vmatpush1.bf16.msra.mxu0 %v1505
    %2102 = vmatprep.subr.bf16.mxu0 %v1510
    %2103 = vmatpush1.bf16.msra.mxu0 %v1509
    %2104 = vmatprep.subr.bf16.mxu0 %v1514
    %2105 = vmatpush1.bf16.msra.mxu0 %v1513
    %2106 = vmatprep.subr.bf16.mxu0 %v1518
    %2107 = vmatpush1.bf16.msra.mxu0 %v1517
    %2108 = vmatprep.subr.bf16.mxu0 %v1522
    %2109 = vmatpush1.bf16.msra.mxu0 %v1521
    %2110 = vmatprep.subr.bf16.mxu0 %v1526
    %2111 = vmatpush1.bf16.msra.mxu0 %v1525
    %2112 = vmatprep.subr.bf16.mxu0 %v1530
    %2113 = vmatpush1.bf16.msra.mxu0 %v1529
    %2114 = vmatprep.subr.bf16.mxu0 %v1534
    %2115 = vmatpush1.bf16.msra.mxu0 %v1533
    %2116 = vmatprep.subr.bf16.mxu0 %v1538
    %2117 = vmatpush1.bf16.msra.mxu0 %v1537
    %2118 = vmatprep.subr.bf16.mxu0 %v1542
    %2119 = vmatpush1.bf16.msra.mxu0 %v1541
    %2120 = vmatprep.subr.bf16.mxu0 %v1546
    %2121 = vmatpush1.bf16.msra.mxu0 %v1545
    %2122 = vmatprep.mubr.bf16.mxu0 %v244
    %2123 = vmatmul.mubr.bf16.gmra.mrb[0].mxu0 %v243
    %v2124 = vpop.f32.mrb[0].mxu0
    %v2125 = vadd.f32 %v2084, %v2124
    %v2126 = vpop.f32.mrb[0].mxu0
    %v2127 = vadd.f32 %v2086, %v2126
    %v2128 = vpop.f32.mrb[0].mxu0
    %v2129 = vpop.f32.mrb[0].mxu0
    %2130 = vdwg.mxu0
    %v2131 = vmax.f32 %v1961, 0.0
    %v2132 = vmax.f32 %v1963, 0.0
    %v2133 = vmax.f32 %v2125, 0.0
    %v2134 = vmax.f32 %v2127, 0.0
    %v2135 = vpack.c.bf16 %v2131, %v2131
    %v2136 = vpack.c.bf16 %v2132, %v2132
    %v2137 = vpack.c.bf16 %v2133, %v2133
    %v2138 = vpack.c.bf16 %v2134, %v2134
    %v2139 = vld [vmem:[#allocation7] sm:$0xff]
    %v2140 = vld [vmem:[#allocation7 + $0x8] sm:$0xff]
    %v2141 = vld [vmem:[#allocation7 + $0x10] sm:$0xff]
    %v2142 = vld [vmem:[#allocation7 + $0x18] sm:$0xff]
    %v2143 = vld [vmem:[#allocation7 + $0x20] sm:$0xff]
    %v2144 = vld [vmem:[#allocation7 + $0x28] sm:$0xff]
    %v2145 = vld [vmem:[#allocation7 + $0x30] sm:$0xff]
    %v2146 = vld [vmem:[#allocation7 + $0x38] sm:$0xff]
    %v2147 = vld [vmem:[#allocation7 + $0x40] sm:$0xff]
    %v2148 = vld [vmem:[#allocation7 + $0x48] sm:$0xff]
    %v2149 = vld [vmem:[#allocation7 + $0x50] sm:$0xff]
    %v2150 = vld [vmem:[#allocation7 + $0x58] sm:$0xff]
    %v2151 = vld [vmem:[#allocation7 + $0x60] sm:$0xff]
    %v2152 = vld [vmem:[#allocation7 + $0x68] sm:$0xff]
    %v2153 = vld [vmem:[#allocation7 + $0x70] sm:$0xff]
    %v2154 = vld [vmem:[#allocation7 + $0x78] sm:$0xff]
    %v2155 = vld [vmem:[#allocation7 + $0x80] sm:$0xff]
    %v2156 = vld [vmem:[#allocation7 + $0x88] sm:$0xff]
    %v2157 = vld [vmem:[#allocation7 + $0x90] sm:$0xff]
    %v2158 = vld [vmem:[#allocation7 + $0x98] sm:$0xff]
    %v2159 = vld [vmem:[#allocation7 + $0xa0] sm:$0xff]
    %v2160 = vld [vmem:[#allocation7 + $0xa8] sm:$0xff]
    %v2161 = vld [vmem:[#allocation7 + $0xb0] sm:$0xff]
    %v2162 = vld [vmem:[#allocation7 + $0xb8] sm:$0xff]
    %v2163 = vld [vmem:[#allocation7 + $0xc0] sm:$0xff]
    %v2164 = vld [vmem:[#allocation7 + $0xc8] sm:$0xff]
    %v2165 = vld [vmem:[#allocation7 + $0xd0] sm:$0xff]
    %v2166 = vld [vmem:[#allocation7 + $0xd8] sm:$0xff]
    %v2167 = vld [vmem:[#allocation7 + $0xe0] sm:$0xff]
    %v2168 = vld [vmem:[#allocation7 + $0xe8] sm:$0xff]
    %v2169 = vld [vmem:[#allocation7 + $0xf0] sm:$0xff]
    %v2170 = vld [vmem:[#allocation7 + $0xf8] sm:$0xff]
    %v2171 = vld [vmem:[#allocation7 + $0x100] sm:$0xff]
    %v2172 = vld [vmem:[#allocation7 + $0x108] sm:$0xff]
    %v2173 = vld [vmem:[#allocation7 + $0x110] sm:$0xff]
    %v2174 = vld [vmem:[#allocation7 + $0x118] sm:$0xff]
    %v2175 = vld [vmem:[#allocation7 + $0x120] sm:$0xff]
    %v2176 = vld [vmem:[#allocation7 + $0x128] sm:$0xff]
    %v2177 = vld [vmem:[#allocation7 + $0x130] sm:$0xff]
    %v2178 = vld [vmem:[#allocation7 + $0x138] sm:$0xff]
    %v2179 = vld [vmem:[#allocation7 + $0x140] sm:$0xff]
    %v2180 = vld [vmem:[#allocation7 + $0x148] sm:$0xff]
    %v2181 = vld [vmem:[#allocation7 + $0x150] sm:$0xff]
    %v2182 = vld [vmem:[#allocation7 + $0x158] sm:$0xff]
    %v2183 = vld [vmem:[#allocation7 + $0x160] sm:$0xff]
    %v2184 = vld [vmem:[#allocation7 + $0x168] sm:$0xff]
    %v2185 = vld [vmem:[#allocation7 + $0x170] sm:$0xff]
    %v2186 = vld [vmem:[#allocation7 + $0x178] sm:$0xff]
    %v2187 = vld [vmem:[#allocation7 + $0x180] sm:$0xff]
    %v2188 = vld [vmem:[#allocation7 + $0x188] sm:$0xff]
    %v2189 = vld [vmem:[#allocation7 + $0x190] sm:$0xff]
    %v2190 = vld [vmem:[#allocation7 + $0x198] sm:$0xff]
    %v2191 = vld [vmem:[#allocation7 + $0x1a0] sm:$0xff]
    %v2192 = vld [vmem:[#allocation7 + $0x1a8] sm:$0xff]
    %v2193 = vld [vmem:[#allocation7 + $0x1b0] sm:$0xff]
    %v2194 = vld [vmem:[#allocation7 + $0x1b8] sm:$0xff]
    %v2195 = vld [vmem:[#allocation7 + $0x1c0] sm:$0xff]
    %v2196 = vld [vmem:[#allocation7 + $0x1c8] sm:$0xff]
    %v2197 = vld [vmem:[#allocation7 + $0x1d0] sm:$0xff]
    %v2198 = vld [vmem:[#allocation7 + $0x1d8] sm:$0xff]
    %v2199 = vld [vmem:[#allocation7 + $0x1e0] sm:$0xff]
    %v2200 = vld [vmem:[#allocation7 + $0x1e8] sm:$0xff]
    %v2201 = vld [vmem:[#allocation7 + $0x1f0] sm:$0xff]
    %v2202 = vld [vmem:[#allocation7 + $0x1f8] sm:$0xff]
    %v2203 = vld [vmem:[%s33] sm:$0x3]
    %v2205 = vlaneseq
    %v2206 = vshrl.u32 %v2205, 7
    %v2207 = vsub.s32 0, %v2206
    %v2208 = vrot.slane %v2203, %v2207
    %v2209 = vlaneseq
    %v2210 = vshrl.u32 %v2209, 7
    %v2211 = vsub.s32 1, %v2210
    %v2212 = vrot.slane %v2203, %v2211
    %v2279 = vunpack.c.l.b16 %v2139
    %v2280 = vunpack.c.h.b16 %v2139
    %v2281 = vunpack.c.l.b16 %v2140
    %v2282 = vunpack.c.h.b16 %v2140
    %v2283 = vunpack.c.l.b16 %v2141
    %v2284 = vunpack.c.h.b16 %v2141
    %v2285 = vunpack.c.l.b16 %v2142
    %v2286 = vunpack.c.h.b16 %v2142
    %v2287 = vunpack.c.l.b16 %v2143
    %v2288 = vunpack.c.h.b16 %v2143
    %v2289 = vunpack.c.l.b16 %v2144
    %v2290 = vunpack.c.h.b16 %v2144
    %v2291 = vunpack.c.l.b16 %v2145
    %v2292 = vunpack.c.h.b16 %v2145
    %v2293 = vunpack.c.l.b16 %v2146
    %v2294 = vunpack.c.h.b16 %v2146
    %v2295 = vunpack.c.l.b16 %v2147
    %v2296 = vunpack.c.h.b16 %v2147
    %v2297 = vunpack.c.l.b16 %v2148
    %v2298 = vunpack.c.h.b16 %v2148
    %v2299 = vunpack.c.l.b16 %v2149
    %v2300 = vunpack.c.h.b16 %v2149
    %v2301 = vunpack.c.l.b16 %v2150
    %v2302 = vunpack.c.h.b16 %v2150
    %v2303 = vunpack.c.l.b16 %v2151
    %v2304 = vunpack.c.h.b16 %v2151
    %v2305 = vunpack.c.l.b16 %v2152
    %v2306 = vunpack.c.h.b16 %v2152
    %v2307 = vunpack.c.l.b16 %v2153
    %v2308 = vunpack.c.h.b16 %v2153
    %v2309 = vunpack.c.l.b16 %v2154
    %v2310 = vunpack.c.h.b16 %v2154
    %v2311 = vunpack.c.l.b16 %v2155
    %v2312 = vunpack.c.h.b16 %v2155
    %v2313 = vunpack.c.l.b16 %v2156
    %v2314 = vunpack.c.h.b16 %v2156
    %v2315 = vunpack.c.l.b16 %v2157
    %v2316 = vunpack.c.h.b16 %v2157
    %v2317 = vunpack.c.l.b16 %v2158
    %v2318 = vunpack.c.h.b16 %v2158
    %v2319 = vunpack.c.l.b16 %v2159
    %v2320 = vunpack.c.h.b16 %v2159
    %v2321 = vunpack.c.l.b16 %v2160
    %v2322 = vunpack.c.h.b16 %v2160
    %v2323 = vunpack.c.l.b16 %v2161
    %v2324 = vunpack.c.h.b16 %v2161
    %v2325 = vunpack.c.l.b16 %v2162
    %v2326 = vunpack.c.h.b16 %v2162
    %v2327 = vunpack.c.l.b16 %v2163
    %v2328 = vunpack.c.h.b16 %v2163
    %v2329 = vunpack.c.l.b16 %v2164
    %v2330 = vunpack.c.h.b16 %v2164
    %v2331 = vunpack.c.l.b16 %v2165
    %v2332 = vunpack.c.h.b16 %v2165
    %v2333 = vunpack.c.l.b16 %v2166
    %v2334 = vunpack.c.h.b16 %v2166
    %v2335 = vunpack.c.l.b16 %v2167
    %v2336 = vunpack.c.h.b16 %v2167
    %v2337 = vunpack.c.l.b16 %v2168
    %v2338 = vunpack.c.h.b16 %v2168
    %v2339 = vunpack.c.l.b16 %v2169
    %v2340 = vunpack.c.h.b16 %v2169
    %v2341 = vunpack.c.l.b16 %v2170
    %v2342 = vunpack.c.h.b16 %v2170
    %v2343 = vunpack.c.l.b16 %v2171
    %v2344 = vunpack.c.h.b16 %v2171
    %v2345 = vunpack.c.l.b16 %v2172
    %v2346 = vunpack.c.h.b16 %v2172
    %v2347 = vunpack.c.l.b16 %v2173
    %v2348 = vunpack.c.h.b16 %v2173
    %v2349 = vunpack.c.l.b16 %v2174
    %v2350 = vunpack.c.h.b16 %v2174
    %v2351 = vunpack.c.l.b16 %v2175
    %v2352 = vunpack.c.h.b16 %v2175
    %v2353 = vunpack.c.l.b16 %v2176
    %v2354 = vunpack.c.h.b16 %v2176
    %v2355 = vunpack.c.l.b16 %v2177
    %v2356 = vunpack.c.h.b16 %v2177
    %v2357 = vunpack.c.l.b16 %v2178
    %v2358 = vunpack.c.h.b16 %v2178
    %v2359 = vunpack.c.l.b16 %v2179
    %v2360 = vunpack.c.h.b16 %v2179
    %v2361 = vunpack.c.l.b16 %v2180
    %v2362 = vunpack.c.h.b16 %v2180
    %v2363 = vunpack.c.l.b16 %v2181
    %v2364 = vunpack.c.h.b16 %v2181
    %v2365 = vunpack.c.l.b16 %v2182
    %v2366 = vunpack.c.h.b16 %v2182
    %v2367 = vunpack.c.l.b16 %v2183
    %v2368 = vunpack.c.h.b16 %v2183
    %v2369 = vunpack.c.l.b16 %v2184
    %v2370 = vunpack.c.h.b16 %v2184
    %v2371 = vunpack.c.l.b16 %v2185
    %v2372 = vunpack.c.h.b16 %v2185
    %v2373 = vunpack.c.l.b16 %v2186
    %v2374 = vunpack.c.h.b16 %v2186
    %v2375 = vunpack.c.l.b16 %v2187
    %v2376 = vunpack.c.h.b16 %v2187
    %v2377 = vunpack.c.l.b16 %v2188
    %v2378 = vunpack.c.h.b16 %v2188
    %v2379 = vunpack.c.l.b16 %v2189
    %v2380 = vunpack.c.h.b16 %v2189
    %v2381 = vunpack.c.l.b16 %v2190
    %v2382 = vunpack.c.h.b16 %v2190
    %v2383 = vunpack.c.l.b16 %v2191
    %v2384 = vunpack.c.h.b16 %v2191
    %v2385 = vunpack.c.l.b16 %v2192
    %v2386 = vunpack.c.h.b16 %v2192
    %v2387 = vunpack.c.l.b16 %v2193
    %v2388 = vunpack.c.h.b16 %v2193
    %v2389 = vunpack.c.l.b16 %v2194
    %v2390 = vunpack.c.h.b16 %v2194
    %v2391 = vunpack.c.l.b16 %v2195
    %v2392 = vunpack.c.h.b16 %v2195
    %v2393 = vunpack.c.l.b16 %v2196
    %v2394 = vunpack.c.h.b16 %v2196
    %v2395 = vunpack.c.l.b16 %v2197
    %v2396 = vunpack.c.h.b16 %v2197
    %v2397 = vunpack.c.l.b16 %v2198
    %v2398 = vunpack.c.h.b16 %v2198
    %v2399 = vunpack.c.l.b16 %v2199
    %v2400 = vunpack.c.h.b16 %v2199
    %v2401 = vunpack.c.l.b16 %v2200
    %v2402 = vunpack.c.h.b16 %v2200
    %v2403 = vunpack.c.l.b16 %v2201
    %v2404 = vunpack.c.h.b16 %v2201
    %v2405 = vunpack.c.l.b16 %v2202
    %v2406 = vunpack.c.h.b16 %v2202
    %v2407 = vpack.c.b16 %v2281, %v2279
    %v2408 = vpack.c.b16 %v2282, %v2280
    %v2409 = vpack.c.b16 %v2285, %v2283
    %v2410 = vpack.c.b16 %v2286, %v2284
    %v2411 = vpack.c.b16 %v2289, %v2287
    %v2412 = vpack.c.b16 %v2290, %v2288
    %v2413 = vpack.c.b16 %v2293, %v2291
    %v2414 = vpack.c.b16 %v2294, %v2292
    %v2415 = vpack.c.b16 %v2297, %v2295
    %v2416 = vpack.c.b16 %v2298, %v2296
    %v2417 = vpack.c.b16 %v2301, %v2299
    %v2418 = vpack.c.b16 %v2302, %v2300
    %v2419 = vpack.c.b16 %v2305, %v2303
    %v2420 = vpack.c.b16 %v2306, %v2304
    %v2421 = vpack.c.b16 %v2309, %v2307
    %v2422 = vpack.c.b16 %v2310, %v2308
    %v2423 = vpack.c.b16 %v2313, %v2311
    %v2424 = vpack.c.b16 %v2314, %v2312
    %v2425 = vpack.c.b16 %v2317, %v2315
    %v2426 = vpack.c.b16 %v2318, %v2316
    %v2427 = vpack.c.b16 %v2321, %v2319
    %v2428 = vpack.c.b16 %v2322, %v2320
    %v2429 = vpack.c.b16 %v2325, %v2323
    %v2430 = vpack.c.b16 %v2326, %v2324
    %v2431 = vpack.c.b16 %v2329, %v2327
    %v2432 = vpack.c.b16 %v2330, %v2328
    %v2433 = vpack.c.b16 %v2333, %v2331
    %v2434 = vpack.c.b16 %v2334, %v2332
    %v2435 = vpack.c.b16 %v2337, %v2335
    %v2436 = vpack.c.b16 %v2338, %v2336
    %v2437 = vpack.c.b16 %v2341, %v2339
    %v2438 = vpack.c.b16 %v2342, %v2340
    %v2439 = vpack.c.b16 %v2345, %v2343
    %v2440 = vpack.c.b16 %v2346, %v2344
    %v2441 = vpack.c.b16 %v2349, %v2347
    %v2442 = vpack.c.b16 %v2350, %v2348
    %v2443 = vpack.c.b16 %v2353, %v2351
    %v2444 = vpack.c.b16 %v2354, %v2352
    %v2445 = vpack.c.b16 %v2357, %v2355
    %v2446 = vpack.c.b16 %v2358, %v2356
    %v2447 = vpack.c.b16 %v2361, %v2359
    %v2448 = vpack.c.b16 %v2362, %v2360
    %v2449 = vpack.c.b16 %v2365, %v2363
    %v2450 = vpack.c.b16 %v2366, %v2364
    %v2451 = vpack.c.b16 %v2369, %v2367
    %v2452 = vpack.c.b16 %v2370, %v2368
    %v2453 = vpack.c.b16 %v2373, %v2371
    %v2454 = vpack.c.b16 %v2374, %v2372
    %v2455 = vpack.c.b16 %v2377, %v2375
    %v2456 = vpack.c.b16 %v2378, %v2376
    %v2457 = vpack.c.b16 %v2381, %v2379
    %v2458 = vpack.c.b16 %v2382, %v2380
    %v2459 = vpack.c.b16 %v2385, %v2383
    %v2460 = vpack.c.b16 %v2386, %v2384
    %v2461 = vpack.c.b16 %v2389, %v2387
    %v2462 = vpack.c.b16 %v2390, %v2388
    %v2463 = vpack.c.b16 %v2393, %v2391
    %v2464 = vpack.c.b16 %v2394, %v2392
    %v2465 = vpack.c.b16 %v2397, %v2395
    %v2466 = vpack.c.b16 %v2398, %v2396
    %v2467 = vpack.c.b16 %v2401, %v2399
    %v2468 = vpack.c.b16 %v2402, %v2400
    %v2469 = vpack.c.b16 %v2405, %v2403
    %v2470 = vpack.c.b16 %v2406, %v2404
    %2535 = vmatprep.subr.bf16.mxu0 %v2408
    %2536 = vmatpush1.bf16.msra.mxu0 %v2407
    %2537 = vmatprep.subr.bf16.mxu0 %v2410
    %2538 = vmatpush1.bf16.msra.mxu0 %v2409
    %2539 = vmatprep.subr.bf16.mxu0 %v2412
    %2540 = vmatpush1.bf16.msra.mxu0 %v2411
    %2541 = vmatprep.subr.bf16.mxu0 %v2414
    %2542 = vmatpush1.bf16.msra.mxu0 %v2413
    %2543 = vmatprep.subr.bf16.mxu0 %v2416
    %2544 = vmatpush1.bf16.msra.mxu0 %v2415
    %2545 = vmatprep.subr.bf16.mxu0 %v2418
    %2546 = vmatpush1.bf16.msra.mxu0 %v2417
    %2547 = vmatprep.subr.bf16.mxu0 %v2420
    %2548 = vmatpush1.bf16.msra.mxu0 %v2419
    %2549 = vmatprep.subr.bf16.mxu0 %v2422
    %2550 = vmatpush1.bf16.msra.mxu0 %v2421
    %2551 = vmatprep.subr.bf16.mxu0 %v2424
    %2552 = vmatpush1.bf16.msra.mxu0 %v2423
    %2553 = vmatprep.subr.bf16.mxu0 %v2426
    %2554 = vmatpush1.bf16.msra.mxu0 %v2425
    %2555 = vmatprep.subr.bf16.mxu0 %v2428
    %2556 = vmatpush1.bf16.msra.mxu0 %v2427
    %2557 = vmatprep.subr.bf16.mxu0 %v2430
    %2558 = vmatpush1.bf16.msra.mxu0 %v2429
    %2559 = vmatprep.subr.bf16.mxu0 %v2432
    %2560 = vmatpush1.bf16.msra.mxu0 %v2431
    %2561 = vmatprep.subr.bf16.mxu0 %v2434
    %2562 = vmatpush1.bf16.msra.mxu0 %v2433
    %2563 = vmatprep.subr.bf16.mxu0 %v2436
    %2564 = vmatpush1.bf16.msra.mxu0 %v2435
    %2565 = vmatprep.subr.bf16.mxu0 %v2438
    %2566 = vmatpush1.bf16.msra.mxu0 %v2437
    %2567 = vmatprep.mubr.bf16.mxu0 %v2136
    %2568 = vmatmul.mubr.bf16.gmra.mrb[0].mxu0 %v2135
    %v2569 = vpop.f32.mrb[0].mxu0
    %v2570 = vadd.f32 %v2208, %v2569
    %v2571 = vpop.f32.mrb[0].mxu0
    %v2572 = vadd.f32 %v2212, %v2571
    %v2573 = vpop.f32.mrb[0].mxu0
    %v2574 = vpop.f32.mrb[0].mxu0
    %2575 = vdwg.mxu0
    %2576 = vmatprep.subr.bf16.mxu0 %v2440
    %2577 = vmatpush1.bf16.msra.mxu0 %v2439
    %2578 = vmatprep.subr.bf16.mxu0 %v2442
    %2579 = vmatpush1.bf16.msra.mxu0 %v2441
    %2580 = vmatprep.subr.bf16.mxu0 %v2444
    %2581 = vmatpush1.bf16.msra.mxu0 %v2443
    %2582 = vmatprep.subr.bf16.mxu0 %v2446
    %2583 = vmatpush1.bf16.msra.mxu0 %v2445
    %2584 = vmatprep.subr.bf16.mxu0 %v2448
    %2585 = vmatpush1.bf16.msra.mxu0 %v2447
    %2586 = vmatprep.subr.bf16.mxu0 %v2450
    %2587 = vmatpush1.bf16.msra.mxu0 %v2449
    %2588 = vmatprep.subr.bf16.mxu0 %v2452
    %2589 = vmatpush1.bf16.msra.mxu0 %v2451
    %2590 = vmatprep.subr.bf16.mxu0 %v2454
    %2591 = vmatpush1.bf16.msra.mxu0 %v2453
    %2592 = vmatprep.subr.bf16.mxu0 %v2456
    %2593 = vmatpush1.bf16.msra.mxu0 %v2455
    %2594 = vmatprep.subr.bf16.mxu0 %v2458
    %2595 = vmatpush1.bf16.msra.mxu0 %v2457
    %2596 = vmatprep.subr.bf16.mxu0 %v2460
    %2597 = vmatpush1.bf16.msra.mxu0 %v2459
    %2598 = vmatprep.subr.bf16.mxu0 %v2462
    %2599 = vmatpush1.bf16.msra.mxu0 %v2461
    %2600 = vmatprep.subr.bf16.mxu0 %v2464
    %2601 = vmatpush1.bf16.msra.mxu0 %v2463
    %2602 = vmatprep.subr.bf16.mxu0 %v2466
    %2603 = vmatpush1.bf16.msra.mxu0 %v2465
    %2604 = vmatprep.subr.bf16.mxu0 %v2468
    %2605 = vmatpush1.bf16.msra.mxu0 %v2467
    %2606 = vmatprep.subr.bf16.mxu0 %v2470
    %2607 = vmatpush1.bf16.msra.mxu0 %v2469
    %2608 = vmatprep.mubr.bf16.mxu0 %v2138
    %2609 = vmatmul.mubr.bf16.gmra.mrb[0].mxu0 %v2137
    %v2610 = vpop.f32.mrb[0].mxu0
    %v2611 = vadd.f32 %v2570, %v2610
    %v2612 = vpop.f32.mrb[0].mxu0
    %v2613 = vadd.f32 %v2572, %v2612
    %v2614 = vpop.f32.mrb[0].mxu0
    %v2615 = vpop.f32.mrb[0].mxu0
    %2616 = vdwg.mxu0
    %v2617 = vmax.f32 %v2611, 0.0
    %v2618 = vmax.f32 %v2613, 0.0
    %v2619 = vpack.c.bf16 %v2617, %v2617
    %v2620 = vpack.c.bf16 %v2618, %v2618
    %v2621 = vld [vmem:[%s7] sm:$0xf]
    %v2622 = vld [vmem:[%s7 + $0x4] sm:$0xf]
    %v2623 = vld [vmem:[%s7 + $0x8] sm:$0xf]
    %v2624 = vld [vmem:[%s7 + $0xc] sm:$0xf]
    %v2625 = vld [vmem:[%s7 + $0x10] sm:$0xf]
    %v2626 = vld [vmem:[%s7 + $0x14] sm:$0xf]
    %v2627 = vld [vmem:[%s7 + $0x18] sm:$0xf]
    %v2628 = vld [vmem:[%s7 + $0x1c] sm:$0xf]
    %v2629 = vld [vmem:[%s7 + $0x20] sm:$0xf]
    %v2630 = vld [vmem:[%s7 + $0x24] sm:$0xf]
    %v2631 = vld [vmem:[%s7 + $0x28] sm:$0xf]
    %v2632 = vld [vmem:[%s7 + $0x2c] sm:$0xf]
    %v2633 = vld [vmem:[%s7 + $0x30] sm:$0xf]
    %v2634 = vld [vmem:[%s7 + $0x34] sm:$0xf]
    %v2635 = vld [vmem:[%s7 + $0x38] sm:$0xf]
    %v2636 = vld [vmem:[%s7 + $0x3c] sm:$0xf]
    %v2637 = vld [vmem:[%s7 + $0x40] sm:$0xf]
    %v2638 = vld [vmem:[%s7 + $0x44] sm:$0xf]
    %v2639 = vld [vmem:[%s7 + $0x48] sm:$0xf]
    %v2640 = vld [vmem:[%s7 + $0x4c] sm:$0xf]
    %v2641 = vld [vmem:[%s7 + $0x50] sm:$0xf]
    %v2642 = vld [vmem:[%s7 + $0x54] sm:$0xf]
    %v2643 = vld [vmem:[%s7 + $0x58] sm:$0xf]
    %v2644 = vld [vmem:[%s7 + $0x5c] sm:$0xf]
    %v2645 = vld [vmem:[%s7 + $0x60] sm:$0xf]
    %v2646 = vld [vmem:[%s7 + $0x64] sm:$0xf]
    %v2647 = vld [vmem:[%s7 + $0x68] sm:$0xf]
    %v2648 = vld [vmem:[%s7 + $0x6c] sm:$0xf]
    %v2649 = vld [vmem:[%s7 + $0x70] sm:$0xf]
    %v2650 = vld [vmem:[%s7 + $0x74] sm:$0xf]
    %v2651 = vld [vmem:[%s7 + $0x78] sm:$0xf]
    %v2652 = vld [vmem:[%s7 + $0x7c] sm:$0xf]
    %v2653 = vld [vmem:[%s35] sm:$0x1]
    %v2655 = vlaneseq
    %v2656 = vshrl.u32 %v2655, 7
    %v2657 = vsub.s32 0, %v2656
    %v2658 = vrot.slane %v2653, %v2657
    %v2692 = vunpack.c.l.b16 %v2621
    %v2693 = vunpack.c.l.b16 %v2622
    %v2694 = vunpack.c.l.b16 %v2623
    %v2695 = vunpack.c.l.b16 %v2624
    %v2696 = vunpack.c.l.b16 %v2625
    %v2697 = vunpack.c.l.b16 %v2626
    %v2698 = vunpack.c.l.b16 %v2627
    %v2699 = vunpack.c.l.b16 %v2628
    %v2700 = vunpack.c.l.b16 %v2629
    %v2701 = vunpack.c.l.b16 %v2630
    %v2702 = vunpack.c.l.b16 %v2631
    %v2703 = vunpack.c.l.b16 %v2632
    %v2704 = vunpack.c.l.b16 %v2633
    %v2705 = vunpack.c.l.b16 %v2634
    %v2706 = vunpack.c.l.b16 %v2635
    %v2707 = vunpack.c.l.b16 %v2636
    %v2708 = vunpack.c.l.b16 %v2637
    %v2709 = vunpack.c.l.b16 %v2638
    %v2710 = vunpack.c.l.b16 %v2639
    %v2711 = vunpack.c.l.b16 %v2640
    %v2712 = vunpack.c.l.b16 %v2641
    %v2713 = vunpack.c.l.b16 %v2642
    %v2714 = vunpack.c.l.b16 %v2643
    %v2715 = vunpack.c.l.b16 %v2644
    %v2716 = vunpack.c.l.b16 %v2645
    %v2717 = vunpack.c.l.b16 %v2646
    %v2718 = vunpack.c.l.b16 %v2647
    %v2719 = vunpack.c.l.b16 %v2648
    %v2720 = vunpack.c.l.b16 %v2649
    %v2721 = vunpack.c.l.b16 %v2650
    %v2722 = vunpack.c.l.b16 %v2651
    %v2723 = vunpack.c.l.b16 %v2652
    %v2724 = vpack.c.b16 %v2693, %v2692
    %v2725 = vpack.c.b16 %v2695, %v2694
    %v2726 = vpack.c.b16 %v2697, %v2696
    %v2727 = vpack.c.b16 %v2699, %v2698
    %v2728 = vpack.c.b16 %v2701, %v2700
    %v2729 = vpack.c.b16 %v2703, %v2702
    %v2730 = vpack.c.b16 %v2705, %v2704
    %v2731 = vpack.c.b16 %v2707, %v2706
    %v2732 = vpack.c.b16 %v2709, %v2708
    %v2733 = vpack.c.b16 %v2711, %v2710
    %v2734 = vpack.c.b16 %v2713, %v2712
    %v2735 = vpack.c.b16 %v2715, %v2714
    %v2736 = vpack.c.b16 %v2717, %v2716
    %v2737 = vpack.c.b16 %v2719, %v2718
    %v2738 = vpack.c.b16 %v2721, %v2720
    %v2739 = vpack.c.b16 %v2723, %v2722
    %2756 = vmatprep.subr.bf16.mxu0 0
    %2757 = vmatpush1.bf16.msra.mxu0 %v2724
    %2758 = vmatprep.subr.bf16.mxu0 0
    %2759 = vmatpush1.bf16.msra.mxu0 %v2725
    %2760 = vmatprep.subr.bf16.mxu0 0
    %2761 = vmatpush1.bf16.msra.mxu0 %v2726
    %2762 = vmatprep.subr.bf16.mxu0 0
    %2763 = vmatpush1.bf16.msra.mxu0 %v2727
    %2764 = vmatprep.subr.bf16.mxu0 0
    %2765 = vmatpush1.bf16.msra.mxu0 %v2728
    %2766 = vmatprep.subr.bf16.mxu0 0
    %2767 = vmatpush1.bf16.msra.mxu0 %v2729
    %2768 = vmatprep.subr.bf16.mxu0 0
    %2769 = vmatpush1.bf16.msra.mxu0 %v2730
    %2770 = vmatprep.subr.bf16.mxu0 0
    %2771 = vmatpush1.bf16.msra.mxu0 %v2731
    %2772 = vmatprep.subr.bf16.mxu0 0
    %2773 = vmatpush1.bf16.msra.mxu0 %v2732
    %2774 = vmatprep.subr.bf16.mxu0 0
    %2775 = vmatpush1.bf16.msra.mxu0 %v2733
    %2776 = vmatprep.subr.bf16.mxu0 0
    %2777 = vmatpush1.bf16.msra.mxu0 %v2734
    %2778 = vmatprep.subr.bf16.mxu0 0
    %2779 = vmatpush1.bf16.msra.mxu0 %v2735
    %2780 = vmatprep.subr.bf16.mxu0 0
    %2781 = vmatpush1.bf16.msra.mxu0 %v2736
    %2782 = vmatprep.subr.bf16.mxu0 0
    %2783 = vmatpush1.bf16.msra.mxu0 %v2737
    %2784 = vmatprep.subr.bf16.mxu0 0
    %2785 = vmatpush1.bf16.msra.mxu0 %v2738
    %2786 = vmatprep.subr.bf16.mxu0 0
    %2787 = vmatpush1.bf16.msra.mxu0 %v2739
    %2788 = vmatprep.mubr.bf16.mxu0 %v2620
    %2789 = vmatmul.mubr.bf16.gmra.mrb[0].mxu0 %v2619
    %v2790 = vpop.f32.mrb[0].mxu0
    %v2791 = vadd.f32 %v2658, %v2790
    %v2792 = vpop.f32.mrb[0].mxu0
    %v2793 = vpop.f32.mrb[0].mxu0
    %v2794 = vpop.f32.mrb[0].mxu0
    %2795 = vdwg.mxu0
    %v2796 = vmax.f32 %v2791, 0.0
    %v2797 = vpack.c.bf16 %v2796, %v2796
    %v2798 = vld [vmem:[%s9] sm:$0xf]
    %v2799 = vld [vmem:[%s9 + $0x4] sm:$0xf]
    %v2800 = vld [vmem:[%s9 + $0x8] sm:$0xf]
    %v2801 = vld [vmem:[%s9 + $0xc] sm:$0xf]
    %v2802 = vld [vmem:[%s9 + $0x10] sm:$0xf]
    %v2803 = vld [vmem:[%s9 + $0x14] sm:$0xf]
    %v2804 = vld [vmem:[%s9 + $0x18] sm:$0xf]
    %v2805 = vld [vmem:[%s9 + $0x1c] sm:$0xf]
    %v2806 = vld [vmem:[%s9 + $0x20] sm:$0xf]
    %v2807 = vld [vmem:[%s9 + $0x24] sm:$0xf]
    %v2808 = vld [vmem:[%s9 + $0x28] sm:$0xf]
    %v2809 = vld [vmem:[%s9 + $0x2c] sm:$0xf]
    %v2810 = vld [vmem:[%s9 + $0x30] sm:$0xf]
    %v2811 = vld [vmem:[%s9 + $0x34] sm:$0xf]
    %v2812 = vld [vmem:[%s9 + $0x38] sm:$0xf]
    %v2813 = vld [vmem:[%s9 + $0x3c] sm:$0xf]
    %v2814 = vld [vmem:[%s37] sm:$0x1]
    %v2816 = vlaneseq
    %v2817 = vshrl.u32 %v2816, 7
    %v2818 = vsub.s32 0, %v2817
    %v2819 = vrot.slane %v2814, %v2818
    %v2837 = vunpack.c.l.b16 %v2798
    %v2838 = vunpack.c.l.b16 %v2799
    %v2839 = vunpack.c.l.b16 %v2800
    %v2840 = vunpack.c.l.b16 %v2801
    %v2841 = vunpack.c.l.b16 %v2802
    %v2842 = vunpack.c.l.b16 %v2803
    %v2843 = vunpack.c.l.b16 %v2804
    %v2844 = vunpack.c.l.b16 %v2805
    %v2845 = vunpack.c.l.b16 %v2806
    %v2846 = vunpack.c.l.b16 %v2807
    %v2847 = vunpack.c.l.b16 %v2808
    %v2848 = vunpack.c.l.b16 %v2809
    %v2849 = vunpack.c.l.b16 %v2810
    %v2850 = vunpack.c.l.b16 %v2811
    %v2851 = vunpack.c.l.b16 %v2812
    %v2852 = vunpack.c.l.b16 %v2813
    %v2853 = vpack.c.b16 %v2838, %v2837
    %v2854 = vpack.c.b16 %v2840, %v2839
    %v2855 = vpack.c.b16 %v2842, %v2841
    %v2856 = vpack.c.b16 %v2844, %v2843
    %v2857 = vpack.c.b16 %v2846, %v2845
    %v2858 = vpack.c.b16 %v2848, %v2847
    %v2859 = vpack.c.b16 %v2850, %v2849
    %v2860 = vpack.c.b16 %v2852, %v2851
    %2869 = vmatprep.subr.bf16.mxu0 0
    %2870 = vmatpush1.bf16.msra.mxu0 %v2853
    %2871 = vmatprep.subr.bf16.mxu0 0
    %2872 = vmatpush1.bf16.msra.mxu0 %v2854
    %2873 = vmatprep.subr.bf16.mxu0 0
    %2874 = vmatpush1.bf16.msra.mxu0 %v2855
    %2875 = vmatprep.subr.bf16.mxu0 0
    %2876 = vmatpush1.bf16.msra.mxu0 %v2856
    %2877 = vmatprep.subr.bf16.mxu0 0
    %2878 = vmatpush1.bf16.msra.mxu0 %v2857
    %2879 = vmatprep.subr.bf16.mxu0 0
    %2880 = vmatpush1.bf16.msra.mxu0 %v2858
    %2881 = vmatprep.subr.bf16.mxu0 0
    %2882 = vmatpush1.bf16.msra.mxu0 %v2859
    %2883 = vmatprep.subr.bf16.mxu0 0
    %2884 = vmatpush1.bf16.msra.mxu0 %v2860
    %2885 = vmatprep.subr.bf16.mxu0 0
    %2886 = vmatpush1.bf16.msra.mxu0 0
    %2887 = vmatprep.subr.bf16.mxu0 0
    %2888 = vmatpush1.bf16.msra.mxu0 0
    %2889 = vmatprep.subr.bf16.mxu0 0
    %2890 = vmatpush1.bf16.msra.mxu0 0
    %2891 = vmatprep.subr.bf16.mxu0 0
    %2892 = vmatpush1.bf16.msra.mxu0 0
    %2893 = vmatprep.subr.bf16.mxu0 0
    %2894 = vmatpush1.bf16.msra.mxu0 0
    %2895 = vmatprep.subr.bf16.mxu0 0
    %2896 = vmatpush1.bf16.msra.mxu0 0
    %2897 = vmatprep.subr.bf16.mxu0 0
    %2898 = vmatpush1.bf16.msra.mxu0 0
    %2899 = vmatprep.subr.bf16.mxu0 0
    %2900 = vmatpush1.bf16.msra.mxu0 0
    %2901 = vmatprep.mubr.bf16.mxu0 0
    %2902 = vmatmul.mubr.bf16.gmra.mrb[0].mxu0 %v2797
    %v2903 = vpop.f32.mrb[0].mxu0
    %v2904 = vadd.f32 %v2819, %v2903
    %v2905 = vpop.f32.mrb[0].mxu0
    %v2906 = vpop.f32.mrb[0].mxu0
    %v2907 = vpop.f32.mrb[0].mxu0
    %2908 = vdwg.mxu0
    %v2909 = vmax.f32 %v2904, 0.0
    %v2910 = vpack.c.bf16 %v2909, %v2909
    %v2911 = vld [vmem:[%s11] sm:$0xf]
    %v2912 = vld [vmem:[%s11 + $0x4] sm:$0xf]
    %v2913 = vld [vmem:[%s11 + $0x8] sm:$0xf]
    %v2914 = vld [vmem:[%s11 + $0xc] sm:$0xf]
    %v2915 = vld [vmem:[%s11 + $0x10] sm:$0xf]
    %v2916 = vld [vmem:[%s11 + $0x14] sm:$0xf]
    %v2917 = vld [vmem:[%s11 + $0x18] sm:$0xf]
    %v2918 = vld [vmem:[%s11 + $0x1c] sm:$0xf]
    %v2919 = vld [vmem:[%s39] sm:$0x1]
    %v2921 = vlaneseq
    %v2922 = vshrl.u32 %v2921, 7
    %v2923 = vsub.s32 0, %v2922
    %v2924 = vrot.slane %v2919, %v2923
    %v2934 = vunpack.c.l.b16 %v2911
    %v2935 = vunpack.c.l.b16 %v2912
    %v2936 = vunpack.c.l.b16 %v2913
    %v2937 = vunpack.c.l.b16 %v2914
    %v2938 = vunpack.c.l.b16 %v2915
    %v2939 = vunpack.c.l.b16 %v2916
    %v2940 = vunpack.c.l.b16 %v2917
    %v2941 = vunpack.c.l.b16 %v2918
    %v2942 = vpack.c.b16 %v2935, %v2934
    %v2943 = vpack.c.b16 %v2937, %v2936
    %v2944 = vpack.c.b16 %v2939, %v2938
    %v2945 = vpack.c.b16 %v2941, %v2940
    %vm2950 = vcmask 523264
    %v2952 = vsel %vm2950, %v2910, 0
    %2954 = vmatprep.subr.bf16.mxu0 0
    %2955 = vmatpush1.bf16.msra.mxu0 %v2942
    %2956 = vmatprep.subr.bf16.mxu0 0
    %2957 = vmatpush1.bf16.msra.mxu0 %v2943
    %2958 = vmatprep.subr.bf16.mxu0 0
    %2959 = vmatpush1.bf16.msra.mxu0 %v2944
    %2960 = vmatprep.subr.bf16.mxu0 0
    %2961 = vmatpush1.bf16.msra.mxu0 %v2945
    %2962 = vmatprep.subr.bf16.mxu0 0
    %2963 = vmatpush1.bf16.msra.mxu0 0
    %2964 = vmatprep.subr.bf16.mxu0 0
    %2965 = vmatpush1.bf16.msra.mxu0 0
    %2966 = vmatprep.subr.bf16.mxu0 0
    %2967 = vmatpush1.bf16.msra.mxu0 0
    %2968 = vmatprep.subr.bf16.mxu0 0
    %2969 = vmatpush1.bf16.msra.mxu0 0
    %2970 = vmatprep.subr.bf16.mxu0 0
    %2971 = vmatpush1.bf16.msra.mxu0 0
    %2972 = vmatprep.subr.bf16.mxu0 0
    %2973 = vmatpush1.bf16.msra.mxu0 0
    %2974 = vmatprep.subr.bf16.mxu0 0
    %2975 = vmatpush1.bf16.msra.mxu0 0
    %2976 = vmatprep.subr.bf16.mxu0 0
    %2977 = vmatpush1.bf16.msra.mxu0 0
    %2978 = vmatprep.subr.bf16.mxu0 0
    %2979 = vmatpush1.bf16.msra.mxu0 0
    %2980 = vmatprep.subr.bf16.mxu0 0
    %2981 = vmatpush1.bf16.msra.mxu0 0
    %2982 = vmatprep.subr.bf16.mxu0 0
    %2983 = vmatpush1.bf16.msra.mxu0 0
    %2984 = vmatprep.subr.bf16.mxu0 0
    %2985 = vmatpush1.bf16.msra.mxu0 0
    %2986 = vmatprep.mubr.bf16.mxu0 0
    %2987 = vmatmul.mubr.bf16.gmra.mrb[0].mxu0 %v2952
    %v2988 = vpop.f32.mrb[0].mxu0
    %v2989 = vadd.f32 %v2924, %v2988
    %v2990 = vpop.f32.mrb[0].mxu0
    %v2991 = vpop.f32.mrb[0].mxu0
    %v2992 = vpop.f32.mrb[0].mxu0
    %2993 = vdwg.mxu0
    %v2994 = vmax.f32 %v2989, 0.0
    %v2995 = vpack.c.bf16 %v2994, %v2994
    %v2996 = vld [vmem:[%s13] sm:$0xf]
    %v2997 = vld [vmem:[%s13 + $0x4] sm:$0xf]
    %v2998 = vld [vmem:[%s13 + $0x8] sm:$0xf]
    %v2999 = vld [vmem:[%s13 + $0xc] sm:$0xf]
    %v3000 = vld [vmem:[%s41] sm:$0x1]
    %v3002 = vlaneseq
    %v3003 = vshrl.u32 %v3002, 7
    %v3004 = vsub.s32 0, %v3003
    %v3005 = vrot.slane %v3000, %v3004
    %v3011 = vunpack.c.l.b16 %v2996
    %v3012 = vunpack.c.l.b16 %v2997
    %v3013 = vunpack.c.l.b16 %v2998
    %v3014 = vunpack.c.l.b16 %v2999
    %v3015 = vpack.c.b16 %v3012, %v3011
    %v3016 = vpack.c.b16 %v3014, %v3013
    %vm3019 = vcmask 261120
    %v3021 = vsel %vm3019, %v2995, 0
    %3023 = vmatprep.subr.bf16.mxu0 0
    %3024 = vmatpush1.bf16.msra.mxu0 %v3015
    %3025 = vmatprep.subr.bf16.mxu0 0
    %3026 = vmatpush1.bf16.msra.mxu0 %v3016
    %3027 = vmatprep.subr.bf16.mxu0 0
    %3028 = vmatpush1.bf16.msra.mxu0 0
    %3029 = vmatprep.subr.bf16.mxu0 0
    %3030 = vmatpush1.bf16.msra.mxu0 0
    %3031 = vmatprep.subr.bf16.mxu0 0
    %3032 = vmatpush1.bf16.msra.mxu0 0
    %3033 = vmatprep.subr.bf16.mxu0 0
    %3034 = vmatpush1.bf16.msra.mxu0 0
    %3035 = vmatprep.subr.bf16.mxu0 0
    %3036 = vmatpush1.bf16.msra.mxu0 0
    %3037 = vmatprep.subr.bf16.mxu0 0
    %3038 = vmatpush1.bf16.msra.mxu0 0
    %3039 = vmatprep.subr.bf16.mxu0 0
    %3040 = vmatpush1.bf16.msra.mxu0 0
    %3041 = vmatprep.subr.bf16.mxu0 0
    %3042 = vmatpush1.bf16.msra.mxu0 0
    %3043 = vmatprep.subr.bf16.mxu0 0
    %3044 = vmatpush1.bf16.msra.mxu0 0
    %3045 = vmatprep.subr.bf16.mxu0 0
    %3046 = vmatpush1.bf16.msra.mxu0 0
    %3047 = vmatprep.subr.bf16.mxu0 0
    %3048 = vmatpush1.bf16.msra.mxu0 0
    %3049 = vmatprep.subr.bf16.mxu0 0
    %3050 = vmatpush1.bf16.msra.mxu0 0
    %3051 = vmatprep.subr.bf16.mxu0 0
    %3052 = vmatpush1.bf16.msra.mxu0 0
    %3053 = vmatprep.subr.bf16.mxu0 0
    %3054 = vmatpush1.bf16.msra.mxu0 0
    %3055 = vmatprep.mubr.bf16.mxu0 0
    %3056 = vmatmul.mubr.bf16.gmra.mrb[0].mxu0 %v3021
    %v3057 = vpop.f32.mrb[0].mxu0
    %v3058 = vadd.f32 %v3005, %v3057
    %v3059 = vpop.f32.mrb[0].mxu0
    %v3060 = vpop.f32.mrb[0].mxu0
    %v3061 = vpop.f32.mrb[0].mxu0
    %3062 = vdwg.mxu0
    %v3063 = vmax.f32 %v3058, 0.0
    %v3064 = vpack.c.bf16 %v3063, %v3063
    %v3065 = vld [vmem:[%s15] sm:$0xf]
    %v3066 = vld [vmem:[%s15 + $0x4] sm:$0xf]
    %v3067 = vld [vmem:[%s43] sm:$0x1]
    %v3069 = vlaneseq
    %v3070 = vshrl.u32 %v3069, 7
    %v3071 = vsub.s32 0, %v3070
    %v3072 = vrot.slane %v3067, %v3071
    %v3076 = vunpack.c.l.b16 %v3065
    %v3077 = vunpack.c.l.b16 %v3066
    %v3078 = vpack.c.b16 %v3077, %v3076
    %vm3080 = vcmask 130048
    %v3082 = vsel %vm3080, %v3064, 0
    %3084 = vmatprep.subr.bf16.mxu0 0
    %3085 = vmatpush1.bf16.msra.mxu0 %v3078
    %3086 = vmatprep.subr.bf16.mxu0 0
    %3087 = vmatpush1.bf16.msra.mxu0 0
    %3088 = vmatprep.subr.bf16.mxu0 0
    %3089 = vmatpush1.bf16.msra.mxu0 0
    %3090 = vmatprep.subr.bf16.mxu0 0
    %3091 = vmatpush1.bf16.msra.mxu0 0
    %3092 = vmatprep.subr.bf16.mxu0 0
    %3093 = vmatpush1.bf16.msra.mxu0 0
    %3094 = vmatprep.subr.bf16.mxu0 0
    %3095 = vmatpush1.bf16.msra.mxu0 0
    %3096 = vmatprep.subr.bf16.mxu0 0
    %3097 = vmatpush1.bf16.msra.mxu0 0
    %3098 = vmatprep.subr.bf16.mxu0 0
    %3099 = vmatpush1.bf16.msra.mxu0 0
    %3100 = vmatprep.subr.bf16.mxu0 0
    %3101 = vmatpush1.bf16.msra.mxu0 0
    %3102 = vmatprep.subr.bf16.mxu0 0
    %3103 = vmatpush1.bf16.msra.mxu0 0
    %3104 = vmatprep.subr.bf16.mxu0 0
    %3105 = vmatpush1.bf16.msra.mxu0 0
    %3106 = vmatprep.subr.bf16.mxu0 0
    %3107 = vmatpush1.bf16.msra.mxu0 0
    %3108 = vmatprep.subr.bf16.mxu0 0
    %3109 = vmatpush1.bf16.msra.mxu0 0
    %3110 = vmatprep.subr.bf16.mxu0 0
    %3111 = vmatpush1.bf16.msra.mxu0 0
    %3112 = vmatprep.subr.bf16.mxu0 0
    %3113 = vmatpush1.bf16.msra.mxu0 0
    %3114 = vmatprep.subr.bf16.mxu0 0
    %3115 = vmatpush1.bf16.msra.mxu0 0
    %3116 = vmatprep.mubr.bf16.mxu0 0
    %3117 = vmatmul.mubr.bf16.gmra.mrb[0].mxu0 %v3082
    %v3118 = vpop.f32.mrb[0].mxu0
    %v3119 = vadd.f32 %v3072, %v3118
    %v3120 = vpop.f32.mrb[0].mxu0
    %v3121 = vpop.f32.mrb[0].mxu0
    %v3122 = vpop.f32.mrb[0].mxu0
    %3123 = vdwg.mxu0
    %v3124 = vpack.c.bf16 %v3119, %v3119
    %v3125 = vld [vmem:[#allocation8] sm:$0xf]
    %v3126 = vld [vmem:[%s45] sm:$0x1]
    %v3128 = vlaneseq
    %v3129 = vshrl.u32 %v3128, 7
    %v3130 = vsub.s32 0, %v3129
    %v3131 = vrot.slane %v3126, %v3130
    %vm3133 = vcmask 64512
    %v3135 = vsel %vm3133, %v3124, 0
    %vm3137 = vcmask 1043456
    %v3139 = vsel %vm3137, %v3125, 0
    %3141 = vmatprep.subr.bf16.mxu0 0
    %3142 = vmatpush1.bf16.msra.mxu0 %v3139
    %3143 = vmatprep.subr.bf16.mxu0 0
    %3144 = vmatpush1.bf16.msra.mxu0 0
    %3145 = vmatprep.subr.bf16.mxu0 0
    %3146 = vmatpush1.bf16.msra.mxu0 0
    %3147 = vmatprep.subr.bf16.mxu0 0
    %3148 = vmatpush1.bf16.msra.mxu0 0
    %3149 = vmatprep.subr.bf16.mxu0 0
    %3150 = vmatpush1.bf16.msra.mxu0 0
    %3151 = vmatprep.subr.bf16.mxu0 0
    %3152 = vmatpush1.bf16.msra.mxu0 0
    %3153 = vmatprep.subr.bf16.mxu0 0
    %3154 = vmatpush1.bf16.msra.mxu0 0
    %3155 = vmatprep.subr.bf16.mxu0 0
    %3156 = vmatpush1.bf16.msra.mxu0 0
    %3157 = vmatprep.subr.bf16.mxu0 0
    %3158 = vmatpush1.bf16.msra.mxu0 0
    %3159 = vmatprep.subr.bf16.mxu0 0
    %3160 = vmatpush1.bf16.msra.mxu0 0
    %3161 = vmatprep.subr.bf16.mxu0 0
    %3162 = vmatpush1.bf16.msra.mxu0 0
    %3163 = vmatprep.subr.bf16.mxu0 0
    %3164 = vmatpush1.bf16.msra.mxu0 0
    %3165 = vmatprep.subr.bf16.mxu0 0
    %3166 = vmatpush1.bf16.msra.mxu0 0
    %3167 = vmatprep.subr.bf16.mxu0 0
    %3168 = vmatpush1.bf16.msra.mxu0 0
    %3169 = vmatprep.subr.bf16.mxu0 0
    %3170 = vmatpush1.bf16.msra.mxu0 0
    %3171 = vmatprep.subr.bf16.mxu0 0
    %3172 = vmatpush1.bf16.msra.mxu0 0
    %3173 = vmatprep.mubr.bf16.mxu0 0
    %3174 = vmatmul.mubr.bf16.gmra.mrb[0].mxu0 %v3135
    %v3175 = vpop.f32.mrb[0].mxu0
    %v3176 = vadd.f32 %v3131, %v3175
    %v3177 = vpop.f32.mrb[0].mxu0
    %v3178 = vpop.f32.mrb[0].mxu0
    %v3179 = vpop.f32.mrb[0].mxu0
    %3180 = vdwg.mxu0
    %v3181 = vmax.f32 %v3176, 0.0
    %v3182 = vpack.c.bf16 %v3181, %v3181
    %v3183 = vld [vmem:[#allocation10] sm:$0xf]
    %v3184 = vld [vmem:[#allocation10 + $0x4] sm:$0xf]
    %v3185 = vld [vmem:[%s47] sm:$0x1]
    %v3187 = vlaneseq
    %v3188 = vshrl.u32 %v3187, 7
    %v3189 = vsub.s32 0, %v3188
    %v3190 = vrot.slane %v3185, %v3189
    %v3194 = vunpack.c.l.b16 %v3183
    %v3195 = vunpack.c.l.b16 %v3184
    %v3196 = vpack.c.b16 %v3195, %v3194
    %v3199 = vsel %vm3080, %v3182, 0
    %3201 = vmatprep.subr.bf16.mxu0 0
    %3202 = vmatpush1.bf16.msra.mxu0 %v3196
    %3203 = vmatprep.subr.bf16.mxu0 0
    %3204 = vmatpush1.bf16.msra.mxu0 0
    %3205 = vmatprep.subr.bf16.mxu0 0
    %3206 = vmatpush1.bf16.msra.mxu0 0
    %3207 = vmatprep.subr.bf16.mxu0 0
    %3208 = vmatpush1.bf16.msra.mxu0 0
    %3209 = vmatprep.subr.bf16.mxu0 0
    %3210 = vmatpush1.bf16.msra.mxu0 0
    %3211 = vmatprep.subr.bf16.mxu0 0
    %3212 = vmatpush1.bf16.msra.mxu0 0
    %3213 = vmatprep.subr.bf16.mxu0 0
    %3214 = vmatpush1.bf16.msra.mxu0 0
    %3215 = vmatprep.subr.bf16.mxu0 0
    %3216 = vmatpush1.bf16.msra.mxu0 0
    %3217 = vmatprep.subr.bf16.mxu0 0
    %3218 = vmatpush1.bf16.msra.mxu0 0
    %3219 = vmatprep.subr.bf16.mxu0 0
    %3220 = vmatpush1.bf16.msra.mxu0 0
    %3221 = vmatprep.subr.bf16.mxu0 0
    %3222 = vmatpush1.bf16.msra.mxu0 0
    %3223 = vmatprep.subr.bf16.mxu0 0
    %3224 = vmatpush1.bf16.msra.mxu0 0
    %3225 = vmatprep.subr.bf16.mxu0 0
    %3226 = vmatpush1.bf16.msra.mxu0 0
    %3227 = vmatprep.subr.bf16.mxu0 0
    %3228 = vmatpush1.bf16.msra.mxu0 0
    %3229 = vmatprep.subr.bf16.mxu0 0
    %3230 = vmatpush1.bf16.msra.mxu0 0
    %3231 = vmatprep.subr.bf16.mxu0 0
    %3232 = vmatpush1.bf16.msra.mxu0 0
    %3233 = vmatprep.mubr.bf16.mxu0 0
    %3234 = vmatmul.mubr.bf16.gmra.mrb[0].mxu0 %v3199
    %v3235 = vpop.f32.mrb[0].mxu0
    %v3236 = vadd.f32 %v3190, %v3235
    %v3237 = vpop.f32.mrb[0].mxu0
    %v3238 = vpop.f32.mrb[0].mxu0
    %v3239 = vpop.f32.mrb[0].mxu0
    %3240 = vdwg.mxu0
    %v3241 = vmax.f32 %v3236, 0.0
    %v3242 = vpack.c.bf16 %v3241, %v3241
    %v3243 = vld [vmem:[%s21] sm:$0xf]
    %v3244 = vld [vmem:[%s21 + $0x4] sm:$0xf]
    %v3245 = vld [vmem:[%s21 + $0x8] sm:$0xf]
    %v3246 = vld [vmem:[%s21 + $0xc] sm:$0xf]
    %v3247 = vld [vmem:[%s49] sm:$0x1]
    %v3249 = vlaneseq
    %v3250 = vshrl.u32 %v3249, 7
    %v3251 = vsub.s32 0, %v3250
    %v3252 = vrot.slane %v3247, %v3251
    %v3258 = vunpack.c.l.b16 %v3243
    %v3259 = vunpack.c.l.b16 %v3244
    %v3260 = vunpack.c.l.b16 %v3245
    %v3261 = vunpack.c.l.b16 %v3246
    %v3262 = vpack.c.b16 %v3259, %v3258
    %v3263 = vpack.c.b16 %v3261, %v3260
    %v3267 = vsel %vm3019, %v3242, 0
    %3269 = vmatprep.subr.bf16.mxu0 0
    %3270 = vmatpush1.bf16.msra.mxu0 %v3262
    %3271 = vmatprep.subr.bf16.mxu0 0
    %3272 = vmatpush1.bf16.msra.mxu0 %v3263
    %3273 = vmatprep.subr.bf16.mxu0 0
    %3274 = vmatpush1.bf16.msra.mxu0 0
    %3275 = vmatprep.subr.bf16.mxu0 0
    %3276 = vmatpush1.bf16.msra.mxu0 0
    %3277 = vmatprep.subr.bf16.mxu0 0
    %3278 = vmatpush1.bf16.msra.mxu0 0
    %3279 = vmatprep.subr.bf16.mxu0 0
    %3280 = vmatpush1.bf16.msra.mxu0 0
    %3281 = vmatprep.subr.bf16.mxu0 0
    %3282 = vmatpush1.bf16.msra.mxu0 0
    %3283 = vmatprep.subr.bf16.mxu0 0
    %3284 = vmatpush1.bf16.msra.mxu0 0
    %3285 = vmatprep.subr.bf16.mxu0 0
    %3286 = vmatpush1.bf16.msra.mxu0 0
    %3287 = vmatprep.subr.bf16.mxu0 0
    %3288 = vmatpush1.bf16.msra.mxu0 0
    %3289 = vmatprep.subr.bf16.mxu0 0
    %3290 = vmatpush1.bf16.msra.mxu0 0
    %3291 = vmatprep.subr.bf16.mxu0 0
    %3292 = vmatpush1.bf16.msra.mxu0 0
    %3293 = vmatprep.subr.bf16.mxu0 0
    %3294 = vmatpush1.bf16.msra.mxu0 0
    %3295 = vmatprep.subr.bf16.mxu0 0
    %3296 = vmatpush1.bf16.msra.mxu0 0
    %3297 = vmatprep.subr.bf16.mxu0 0
    %3298 = vmatpush1.bf16.msra.mxu0 0
    %3299 = vmatprep.subr.bf16.mxu0 0
    %3300 = vmatpush1.bf16.msra.mxu0 0
    %3301 = vmatprep.mubr.bf16.mxu0 0
    %3302 = vmatmul.mubr.bf16.gmra.mrb[0].mxu0 %v3267
    %v3303 = vpop.f32.mrb[0].mxu0
    %v3304 = vadd.f32 %v3252, %v3303
    %v3305 = vpop.f32.mrb[0].mxu0
    %v3306 = vpop.f32.mrb[0].mxu0
    %v3307 = vpop.f32.mrb[0].mxu0
    %3308 = vdwg.mxu0
    %v3309 = vmax.f32 %v3304, 0.0
    %v3310 = vpack.c.bf16 %v3309, %v3309
    %v3311 = vld [vmem:[%s23] sm:$0xf]
    %v3312 = vld [vmem:[%s23 + $0x4] sm:$0xf]
    %v3313 = vld [vmem:[%s23 + $0x8] sm:$0xf]
    %v3314 = vld [vmem:[%s23 + $0xc] sm:$0xf]
    %v3315 = vld [vmem:[%s23 + $0x10] sm:$0xf]
    %v3316 = vld [vmem:[%s23 + $0x14] sm:$0xf]
    %v3317 = vld [vmem:[%s23 + $0x18] sm:$0xf]
    %v3318 = vld [vmem:[%s23 + $0x1c] sm:$0xf]
    %v3319 = vld [vmem:[%s51] sm:$0x1]
    %v3321 = vlaneseq
    %v3322 = vshrl.u32 %v3321, 7
    %v3323 = vsub.s32 0, %v3322
    %v3324 = vrot.slane %v3319, %v3323
    %v3334 = vunpack.c.l.b16 %v3311
    %v3335 = vunpack.c.l.b16 %v3312
    %v3336 = vunpack.c.l.b16 %v3313
    %v3337 = vunpack.c.l.b16 %v3314
    %v3338 = vunpack.c.l.b16 %v3315
    %v3339 = vunpack.c.l.b16 %v3316
    %v3340 = vunpack.c.l.b16 %v3317
    %v3341 = vunpack.c.l.b16 %v3318
    %v3342 = vpack.c.b16 %v3335, %v3334
    %v3343 = vpack.c.b16 %v3337, %v3336
    %v3344 = vpack.c.b16 %v3339, %v3338
    %v3345 = vpack.c.b16 %v3341, %v3340
    %v3351 = vsel %vm2950, %v3310, 0
    %3353 = vmatprep.subr.bf16.mxu0 0
    %3354 = vmatpush1.bf16.msra.mxu0 %v3342
    %3355 = vmatprep.subr.bf16.mxu0 0
    %3356 = vmatpush1.bf16.msra.mxu0 %v3343
    %3357 = vmatprep.subr.bf16.mxu0 0
    %3358 = vmatpush1.bf16.msra.mxu0 %v3344
    %3359 = vmatprep.subr.bf16.mxu0 0
    %3360 = vmatpush1.bf16.msra.mxu0 %v3345
    %3361 = vmatprep.subr.bf16.mxu0 0
    %3362 = vmatpush1.bf16.msra.mxu0 0
    %3363 = vmatprep.subr.bf16.mxu0 0
    %3364 = vmatpush1.bf16.msra.mxu0 0
    %3365 = vmatprep.subr.bf16.mxu0 0
    %3366 = vmatpush1.bf16.msra.mxu0 0
    %3367 = vmatprep.subr.bf16.mxu0 0
    %3368 = vmatpush1.bf16.msra.mxu0 0
    %3369 = vmatprep.subr.bf16.mxu0 0
    %3370 = vmatpush1.bf16.msra.mxu0 0
    %3371 = vmatprep.subr.bf16.mxu0 0
    %3372 = vmatpush1.bf16.msra.mxu0 0
    %3373 = vmatprep.subr.bf16.mxu0 0
    %3374 = vmatpush1.bf16.msra.mxu0 0
    %3375 = vmatprep.subr.bf16.mxu0 0
    %3376 = vmatpush1.bf16.msra.mxu0 0
    %3377 = vmatprep.subr.bf16.mxu0 0
    %3378 = vmatpush1.bf16.msra.mxu0 0
    %3379 = vmatprep.subr.bf16.mxu0 0
    %3380 = vmatpush1.bf16.msra.mxu0 0
    %3381 = vmatprep.subr.bf16.mxu0 0
    %3382 = vmatpush1.bf16.msra.mxu0 0
    %3383 = vmatprep.subr.bf16.mxu0 0
    %3384 = vmatpush1.bf16.msra.mxu0 0
    %3385 = vmatprep.mubr.bf16.mxu0 0
    %3386 = vmatmul.mubr.bf16.gmra.mrb[0].mxu0 %v3351
    %v3387 = vpop.f32.mrb[0].mxu0
    %v3388 = vadd.f32 %v3324, %v3387
    %v3389 = vpop.f32.mrb[0].mxu0
    %v3390 = vpop.f32.mrb[0].mxu0
    %v3391 = vpop.f32.mrb[0].mxu0
    %3392 = vdwg.mxu0
    %v3393 = vmax.f32 %v3388, 0.0
    %v3394 = vpack.c.bf16 %v3393, %v3393
    %v3395 = vld [vmem:[#allocation11] sm:$0xff]
    %v3396 = vld [vmem:[#allocation11 + $0x8] sm:$0xff]
    %v3397 = vld [vmem:[#allocation11 + $0x10] sm:$0xff]
    %v3398 = vld [vmem:[#allocation11 + $0x18] sm:$0xff]
    %v3399 = vld [vmem:[#allocation11 + $0x20] sm:$0xff]
    %v3400 = vld [vmem:[#allocation11 + $0x28] sm:$0xff]
    %v3401 = vld [vmem:[#allocation11 + $0x30] sm:$0xff]
    %v3402 = vld [vmem:[#allocation11 + $0x38] sm:$0xff]
    %v3403 = vld [vmem:[#allocation11 + $0x40] sm:$0xff]
    %v3404 = vld [vmem:[#allocation11 + $0x48] sm:$0xff]
    %v3405 = vld [vmem:[#allocation11 + $0x50] sm:$0xff]
    %v3406 = vld [vmem:[#allocation11 + $0x58] sm:$0xff]
    %v3407 = vld [vmem:[#allocation11 + $0x60] sm:$0xff]
    %v3408 = vld [vmem:[#allocation11 + $0x68] sm:$0xff]
    %v3409 = vld [vmem:[#allocation11 + $0x70] sm:$0xff]
    %v3410 = vld [vmem:[#allocation11 + $0x78] sm:$0xff]
    %v3411 = vld [vmem:[%s53] sm:$0x3]
    %v3413 = vlaneseq
    %v3414 = vshrl.u32 %v3413, 7
    %v3415 = vsub.s32 0, %v3414
    %v3416 = vrot.slane %v3411, %v3415
    %v3417 = vlaneseq
    %v3418 = vshrl.u32 %v3417, 7
    %v3419 = vsub.s32 1, %v3418
    %v3420 = vrot.slane %v3411, %v3419
    %v3439 = vunpack.c.l.b16 %v3395
    %v3440 = vunpack.c.h.b16 %v3395
    %v3441 = vunpack.c.l.b16 %v3396
    %v3442 = vunpack.c.h.b16 %v3396
    %v3443 = vunpack.c.l.b16 %v3397
    %v3444 = vunpack.c.h.b16 %v3397
    %v3445 = vunpack.c.l.b16 %v3398
    %v3446 = vunpack.c.h.b16 %v3398
    %v3447 = vunpack.c.l.b16 %v3399
    %v3448 = vunpack.c.h.b16 %v3399
    %v3449 = vunpack.c.l.b16 %v3400
    %v3450 = vunpack.c.h.b16 %v3400
    %v3451 = vunpack.c.l.b16 %v3401
    %v3452 = vunpack.c.h.b16 %v3401
    %v3453 = vunpack.c.l.b16 %v3402
    %v3454 = vunpack.c.h.b16 %v3402
    %v3455 = vunpack.c.l.b16 %v3403
    %v3456 = vunpack.c.h.b16 %v3403
    %v3457 = vunpack.c.l.b16 %v3404
    %v3458 = vunpack.c.h.b16 %v3404
    %v3459 = vunpack.c.l.b16 %v3405
    %v3460 = vunpack.c.h.b16 %v3405
    %v3461 = vunpack.c.l.b16 %v3406
    %v3462 = vunpack.c.h.b16 %v3406
    %v3463 = vunpack.c.l.b16 %v3407
    %v3464 = vunpack.c.h.b16 %v3407
    %v3465 = vunpack.c.l.b16 %v3408
    %v3466 = vunpack.c.h.b16 %v3408
    %v3467 = vunpack.c.l.b16 %v3409
    %v3468 = vunpack.c.h.b16 %v3409
    %v3469 = vunpack.c.l.b16 %v3410
    %v3470 = vunpack.c.h.b16 %v3410
    %v3471 = vpack.c.b16 %v3441, %v3439
    %v3472 = vpack.c.b16 %v3442, %v3440
    %v3473 = vpack.c.b16 %v3445, %v3443
    %v3474 = vpack.c.b16 %v3446, %v3444
    %v3475 = vpack.c.b16 %v3449, %v3447
    %v3476 = vpack.c.b16 %v3450, %v3448
    %v3477 = vpack.c.b16 %v3453, %v3451
    %v3478 = vpack.c.b16 %v3454, %v3452
    %v3479 = vpack.c.b16 %v3457, %v3455
    %v3480 = vpack.c.b16 %v3458, %v3456
    %v3481 = vpack.c.b16 %v3461, %v3459
    %v3482 = vpack.c.b16 %v3462, %v3460
    %v3483 = vpack.c.b16 %v3465, %v3463
    %v3484 = vpack.c.b16 %v3466, %v3464
    %v3485 = vpack.c.b16 %v3469, %v3467
    %v3486 = vpack.c.b16 %v3470, %v3468
    %3503 = vmatprep.subr.bf16.mxu0 %v3472
    %3504 = vmatpush1.bf16.msra.mxu0 %v3471
    %3505 = vmatprep.subr.bf16.mxu0 %v3474
    %3506 = vmatpush1.bf16.msra.mxu0 %v3473
    %3507 = vmatprep.subr.bf16.mxu0 %v3476
    %3508 = vmatpush1.bf16.msra.mxu0 %v3475
    %3509 = vmatprep.subr.bf16.mxu0 %v3478
    %3510 = vmatpush1.bf16.msra.mxu0 %v3477
    %3511 = vmatprep.subr.bf16.mxu0 %v3480
    %3512 = vmatpush1.bf16.msra.mxu0 %v3479
    %3513 = vmatprep.subr.bf16.mxu0 %v3482
    %3514 = vmatpush1.bf16.msra.mxu0 %v3481
    %3515 = vmatprep.subr.bf16.mxu0 %v3484
    %3516 = vmatpush1.bf16.msra.mxu0 %v3483
    %3517 = vmatprep.subr.bf16.mxu0 %v3486
    %3518 = vmatpush1.bf16.msra.mxu0 %v3485
    %3519 = vmatprep.subr.bf16.mxu0 0
    %3520 = vmatpush1.bf16.msra.mxu0 0
    %3521 = vmatprep.subr.bf16.mxu0 0
    %3522 = vmatpush1.bf16.msra.mxu0 0
    %3523 = vmatprep.subr.bf16.mxu0 0
    %3524 = vmatpush1.bf16.msra.mxu0 0
    %3525 = vmatprep.subr.bf16.mxu0 0
    %3526 = vmatpush1.bf16.msra.mxu0 0
    %3527 = vmatprep.subr.bf16.mxu0 0
    %3528 = vmatpush1.bf16.msra.mxu0 0
    %3529 = vmatprep.subr.bf16.mxu0 0
    %3530 = vmatpush1.bf16.msra.mxu0 0
    %3531 = vmatprep.subr.bf16.mxu0 0
    %3532 = vmatpush1.bf16.msra.mxu0 0
    %3533 = vmatprep.subr.bf16.mxu0 0
    %3534 = vmatpush1.bf16.msra.mxu0 0
    %3535 = vmatprep.mubr.bf16.mxu0 0
    %3536 = vmatmul.mubr.bf16.gmra.mrb[0].mxu0 %v3394
    %v3537 = vpop.f32.mrb[0].mxu0
    %v3538 = vadd.f32 %v3416, %v3537
    %v3539 = vpop.f32.mrb[0].mxu0
    %v3540 = vadd.f32 %v3420, %v3539
    %v3541 = vpop.f32.mrb[0].mxu0
    %v3542 = vpop.f32.mrb[0].mxu0
    %3543 = vdwg.mxu0
    %v3544 = vmax.f32 %v3538, 0.0
    %v3545 = vmax.f32 %v3540, 0.0
    %v3546 = vpack.c.bf16 %v3544, %v3544
    %v3547 = vpack.c.bf16 %v3545, %v3545
    %v3548 = vld [vmem:[#allocation13] sm:$0xff]
    %v3549 = vld [vmem:[#allocation13 + $0x8] sm:$0xff]
    %v3550 = vld [vmem:[#allocation13 + $0x10] sm:$0xff]
    %v3551 = vld [vmem:[#allocation13 + $0x18] sm:$0xff]
    %v3552 = vld [vmem:[#allocation13 + $0x20] sm:$0xff]
    %v3553 = vld [vmem:[#allocation13 + $0x28] sm:$0xff]
    %v3554 = vld [vmem:[#allocation13 + $0x30] sm:$0xff]
    %v3555 = vld [vmem:[#allocation13 + $0x38] sm:$0xff]
    %v3556 = vld [vmem:[#allocation13 + $0x40] sm:$0xff]
    %v3557 = vld [vmem:[#allocation13 + $0x48] sm:$0xff]
    %v3558 = vld [vmem:[#allocation13 + $0x50] sm:$0xff]
    %v3559 = vld [vmem:[#allocation13 + $0x58] sm:$0xff]
    %v3560 = vld [vmem:[#allocation13 + $0x60] sm:$0xff]
    %v3561 = vld [vmem:[#allocation13 + $0x68] sm:$0xff]
    %v3562 = vld [vmem:[#allocation13 + $0x70] sm:$0xff]
    %v3563 = vld [vmem:[#allocation13 + $0x78] sm:$0xff]
    %v3564 = vld [vmem:[#allocation13 + $0x80] sm:$0xff]
    %v3565 = vld [vmem:[#allocation13 + $0x88] sm:$0xff]
    %v3566 = vld [vmem:[#allocation13 + $0x90] sm:$0xff]
    %v3567 = vld [vmem:[#allocation13 + $0x98] sm:$0xff]
    %v3568 = vld [vmem:[#allocation13 + $0xa0] sm:$0xff]
    %v3569 = vld [vmem:[#allocation13 + $0xa8] sm:$0xff]
    %v3570 = vld [vmem:[#allocation13 + $0xb0] sm:$0xff]
    %v3571 = vld [vmem:[#allocation13 + $0xb8] sm:$0xff]
    %v3572 = vld [vmem:[#allocation13 + $0xc0] sm:$0xff]
    %v3573 = vld [vmem:[#allocation13 + $0xc8] sm:$0xff]
    %v3574 = vld [vmem:[#allocation13 + $0xd0] sm:$0xff]
    %v3575 = vld [vmem:[#allocation13 + $0xd8] sm:$0xff]
    %v3576 = vld [vmem:[#allocation13 + $0xe0] sm:$0xff]
    %v3577 = vld [vmem:[#allocation13 + $0xe8] sm:$0xff]
    %v3578 = vld [vmem:[#allocation13 + $0xf0] sm:$0xff]
    %v3579 = vld [vmem:[#allocation13 + $0xf8] sm:$0xff]
    %v3580 = vld [vmem:[#allocation13 + $0x100] sm:$0xff]
    %v3581 = vld [vmem:[#allocation13 + $0x108] sm:$0xff]
    %v3582 = vld [vmem:[#allocation13 + $0x110] sm:$0xff]
    %v3583 = vld [vmem:[#allocation13 + $0x118] sm:$0xff]
    %v3584 = vld [vmem:[#allocation13 + $0x120] sm:$0xff]
    %v3585 = vld [vmem:[#allocation13 + $0x128] sm:$0xff]
    %v3586 = vld [vmem:[#allocation13 + $0x130] sm:$0xff]
    %v3587 = vld [vmem:[#allocation13 + $0x138] sm:$0xff]
    %v3588 = vld [vmem:[#allocation13 + $0x140] sm:$0xff]
    %v3589 = vld [vmem:[#allocation13 + $0x148] sm:$0xff]
    %v3590 = vld [vmem:[#allocation13 + $0x150] sm:$0xff]
    %v3591 = vld [vmem:[#allocation13 + $0x158] sm:$0xff]
    %v3592 = vld [vmem:[#allocation13 + $0x160] sm:$0xff]
    %v3593 = vld [vmem:[#allocation13 + $0x168] sm:$0xff]
    %v3594 = vld [vmem:[#allocation13 + $0x170] sm:$0xff]
    %v3595 = vld [vmem:[#allocation13 + $0x178] sm:$0xff]
    %v3596 = vld [vmem:[#allocation13 + $0x180] sm:$0xff]
    %v3597 = vld [vmem:[#allocation13 + $0x188] sm:$0xff]
    %v3598 = vld [vmem:[#allocation13 + $0x190] sm:$0xff]
    %v3599 = vld [vmem:[#allocation13 + $0x198] sm:$0xff]
    %v3600 = vld [vmem:[#allocation13 + $0x1a0] sm:$0xff]
    %v3601 = vld [vmem:[#allocation13 + $0x1a8] sm:$0xff]
    %v3602 = vld [vmem:[#allocation13 + $0x1b0] sm:$0xff]
    %v3603 = vld [vmem:[#allocation13 + $0x1b8] sm:$0xff]
    %v3604 = vld [vmem:[#allocation13 + $0x1c0] sm:$0xff]
    %v3605 = vld [vmem:[#allocation13 + $0x1c8] sm:$0xff]
    %v3606 = vld [vmem:[#allocation13 + $0x1d0] sm:$0xff]
    %v3607 = vld [vmem:[#allocation13 + $0x1d8] sm:$0xff]
    %v3608 = vld [vmem:[#allocation13 + $0x1e0] sm:$0xff]
    %v3609 = vld [vmem:[#allocation13 + $0x1e8] sm:$0xff]
    %v3610 = vld [vmem:[#allocation13 + $0x1f0] sm:$0xff]
    %v3611 = vld [vmem:[#allocation13 + $0x1f8] sm:$0xff]
    %v3612 = vld [vmem:[%s55] sm:$0xf]
    %v3614 = vlaneseq
    %v3615 = vshrl.u32 %v3614, 7
    %v3616 = vsub.s32 0, %v3615
    %v3617 = vrot.slane %v3612, %v3616
    %v3618 = vlaneseq
    %v3619 = vshrl.u32 %v3618, 7
    %v3620 = vsub.s32 1, %v3619
    %v3621 = vrot.slane %v3612, %v3620
    %v3622 = vlaneseq
    %v3623 = vshrl.u32 %v3622, 7
    %v3624 = vsub.s32 2, %v3623
    %v3625 = vrot.slane %v3612, %v3624
    %v3626 = vlaneseq
    %v3627 = vshrl.u32 %v3626, 7
    %v3628 = vsub.s32 3, %v3627
    %v3629 = vrot.slane %v3612, %v3628
    %v3698 = vunpack.c.l.b16 %v3548
    %v3699 = vunpack.c.h.b16 %v3548
    %v3700 = vunpack.c.l.b16 %v3549
    %v3701 = vunpack.c.h.b16 %v3549
    %v3702 = vunpack.c.l.b16 %v3550
    %v3703 = vunpack.c.h.b16 %v3550
    %v3704 = vunpack.c.l.b16 %v3551
    %v3705 = vunpack.c.h.b16 %v3551
    %v3706 = vunpack.c.l.b16 %v3552
    %v3707 = vunpack.c.h.b16 %v3552
    %v3708 = vunpack.c.l.b16 %v3553
    %v3709 = vunpack.c.h.b16 %v3553
    %v3710 = vunpack.c.l.b16 %v3554
    %v3711 = vunpack.c.h.b16 %v3554
    %v3712 = vunpack.c.l.b16 %v3555
    %v3713 = vunpack.c.h.b16 %v3555
    %v3714 = vunpack.c.l.b16 %v3556
    %v3715 = vunpack.c.h.b16 %v3556
    %v3716 = vunpack.c.l.b16 %v3557
    %v3717 = vunpack.c.h.b16 %v3557
    %v3718 = vunpack.c.l.b16 %v3558
    %v3719 = vunpack.c.h.b16 %v3558
    %v3720 = vunpack.c.l.b16 %v3559
    %v3721 = vunpack.c.h.b16 %v3559
    %v3722 = vunpack.c.l.b16 %v3560
    %v3723 = vunpack.c.h.b16 %v3560
    %v3724 = vunpack.c.l.b16 %v3561
    %v3725 = vunpack.c.h.b16 %v3561
    %v3726 = vunpack.c.l.b16 %v3562
    %v3727 = vunpack.c.h.b16 %v3562
    %v3728 = vunpack.c.l.b16 %v3563
    %v3729 = vunpack.c.h.b16 %v3563
    %v3730 = vunpack.c.l.b16 %v3564
    %v3731 = vunpack.c.h.b16 %v3564
    %v3732 = vunpack.c.l.b16 %v3565
    %v3733 = vunpack.c.h.b16 %v3565
    %v3734 = vunpack.c.l.b16 %v3566
    %v3735 = vunpack.c.h.b16 %v3566
    %v3736 = vunpack.c.l.b16 %v3567
    %v3737 = vunpack.c.h.b16 %v3567
    %v3738 = vunpack.c.l.b16 %v3568
    %v3739 = vunpack.c.h.b16 %v3568
    %v3740 = vunpack.c.l.b16 %v3569
    %v3741 = vunpack.c.h.b16 %v3569
    %v3742 = vunpack.c.l.b16 %v3570
    %v3743 = vunpack.c.h.b16 %v3570
    %v3744 = vunpack.c.l.b16 %v3571
    %v3745 = vunpack.c.h.b16 %v3571
    %v3746 = vunpack.c.l.b16 %v3572
    %v3747 = vunpack.c.h.b16 %v3572
    %v3748 = vunpack.c.l.b16 %v3573
    %v3749 = vunpack.c.h.b16 %v3573
    %v3750 = vunpack.c.l.b16 %v3574
    %v3751 = vunpack.c.h.b16 %v3574
    %v3752 = vunpack.c.l.b16 %v3575
    %v3753 = vunpack.c.h.b16 %v3575
    %v3754 = vunpack.c.l.b16 %v3576
    %v3755 = vunpack.c.h.b16 %v3576
    %v3756 = vunpack.c.l.b16 %v3577
    %v3757 = vunpack.c.h.b16 %v3577
    %v3758 = vunpack.c.l.b16 %v3578
    %v3759 = vunpack.c.h.b16 %v3578
    %v3760 = vunpack.c.l.b16 %v3579
    %v3761 = vunpack.c.h.b16 %v3579
    %v3762 = vunpack.c.l.b16 %v3580
    %v3763 = vunpack.c.h.b16 %v3580
    %v3764 = vunpack.c.l.b16 %v3581
    %v3765 = vunpack.c.h.b16 %v3581
    %v3766 = vunpack.c.l.b16 %v3582
    %v3767 = vunpack.c.h.b16 %v3582
    %v3768 = vunpack.c.l.b16 %v3583
    %v3769 = vunpack.c.h.b16 %v3583
    %v3770 = vunpack.c.l.b16 %v3584
    %v3771 = vunpack.c.h.b16 %v3584
    %v3772 = vunpack.c.l.b16 %v3585
    %v3773 = vunpack.c.h.b16 %v3585
    %v3774 = vunpack.c.l.b16 %v3586
    %v3775 = vunpack.c.h.b16 %v3586
    %v3776 = vunpack.c.l.b16 %v3587
    %v3777 = vunpack.c.h.b16 %v3587
    %v3778 = vunpack.c.l.b16 %v3588
    %v3779 = vunpack.c.h.b16 %v3588
    %v3780 = vunpack.c.l.b16 %v3589
    %v3781 = vunpack.c.h.b16 %v3589
    %v3782 = vunpack.c.l.b16 %v3590
    %v3783 = vunpack.c.h.b16 %v3590
    %v3784 = vunpack.c.l.b16 %v3591
    %v3785 = vunpack.c.h.b16 %v3591
    %v3786 = vunpack.c.l.b16 %v3592
    %v3787 = vunpack.c.h.b16 %v3592
    %v3788 = vunpack.c.l.b16 %v3593
    %v3789 = vunpack.c.h.b16 %v3593
    %v3790 = vunpack.c.l.b16 %v3594
    %v3791 = vunpack.c.h.b16 %v3594
    %v3792 = vunpack.c.l.b16 %v3595
    %v3793 = vunpack.c.h.b16 %v3595
    %v3794 = vunpack.c.l.b16 %v3596
    %v3795 = vunpack.c.h.b16 %v3596
    %v3796 = vunpack.c.l.b16 %v3597
    %v3797 = vunpack.c.h.b16 %v3597
    %v3798 = vunpack.c.l.b16 %v3598
    %v3799 = vunpack.c.h.b16 %v3598
    %v3800 = vunpack.c.l.b16 %v3599
    %v3801 = vunpack.c.h.b16 %v3599
    %v3802 = vunpack.c.l.b16 %v3600
    %v3803 = vunpack.c.h.b16 %v3600
    %v3804 = vunpack.c.l.b16 %v3601
    %v3805 = vunpack.c.h.b16 %v3601
    %v3806 = vunpack.c.l.b16 %v3602
    %v3807 = vunpack.c.h.b16 %v3602
    %v3808 = vunpack.c.l.b16 %v3603
    %v3809 = vunpack.c.h.b16 %v3603
    %v3810 = vunpack.c.l.b16 %v3604
    %v3811 = vunpack.c.h.b16 %v3604
    %v3812 = vunpack.c.l.b16 %v3605
    %v3813 = vunpack.c.h.b16 %v3605
    %v3814 = vunpack.c.l.b16 %v3606
    %v3815 = vunpack.c.h.b16 %v3606
    %v3816 = vunpack.c.l.b16 %v3607
    %v3817 = vunpack.c.h.b16 %v3607
    %v3818 = vunpack.c.l.b16 %v3608
    %v3819 = vunpack.c.h.b16 %v3608
    %v3820 = vunpack.c.l.b16 %v3609
    %v3821 = vunpack.c.h.b16 %v3609
    %v3822 = vunpack.c.l.b16 %v3610
    %v3823 = vunpack.c.h.b16 %v3610
    %v3824 = vunpack.c.l.b16 %v3611
    %v3825 = vunpack.c.h.b16 %v3611
    %v3826 = vpack.c.b16 %v3702, %v3698
    %v3827 = vpack.c.b16 %v3703, %v3699
    %v3828 = vpack.c.b16 %v3704, %v3700
    %v3829 = vpack.c.b16 %v3705, %v3701
    %v3830 = vpack.c.b16 %v3710, %v3706
    %v3831 = vpack.c.b16 %v3711, %v3707
    %v3832 = vpack.c.b16 %v3712, %v3708
    %v3833 = vpack.c.b16 %v3713, %v3709
    %v3834 = vpack.c.b16 %v3718, %v3714
    %v3835 = vpack.c.b16 %v3719, %v3715
    %v3836 = vpack.c.b16 %v3720, %v3716
    %v3837 = vpack.c.b16 %v3721, %v3717
    %v3838 = vpack.c.b16 %v3726, %v3722
    %v3839 = vpack.c.b16 %v3727, %v3723
    %v3840 = vpack.c.b16 %v3728, %v3724
    %v3841 = vpack.c.b16 %v3729, %v3725
    %v3842 = vpack.c.b16 %v3734, %v3730
    %v3843 = vpack.c.b16 %v3735, %v3731
    %v3844 = vpack.c.b16 %v3736, %v3732
    %v3845 = vpack.c.b16 %v3737, %v3733
    %v3846 = vpack.c.b16 %v3742, %v3738
    %v3847 = vpack.c.b16 %v3743, %v3739
    %v3848 = vpack.c.b16 %v3744, %v3740
    %v3849 = vpack.c.b16 %v3745, %v3741
    %v3850 = vpack.c.b16 %v3750, %v3746
    %v3851 = vpack.c.b16 %v3751, %v3747
    %v3852 = vpack.c.b16 %v3752, %v3748
    %v3853 = vpack.c.b16 %v3753, %v3749
    %v3854 = vpack.c.b16 %v3758, %v3754
    %v3855 = vpack.c.b16 %v3759, %v3755
    %v3856 = vpack.c.b16 %v3760, %v3756
    %v3857 = vpack.c.b16 %v3761, %v3757
    %v3858 = vpack.c.b16 %v3766, %v3762
    %v3859 = vpack.c.b16 %v3767, %v3763
    %v3860 = vpack.c.b16 %v3768, %v3764
    %v3861 = vpack.c.b16 %v3769, %v3765
    %v3862 = vpack.c.b16 %v3774, %v3770
    %v3863 = vpack.c.b16 %v3775, %v3771
    %v3864 = vpack.c.b16 %v3776, %v3772
    %v3865 = vpack.c.b16 %v3777, %v3773
    %v3866 = vpack.c.b16 %v3782, %v3778
    %v3867 = vpack.c.b16 %v3783, %v3779
    %v3868 = vpack.c.b16 %v3784, %v3780
    %v3869 = vpack.c.b16 %v3785, %v3781
    %v3870 = vpack.c.b16 %v3790, %v3786
    %v3871 = vpack.c.b16 %v3791, %v3787
    %v3872 = vpack.c.b16 %v3792, %v3788
    %v3873 = vpack.c.b16 %v3793, %v3789
    %v3874 = vpack.c.b16 %v3798, %v3794
    %v3875 = vpack.c.b16 %v3799, %v3795
    %v3876 = vpack.c.b16 %v3800, %v3796
    %v3877 = vpack.c.b16 %v3801, %v3797
    %v3878 = vpack.c.b16 %v3806, %v3802
    %v3879 = vpack.c.b16 %v3807, %v3803
    %v3880 = vpack.c.b16 %v3808, %v3804
    %v3881 = vpack.c.b16 %v3809, %v3805
    %v3882 = vpack.c.b16 %v3814, %v3810
    %v3883 = vpack.c.b16 %v3815, %v3811
    %v3884 = vpack.c.b16 %v3816, %v3812
    %v3885 = vpack.c.b16 %v3817, %v3813
    %v3886 = vpack.c.b16 %v3822, %v3818
    %v3887 = vpack.c.b16 %v3823, %v3819
    %v3888 = vpack.c.b16 %v3824, %v3820
    %v3889 = vpack.c.b16 %v3825, %v3821
    %3954 = vmatprep.subr.bf16.mxu0 %v3827
    %3955 = vmatpush1.bf16.msra.mxu0 %v3826
    %3956 = vmatprep.subr.bf16.mxu0 %v3831
    %3957 = vmatpush1.bf16.msra.mxu0 %v3830
    %3958 = vmatprep.subr.bf16.mxu0 %v3835
    %3959 = vmatpush1.bf16.msra.mxu0 %v3834
    %3960 = vmatprep.subr.bf16.mxu0 %v3839
    %3961 = vmatpush1.bf16.msra.mxu0 %v3838
    %3962 = vmatprep.subr.bf16.mxu0 %v3843
    %3963 = vmatpush1.bf16.msra.mxu0 %v3842
    %3964 = vmatprep.subr.bf16.mxu0 %v3847
    %3965 = vmatpush1.bf16.msra.mxu0 %v3846
    %3966 = vmatprep.subr.bf16.mxu0 %v3851
    %3967 = vmatpush1.bf16.msra.mxu0 %v3850
    %3968 = vmatprep.subr.bf16.mxu0 %v3855
    %3969 = vmatpush1.bf16.msra.mxu0 %v3854
    %3970 = vmatprep.subr.bf16.mxu0 %v3859
    %3971 = vmatpush1.bf16.msra.mxu0 %v3858
    %3972 = vmatprep.subr.bf16.mxu0 %v3863
    %3973 = vmatpush1.bf16.msra.mxu0 %v3862
    %3974 = vmatprep.subr.bf16.mxu0 %v3867
    %3975 = vmatpush1.bf16.msra.mxu0 %v3866
    %3976 = vmatprep.subr.bf16.mxu0 %v3871
    %3977 = vmatpush1.bf16.msra.mxu0 %v3870
    %3978 = vmatprep.subr.bf16.mxu0 %v3875
    %3979 = vmatpush1.bf16.msra.mxu0 %v3874
    %3980 = vmatprep.subr.bf16.mxu0 %v3879
    %3981 = vmatpush1.bf16.msra.mxu0 %v3878
    %3982 = vmatprep.subr.bf16.mxu0 %v3883
    %3983 = vmatpush1.bf16.msra.mxu0 %v3882
    %3984 = vmatprep.subr.bf16.mxu0 %v3887
    %3985 = vmatpush1.bf16.msra.mxu0 %v3886
    %3986 = vmatprep.mubr.bf16.mxu0 %v3547
    %3987 = vmatmul.mubr.bf16.gmra.mrb[0].mxu0 %v3546
    %v3988 = vpop.f32.mrb[0].mxu0
    %v3989 = vadd.f32 %v3617, %v3988
    %v3990 = vpop.f32.mrb[0].mxu0
    %v3991 = vadd.f32 %v3621, %v3990
    %v3992 = vpop.f32.mrb[0].mxu0
    %v3993 = vpop.f32.mrb[0].mxu0
    %3994 = vdwg.mxu0
    %3995 = vmatprep.subr.bf16.mxu0 %v3829
    %3996 = vmatpush1.bf16.msra.mxu0 %v3828
    %3997 = vmatprep.subr.bf16.mxu0 %v3833
    %3998 = vmatpush1.bf16.msra.mxu0 %v3832
    %3999 = vmatprep.subr.bf16.mxu0 %v3837
    %4000 = vmatpush1.bf16.msra.mxu0 %v3836
    %4001 = vmatprep.subr.bf16.mxu0 %v3841
    %4002 = vmatpush1.bf16.msra.mxu0 %v3840
    %4003 = vmatprep.subr.bf16.mxu0 %v3845
    %4004 = vmatpush1.bf16.msra.mxu0 %v3844
    %4005 = vmatprep.subr.bf16.mxu0 %v3849
    %4006 = vmatpush1.bf16.msra.mxu0 %v3848
    %4007 = vmatprep.subr.bf16.mxu0 %v3853
    %4008 = vmatpush1.bf16.msra.mxu0 %v3852
    %4009 = vmatprep.subr.bf16.mxu0 %v3857
    %4010 = vmatpush1.bf16.msra.mxu0 %v3856
    %4011 = vmatprep.subr.bf16.mxu0 %v3861
    %4012 = vmatpush1.bf16.msra.mxu0 %v3860
    %4013 = vmatprep.subr.bf16.mxu0 %v3865
    %4014 = vmatpush1.bf16.msra.mxu0 %v3864
    %4015 = vmatprep.subr.bf16.mxu0 %v3869
    %4016 = vmatpush1.bf16.msra.mxu0 %v3868
    %4017 = vmatprep.subr.bf16.mxu0 %v3873
    %4018 = vmatpush1.bf16.msra.mxu0 %v3872
    %4019 = vmatprep.subr.bf16.mxu0 %v3877
    %4020 = vmatpush1.bf16.msra.mxu0 %v3876
    %4021 = vmatprep.subr.bf16.mxu0 %v3881
    %4022 = vmatpush1.bf16.msra.mxu0 %v3880
    %4023 = vmatprep.subr.bf16.mxu0 %v3885
    %4024 = vmatpush1.bf16.msra.mxu0 %v3884
    %4025 = vmatprep.subr.bf16.mxu0 %v3889
    %4026 = vmatpush1.bf16.msra.mxu0 %v3888
    %4027 = vmatprep.mubr.bf16.mxu0 %v3547
    %4028 = vmatmul.mubr.bf16.gmra.mrb[0].mxu0 %v3546
    %v4029 = vpop.f32.mrb[0].mxu0
    %v4030 = vadd.f32 %v3625, %v4029
    %v4031 = vpop.f32.mrb[0].mxu0
    %v4032 = vadd.f32 %v3629, %v4031
    %v4033 = vpop.f32.mrb[0].mxu0
    %v4034 = vpop.f32.mrb[0].mxu0
    %4035 = vdwg.mxu0
    %v4036 = vmax.f32 %v3989, 0.0
    %v4037 = vmax.f32 %v3991, 0.0
    %v4038 = vmax.f32 %v4030, 0.0
    %v4039 = vmax.f32 %v4032, 0.0
    %v4040 = vpack.c.bf16 %v4036, %v4036
    %v4041 = vpack.c.bf16 %v4037, %v4037
    %v4042 = vpack.c.bf16 %v4038, %v4038
    %v4043 = vpack.c.bf16 %v4039, %v4039
    %v4044 = vld [vmem:[#allocation14] sm:$0xff]
    %v4045 = vld [vmem:[#allocation14 + $0x8] sm:$0xff]
    %v4046 = vld [vmem:[#allocation14 + $0x10] sm:$0xff]
    %v4047 = vld [vmem:[#allocation14 + $0x18] sm:$0xff]
    %v4048 = vld [vmem:[#allocation14 + $0x20] sm:$0xff]
    %v4049 = vld [vmem:[#allocation14 + $0x28] sm:$0xff]
    %v4050 = vld [vmem:[#allocation14 + $0x30] sm:$0xff]
    %v4051 = vld [vmem:[#allocation14 + $0x38] sm:$0xff]
    %v4052 = vld [vmem:[#allocation14 + $0x40] sm:$0xff]
    %v4053 = vld [vmem:[#allocation14 + $0x48] sm:$0xff]
    %v4054 = vld [vmem:[#allocation14 + $0x50] sm:$0xff]
    %v4055 = vld [vmem:[#allocation14 + $0x58] sm:$0xff]
    %v4056 = vld [vmem:[#allocation14 + $0x60] sm:$0xff]
    %v4057 = vld [vmem:[#allocation14 + $0x68] sm:$0xff]
    %v4058 = vld [vmem:[#allocation14 + $0x70] sm:$0xff]
    %v4059 = vld [vmem:[#allocation14 + $0x78] sm:$0xff]
    %v4060 = vld [vmem:[#allocation14 + $0x80] sm:$0xff]
    %v4061 = vld [vmem:[#allocation14 + $0x88] sm:$0xff]
    %v4062 = vld [vmem:[#allocation14 + $0x90] sm:$0xff]
    %v4063 = vld [vmem:[#allocation14 + $0x98] sm:$0xff]
    %v4064 = vld [vmem:[#allocation14 + $0xa0] sm:$0xff]
    %v4065 = vld [vmem:[#allocation14 + $0xa8] sm:$0xff]
    %v4066 = vld [vmem:[#allocation14 + $0xb0] sm:$0xff]
    %v4067 = vld [vmem:[#allocation14 + $0xb8] sm:$0xff]
    %v4068 = vld [vmem:[#allocation14 + $0xc0] sm:$0xff]
    %v4069 = vld [vmem:[#allocation14 + $0xc8] sm:$0xff]
    %v4070 = vld [vmem:[#allocation14 + $0xd0] sm:$0xff]
    %v4071 = vld [vmem:[#allocation14 + $0xd8] sm:$0xff]
    %v4072 = vld [vmem:[#allocation14 + $0xe0] sm:$0xff]
    %v4073 = vld [vmem:[#allocation14 + $0xe8] sm:$0xff]
    %v4074 = vld [vmem:[#allocation14 + $0xf0] sm:$0xff]
    %v4075 = vld [vmem:[#allocation14 + $0xf8] sm:$0xff]
    %v4076 = vld [vmem:[#allocation14 + $0x100] sm:$0xff]
    %v4077 = vld [vmem:[#allocation14 + $0x108] sm:$0xff]
    %v4078 = vld [vmem:[#allocation14 + $0x110] sm:$0xff]
    %v4079 = vld [vmem:[#allocation14 + $0x118] sm:$0xff]
    %v4080 = vld [vmem:[#allocation14 + $0x120] sm:$0xff]
    %v4081 = vld [vmem:[#allocation14 + $0x128] sm:$0xff]
    %v4082 = vld [vmem:[#allocation14 + $0x130] sm:$0xff]
    %v4083 = vld [vmem:[#allocation14 + $0x138] sm:$0xff]
    %v4084 = vld [vmem:[#allocation14 + $0x140] sm:$0xff]
    %v4085 = vld [vmem:[#allocation14 + $0x148] sm:$0xff]
    %v4086 = vld [vmem:[#allocation14 + $0x150] sm:$0xff]
    %v4087 = vld [vmem:[#allocation14 + $0x158] sm:$0xff]
    %v4088 = vld [vmem:[#allocation14 + $0x160] sm:$0xff]
    %v4089 = vld [vmem:[#allocation14 + $0x168] sm:$0xff]
    %v4090 = vld [vmem:[#allocation14 + $0x170] sm:$0xff]
    %v4091 = vld [vmem:[#allocation14 + $0x178] sm:$0xff]
    %v4092 = vld [vmem:[#allocation14 + $0x180] sm:$0xff]
    %v4093 = vld [vmem:[#allocation14 + $0x188] sm:$0xff]
    %v4094 = vld [vmem:[#allocation14 + $0x190] sm:$0xff]
    %v4095 = vld [vmem:[#allocation14 + $0x198] sm:$0xff]
    %v4096 = vld [vmem:[#allocation14 + $0x1a0] sm:$0xff]
    %v4097 = vld [vmem:[#allocation14 + $0x1a8] sm:$0xff]
    %v4098 = vld [vmem:[#allocation14 + $0x1b0] sm:$0xff]
    %v4099 = vld [vmem:[#allocation14 + $0x1b8] sm:$0xff]
    %v4100 = vld [vmem:[#allocation14 + $0x1c0] sm:$0xff]
    %v4101 = vld [vmem:[#allocation14 + $0x1c8] sm:$0xff]
    %v4102 = vld [vmem:[#allocation14 + $0x1d0] sm:$0xff]
    %v4103 = vld [vmem:[#allocation14 + $0x1d8] sm:$0xff]
    %v4104 = vld [vmem:[#allocation14 + $0x1e0] sm:$0xff]
    %v4105 = vld [vmem:[#allocation14 + $0x1e8] sm:$0xff]
    %v4106 = vld [vmem:[#allocation14 + $0x1f0] sm:$0xff]
    %v4107 = vld [vmem:[#allocation14 + $0x1f8] sm:$0xff]
    %v4108 = vld [vmem:[#allocation14 + $0x200] sm:$0xff]
    %v4109 = vld [vmem:[#allocation14 + $0x208] sm:$0xff]
    %v4110 = vld [vmem:[#allocation14 + $0x210] sm:$0xff]
    %v4111 = vld [vmem:[#allocation14 + $0x218] sm:$0xff]
    %v4112 = vld [vmem:[#allocation14 + $0x220] sm:$0xff]
    %v4113 = vld [vmem:[#allocation14 + $0x228] sm:$0xff]
    %v4114 = vld [vmem:[#allocation14 + $0x230] sm:$0xff]
    %v4115 = vld [vmem:[#allocation14 + $0x238] sm:$0xff]
    %v4116 = vld [vmem:[#allocation14 + $0x240] sm:$0xff]
    %v4117 = vld [vmem:[#allocation14 + $0x248] sm:$0xff]
    %v4118 = vld [vmem:[#allocation14 + $0x250] sm:$0xff]
    %v4119 = vld [vmem:[#allocation14 + $0x258] sm:$0xff]
    %v4120 = vld [vmem:[#allocation14 + $0x260] sm:$0xff]
    %v4121 = vld [vmem:[#allocation14 + $0x268] sm:$0xff]
    %v4122 = vld [vmem:[#allocation14 + $0x270] sm:$0xff]
    %v4123 = vld [vmem:[#allocation14 + $0x278] sm:$0xff]
    %v4124 = vld [vmem:[#allocation14 + $0x280] sm:$0xff]
    %v4125 = vld [vmem:[#allocation14 + $0x288] sm:$0xff]
    %v4126 = vld [vmem:[#allocation14 + $0x290] sm:$0xff]
    %v4127 = vld [vmem:[#allocation14 + $0x298] sm:$0xff]
    %v4128 = vld [vmem:[#allocation14 + $0x2a0] sm:$0xff]
    %v4129 = vld [vmem:[#allocation14 + $0x2a8] sm:$0xff]
    %v4130 = vld [vmem:[#allocation14 + $0x2b0] sm:$0xff]
    %v4131 = vld [vmem:[#allocation14 + $0x2b8] sm:$0xff]
    %v4132 = vld [vmem:[#allocation14 + $0x2c0] sm:$0xff]
    %v4133 = vld [vmem:[#allocation14 + $0x2c8] sm:$0xff]
    %v4134 = vld [vmem:[#allocation14 + $0x2d0] sm:$0xff]
    %v4135 = vld [vmem:[#allocation14 + $0x2d8] sm:$0xff]
    %v4136 = vld [vmem:[#allocation14 + $0x2e0] sm:$0xff]
    %v4137 = vld [vmem:[#allocation14 + $0x2e8] sm:$0xff]
    %v4138 = vld [vmem:[#allocation14 + $0x2f0] sm:$0xff]
    %v4139 = vld [vmem:[#allocation14 + $0x2f8] sm:$0xff]
    %v4140 = vld [vmem:[#allocation14 + $0x300] sm:$0xff]
    %v4141 = vld [vmem:[#allocation14 + $0x308] sm:$0xff]
    %v4142 = vld [vmem:[#allocation14 + $0x310] sm:$0xff]
    %v4143 = vld [vmem:[#allocation14 + $0x318] sm:$0xff]
    %v4144 = vld [vmem:[#allocation14 + $0x320] sm:$0xff]
    %v4145 = vld [vmem:[#allocation14 + $0x328] sm:$0xff]
    %v4146 = vld [vmem:[#allocation14 + $0x330] sm:$0xff]
    %v4147 = vld [vmem:[#allocation14 + $0x338] sm:$0xff]
    %v4148 = vld [vmem:[#allocation14 + $0x340] sm:$0xff]
    %v4149 = vld [vmem:[#allocation14 + $0x348] sm:$0xff]
    %v4150 = vld [vmem:[#allocation14 + $0x350] sm:$0xff]
    %v4151 = vld [vmem:[#allocation14 + $0x358] sm:$0xff]
    %v4152 = vld [vmem:[#allocation14 + $0x360] sm:$0xff]
    %v4153 = vld [vmem:[#allocation14 + $0x368] sm:$0xff]
    %v4154 = vld [vmem:[#allocation14 + $0x370] sm:$0xff]
    %v4155 = vld [vmem:[#allocation14 + $0x378] sm:$0xff]
    %v4156 = vld [vmem:[#allocation14 + $0x380] sm:$0xff]
    %v4157 = vld [vmem:[#allocation14 + $0x388] sm:$0xff]
    %v4158 = vld [vmem:[#allocation14 + $0x390] sm:$0xff]
    %v4159 = vld [vmem:[#allocation14 + $0x398] sm:$0xff]
    %v4160 = vld [vmem:[#allocation14 + $0x3a0] sm:$0xff]
    %v4161 = vld [vmem:[#allocation14 + $0x3a8] sm:$0xff]
    %v4162 = vld [vmem:[#allocation14 + $0x3b0] sm:$0xff]
    %v4163 = vld [vmem:[#allocation14 + $0x3b8] sm:$0xff]
    %v4164 = vld [vmem:[#allocation14 + $0x3c0] sm:$0xff]
    %v4165 = vld [vmem:[#allocation14 + $0x3c8] sm:$0xff]
    %v4166 = vld [vmem:[#allocation14 + $0x3d0] sm:$0xff]
    %v4167 = vld [vmem:[#allocation14 + $0x3d8] sm:$0xff]
    %v4168 = vld [vmem:[#allocation14 + $0x3e0] sm:$0xff]
    %v4169 = vld [vmem:[#allocation14 + $0x3e8] sm:$0xff]
    %v4170 = vld [vmem:[#allocation14 + $0x3f0] sm:$0xff]
    %v4171 = vld [vmem:[#allocation14 + $0x3f8] sm:$0xff]
    %v4172 = vld [vmem:[#allocation14 + $0x400] sm:$0xff]
    %v4173 = vld [vmem:[#allocation14 + $0x408] sm:$0xff]
    %v4174 = vld [vmem:[#allocation14 + $0x410] sm:$0xff]
    %v4175 = vld [vmem:[#allocation14 + $0x418] sm:$0xff]
    %v4176 = vld [vmem:[#allocation14 + $0x420] sm:$0xff]
    %v4177 = vld [vmem:[#allocation14 + $0x428] sm:$0xff]
    %v4178 = vld [vmem:[#allocation14 + $0x430] sm:$0xff]
    %v4179 = vld [vmem:[#allocation14 + $0x438] sm:$0xff]
    %v4180 = vld [vmem:[#allocation14 + $0x440] sm:$0xff]
    %v4181 = vld [vmem:[#allocation14 + $0x448] sm:$0xff]
    %v4182 = vld [vmem:[#allocation14 + $0x450] sm:$0xff]
    %v4183 = vld [vmem:[#allocation14 + $0x458] sm:$0xff]
    %v4184 = vld [vmem:[#allocation14 + $0x460] sm:$0xff]
    %v4185 = vld [vmem:[#allocation14 + $0x468] sm:$0xff]
    %v4186 = vld [vmem:[#allocation14 + $0x470] sm:$0xff]
    %v4187 = vld [vmem:[#allocation14 + $0x478] sm:$0xff]
    %v4188 = vld [vmem:[#allocation14 + $0x480] sm:$0xff]
    %v4189 = vld [vmem:[#allocation14 + $0x488] sm:$0xff]
    %v4190 = vld [vmem:[#allocation14 + $0x490] sm:$0xff]
    %v4191 = vld [vmem:[#allocation14 + $0x498] sm:$0xff]
    %v4192 = vld [vmem:[#allocation14 + $0x4a0] sm:$0xff]
    %v4193 = vld [vmem:[#allocation14 + $0x4a8] sm:$0xff]
    %v4194 = vld [vmem:[#allocation14 + $0x4b0] sm:$0xff]
    %v4195 = vld [vmem:[#allocation14 + $0x4b8] sm:$0xff]
    %v4196 = vld [vmem:[#allocation14 + $0x4c0] sm:$0xff]
    %v4197 = vld [vmem:[#allocation14 + $0x4c8] sm:$0xff]
    %v4198 = vld [vmem:[#allocation14 + $0x4d0] sm:$0xff]
    %v4199 = vld [vmem:[#allocation14 + $0x4d8] sm:$0xff]
    %v4200 = vld [vmem:[#allocation14 + $0x4e0] sm:$0xff]
    %v4201 = vld [vmem:[#allocation14 + $0x4e8] sm:$0xff]
    %v4202 = vld [vmem:[#allocation14 + $0x4f0] sm:$0xff]
    %v4203 = vld [vmem:[#allocation14 + $0x4f8] sm:$0xff]
    %v4204 = vld [vmem:[#allocation14 + $0x500] sm:$0xff]
    %v4205 = vld [vmem:[#allocation14 + $0x508] sm:$0xff]
    %v4206 = vld [vmem:[#allocation14 + $0x510] sm:$0xff]
    %v4207 = vld [vmem:[#allocation14 + $0x518] sm:$0xff]
    %v4208 = vld [vmem:[#allocation14 + $0x520] sm:$0xff]
    %v4209 = vld [vmem:[#allocation14 + $0x528] sm:$0xff]
    %v4210 = vld [vmem:[#allocation14 + $0x530] sm:$0xff]
    %v4211 = vld [vmem:[#allocation14 + $0x538] sm:$0xff]
    %v4212 = vld [vmem:[#allocation14 + $0x540] sm:$0xff]
    %v4213 = vld [vmem:[#allocation14 + $0x548] sm:$0xff]
    %v4214 = vld [vmem:[#allocation14 + $0x550] sm:$0xff]
    %v4215 = vld [vmem:[#allocation14 + $0x558] sm:$0xff]
    %v4216 = vld [vmem:[#allocation14 + $0x560] sm:$0xff]
    %v4217 = vld [vmem:[#allocation14 + $0x568] sm:$0xff]
    %v4218 = vld [vmem:[#allocation14 + $0x570] sm:$0xff]
    %v4219 = vld [vmem:[#allocation14 + $0x578] sm:$0xff]
    %v4220 = vld [vmem:[#allocation14 + $0x580] sm:$0xff]
    %v4221 = vld [vmem:[#allocation14 + $0x588] sm:$0xff]
    %v4222 = vld [vmem:[#allocation14 + $0x590] sm:$0xff]
    %v4223 = vld [vmem:[#allocation14 + $0x598] sm:$0xff]
    %v4224 = vld [vmem:[#allocation14 + $0x5a0] sm:$0xff]
    %v4225 = vld [vmem:[#allocation14 + $0x5a8] sm:$0xff]
    %v4226 = vld [vmem:[#allocation14 + $0x5b0] sm:$0xff]
    %v4227 = vld [vmem:[#allocation14 + $0x5b8] sm:$0xff]
    %v4228 = vld [vmem:[#allocation14 + $0x5c0] sm:$0xff]
    %v4229 = vld [vmem:[#allocation14 + $0x5c8] sm:$0xff]
    %v4230 = vld [vmem:[#allocation14 + $0x5d0] sm:$0xff]
    %v4231 = vld [vmem:[#allocation14 + $0x5d8] sm:$0xff]
    %v4232 = vld [vmem:[#allocation14 + $0x5e0] sm:$0xff]
    %v4233 = vld [vmem:[#allocation14 + $0x5e8] sm:$0xff]
    %v4234 = vld [vmem:[#allocation14 + $0x5f0] sm:$0xff]
    %v4235 = vld [vmem:[#allocation14 + $0x5f8] sm:$0xff]
    %v4236 = vld [vmem:[#allocation14 + $0x600] sm:$0xff]
    %v4237 = vld [vmem:[#allocation14 + $0x608] sm:$0xff]
    %v4238 = vld [vmem:[#allocation14 + $0x610] sm:$0xff]
    %v4239 = vld [vmem:[#allocation14 + $0x618] sm:$0xff]
    %v4240 = vld [vmem:[#allocation14 + $0x620] sm:$0xff]
    %v4241 = vld [vmem:[#allocation14 + $0x628] sm:$0xff]
    %v4242 = vld [vmem:[#allocation14 + $0x630] sm:$0xff]
    %v4243 = vld [vmem:[#allocation14 + $0x638] sm:$0xff]
    %v4244 = vld [vmem:[#allocation14 + $0x640] sm:$0xff]
    %v4245 = vld [vmem:[#allocation14 + $0x648] sm:$0xff]
    %v4246 = vld [vmem:[#allocation14 + $0x650] sm:$0xff]
    %v4247 = vld [vmem:[#allocation14 + $0x658] sm:$0xff]
    %v4248 = vld [vmem:[#allocation14 + $0x660] sm:$0xff]
    %v4249 = vld [vmem:[#allocation14 + $0x668] sm:$0xff]
    %v4250 = vld [vmem:[#allocation14 + $0x670] sm:$0xff]
    %v4251 = vld [vmem:[#allocation14 + $0x678] sm:$0xff]
    %v4252 = vld [vmem:[#allocation14 + $0x680] sm:$0xff]
    %v4253 = vld [vmem:[#allocation14 + $0x688] sm:$0xff]
    %v4254 = vld [vmem:[#allocation14 + $0x690] sm:$0xff]
    %v4255 = vld [vmem:[#allocation14 + $0x698] sm:$0xff]
    %v4256 = vld [vmem:[#allocation14 + $0x6a0] sm:$0xff]
    %v4257 = vld [vmem:[#allocation14 + $0x6a8] sm:$0xff]
    %v4258 = vld [vmem:[#allocation14 + $0x6b0] sm:$0xff]
    %v4259 = vld [vmem:[#allocation14 + $0x6b8] sm:$0xff]
    %v4260 = vld [vmem:[#allocation14 + $0x6c0] sm:$0xff]
    %v4261 = vld [vmem:[#allocation14 + $0x6c8] sm:$0xff]
    %v4262 = vld [vmem:[#allocation14 + $0x6d0] sm:$0xff]
    %v4263 = vld [vmem:[#allocation14 + $0x6d8] sm:$0xff]
    %v4264 = vld [vmem:[#allocation14 + $0x6e0] sm:$0xff]
    %v4265 = vld [vmem:[#allocation14 + $0x6e8] sm:$0xff]
    %v4266 = vld [vmem:[#allocation14 + $0x6f0] sm:$0xff]
    %v4267 = vld [vmem:[#allocation14 + $0x6f8] sm:$0xff]
    %v4268 = vld [vmem:[#allocation14 + $0x700] sm:$0xff]
    %v4269 = vld [vmem:[#allocation14 + $0x708] sm:$0xff]
    %v4270 = vld [vmem:[#allocation14 + $0x710] sm:$0xff]
    %v4271 = vld [vmem:[#allocation14 + $0x718] sm:$0xff]
    %v4272 = vld [vmem:[#allocation14 + $0x720] sm:$0xff]
    %v4273 = vld [vmem:[#allocation14 + $0x728] sm:$0xff]
    %v4274 = vld [vmem:[#allocation14 + $0x730] sm:$0xff]
    %v4275 = vld [vmem:[#allocation14 + $0x738] sm:$0xff]
    %v4276 = vld [vmem:[#allocation14 + $0x740] sm:$0xff]
    %v4277 = vld [vmem:[#allocation14 + $0x748] sm:$0xff]
    %v4278 = vld [vmem:[#allocation14 + $0x750] sm:$0xff]
    %v4279 = vld [vmem:[#allocation14 + $0x758] sm:$0xff]
    %v4280 = vld [vmem:[#allocation14 + $0x760] sm:$0xff]
    %v4281 = vld [vmem:[#allocation14 + $0x768] sm:$0xff]
    %v4282 = vld [vmem:[#allocation14 + $0x770] sm:$0xff]
    %v4283 = vld [vmem:[#allocation14 + $0x778] sm:$0xff]
    %v4284 = vld [vmem:[#allocation14 + $0x780] sm:$0xff]
    %v4285 = vld [vmem:[#allocation14 + $0x788] sm:$0xff]
    %v4286 = vld [vmem:[#allocation14 + $0x790] sm:$0xff]
    %v4287 = vld [vmem:[#allocation14 + $0x798] sm:$0xff]
    %v4288 = vld [vmem:[#allocation14 + $0x7a0] sm:$0xff]
    %v4289 = vld [vmem:[#allocation14 + $0x7a8] sm:$0xff]
    %v4290 = vld [vmem:[#allocation14 + $0x7b0] sm:$0xff]
    %v4291 = vld [vmem:[#allocation14 + $0x7b8] sm:$0xff]
    %v4292 = vld [vmem:[#allocation14 + $0x7c0] sm:$0xff]
    %v4293 = vld [vmem:[#allocation14 + $0x7c8] sm:$0xff]
    %v4294 = vld [vmem:[#allocation14 + $0x7d0] sm:$0xff]
    %v4295 = vld [vmem:[#allocation14 + $0x7d8] sm:$0xff]
    %v4296 = vld [vmem:[#allocation14 + $0x7e0] sm:$0xff]
    %v4297 = vld [vmem:[#allocation14 + $0x7e8] sm:$0xff]
    %v4298 = vld [vmem:[#allocation14 + $0x7f0] sm:$0xff]
    %v4299 = vld [vmem:[#allocation14 + $0x7f8] sm:$0xff]
    %v4300 = vld [vmem:[%s57] sm:$0xff]
    %v4302 = vlaneseq
    %v4303 = vshrl.u32 %v4302, 7
    %v4304 = vsub.s32 0, %v4303
    %v4305 = vrot.slane %v4300, %v4304
    %v4306 = vlaneseq
    %v4307 = vshrl.u32 %v4306, 7
    %v4308 = vsub.s32 1, %v4307
    %v4309 = vrot.slane %v4300, %v4308
    %v4310 = vlaneseq
    %v4311 = vshrl.u32 %v4310, 7
    %v4312 = vsub.s32 2, %v4311
    %v4313 = vrot.slane %v4300, %v4312
    %v4314 = vlaneseq
    %v4315 = vshrl.u32 %v4314, 7
    %v4316 = vsub.s32 3, %v4315
    %v4317 = vrot.slane %v4300, %v4316
    %v4318 = vlaneseq
    %v4319 = vshrl.u32 %v4318, 7
    %v4320 = vsub.s32 4, %v4319
    %v4321 = vrot.slane %v4300, %v4320
    %v4322 = vlaneseq
    %v4323 = vshrl.u32 %v4322, 7
    %v4324 = vsub.s32 5, %v4323
    %v4325 = vrot.slane %v4300, %v4324
    %v4326 = vlaneseq
    %v4327 = vshrl.u32 %v4326, 7
    %v4328 = vsub.s32 6, %v4327
    %v4329 = vrot.slane %v4300, %v4328
    %v4330 = vlaneseq
    %v4331 = vshrl.u32 %v4330, 7
    %v4332 = vsub.s32 7, %v4331
    %v4333 = vrot.slane %v4300, %v4332
    %v4598 = vunpack.c.l.b16 %v4044
    %v4599 = vunpack.c.h.b16 %v4044
    %v4600 = vunpack.c.l.b16 %v4045
    %v4601 = vunpack.c.h.b16 %v4045
    %v4602 = vunpack.c.l.b16 %v4046
    %v4603 = vunpack.c.h.b16 %v4046
    %v4604 = vunpack.c.l.b16 %v4047
    %v4605 = vunpack.c.h.b16 %v4047
    %v4606 = vunpack.c.l.b16 %v4048
    %v4607 = vunpack.c.h.b16 %v4048
    %v4608 = vunpack.c.l.b16 %v4049
    %v4609 = vunpack.c.h.b16 %v4049
    %v4610 = vunpack.c.l.b16 %v4050
    %v4611 = vunpack.c.h.b16 %v4050
    %v4612 = vunpack.c.l.b16 %v4051
    %v4613 = vunpack.c.h.b16 %v4051
    %v4614 = vunpack.c.l.b16 %v4052
    %v4615 = vunpack.c.h.b16 %v4052
    %v4616 = vunpack.c.l.b16 %v4053
    %v4617 = vunpack.c.h.b16 %v4053
    %v4618 = vunpack.c.l.b16 %v4054
    %v4619 = vunpack.c.h.b16 %v4054
    %v4620 = vunpack.c.l.b16 %v4055
    %v4621 = vunpack.c.h.b16 %v4055
    %v4622 = vunpack.c.l.b16 %v4056
    %v4623 = vunpack.c.h.b16 %v4056
    %v4624 = vunpack.c.l.b16 %v4057
    %v4625 = vunpack.c.h.b16 %v4057
    %v4626 = vunpack.c.l.b16 %v4058
    %v4627 = vunpack.c.h.b16 %v4058
    %v4628 = vunpack.c.l.b16 %v4059
    %v4629 = vunpack.c.h.b16 %v4059
    %v4630 = vunpack.c.l.b16 %v4060
    %v4631 = vunpack.c.h.b16 %v4060
    %v4632 = vunpack.c.l.b16 %v4061
    %v4633 = vunpack.c.h.b16 %v4061
    %v4634 = vunpack.c.l.b16 %v4062
    %v4635 = vunpack.c.h.b16 %v4062
    %v4636 = vunpack.c.l.b16 %v4063
    %v4637 = vunpack.c.h.b16 %v4063
    %v4638 = vunpack.c.l.b16 %v4064
    %v4639 = vunpack.c.h.b16 %v4064
    %v4640 = vunpack.c.l.b16 %v4065
    %v4641 = vunpack.c.h.b16 %v4065
    %v4642 = vunpack.c.l.b16 %v4066
    %v4643 = vunpack.c.h.b16 %v4066
    %v4644 = vunpack.c.l.b16 %v4067
    %v4645 = vunpack.c.h.b16 %v4067
    %v4646 = vunpack.c.l.b16 %v4068
    %v4647 = vunpack.c.h.b16 %v4068
    %v4648 = vunpack.c.l.b16 %v4069
    %v4649 = vunpack.c.h.b16 %v4069
    %v4650 = vunpack.c.l.b16 %v4070
    %v4651 = vunpack.c.h.b16 %v4070
    %v4652 = vunpack.c.l.b16 %v4071
    %v4653 = vunpack.c.h.b16 %v4071
    %v4654 = vunpack.c.l.b16 %v4072
    %v4655 = vunpack.c.h.b16 %v4072
    %v4656 = vunpack.c.l.b16 %v4073
    %v4657 = vunpack.c.h.b16 %v4073
    %v4658 = vunpack.c.l.b16 %v4074
    %v4659 = vunpack.c.h.b16 %v4074
    %v4660 = vunpack.c.l.b16 %v4075
    %v4661 = vunpack.c.h.b16 %v4075
    %v4662 = vunpack.c.l.b16 %v4076
    %v4663 = vunpack.c.h.b16 %v4076
    %v4664 = vunpack.c.l.b16 %v4077
    %v4665 = vunpack.c.h.b16 %v4077
    %v4666 = vunpack.c.l.b16 %v4078
    %v4667 = vunpack.c.h.b16 %v4078
    %v4668 = vunpack.c.l.b16 %v4079
    %v4669 = vunpack.c.h.b16 %v4079
    %v4670 = vunpack.c.l.b16 %v4080
    %v4671 = vunpack.c.h.b16 %v4080
    %v4672 = vunpack.c.l.b16 %v4081
    %v4673 = vunpack.c.h.b16 %v4081
    %v4674 = vunpack.c.l.b16 %v4082
    %v4675 = vunpack.c.h.b16 %v4082
    %v4676 = vunpack.c.l.b16 %v4083
    %v4677 = vunpack.c.h.b16 %v4083
    %v4678 = vunpack.c.l.b16 %v4084
    %v4679 = vunpack.c.h.b16 %v4084
    %v4680 = vunpack.c.l.b16 %v4085
    %v4681 = vunpack.c.h.b16 %v4085
    %v4682 = vunpack.c.l.b16 %v4086
    %v4683 = vunpack.c.h.b16 %v4086
    %v4684 = vunpack.c.l.b16 %v4087
    %v4685 = vunpack.c.h.b16 %v4087
    %v4686 = vunpack.c.l.b16 %v4088
    %v4687 = vunpack.c.h.b16 %v4088
    %v4688 = vunpack.c.l.b16 %v4089
    %v4689 = vunpack.c.h.b16 %v4089
    %v4690 = vunpack.c.l.b16 %v4090
    %v4691 = vunpack.c.h.b16 %v4090
    %v4692 = vunpack.c.l.b16 %v4091
    %v4693 = vunpack.c.h.b16 %v4091
    %v4694 = vunpack.c.l.b16 %v4092
    %v4695 = vunpack.c.h.b16 %v4092
    %v4696 = vunpack.c.l.b16 %v4093
    %v4697 = vunpack.c.h.b16 %v4093
    %v4698 = vunpack.c.l.b16 %v4094
    %v4699 = vunpack.c.h.b16 %v4094
    %v4700 = vunpack.c.l.b16 %v4095
    %v4701 = vunpack.c.h.b16 %v4095
    %v4702 = vunpack.c.l.b16 %v4096
    %v4703 = vunpack.c.h.b16 %v4096
    %v4704 = vunpack.c.l.b16 %v4097
    %v4705 = vunpack.c.h.b16 %v4097
    %v4706 = vunpack.c.l.b16 %v4098
    %v4707 = vunpack.c.h.b16 %v4098
    %v4708 = vunpack.c.l.b16 %v4099
    %v4709 = vunpack.c.h.b16 %v4099
    %v4710 = vunpack.c.l.b16 %v4100
    %v4711 = vunpack.c.h.b16 %v4100
    %v4712 = vunpack.c.l.b16 %v4101
    %v4713 = vunpack.c.h.b16 %v4101
    %v4714 = vunpack.c.l.b16 %v4102
    %v4715 = vunpack.c.h.b16 %v4102
    %v4716 = vunpack.c.l.b16 %v4103
    %v4717 = vunpack.c.h.b16 %v4103
    %v4718 = vunpack.c.l.b16 %v4104
    %v4719 = vunpack.c.h.b16 %v4104
    %v4720 = vunpack.c.l.b16 %v4105
    %v4721 = vunpack.c.h.b16 %v4105
    %v4722 = vunpack.c.l.b16 %v4106
    %v4723 = vunpack.c.h.b16 %v4106
    %v4724 = vunpack.c.l.b16 %v4107
    %v4725 = vunpack.c.h.b16 %v4107
    %v4726 = vunpack.c.l.b16 %v4108
    %v4727 = vunpack.c.h.b16 %v4108
    %v4728 = vunpack.c.l.b16 %v4109
    %v4729 = vunpack.c.h.b16 %v4109
    %v4730 = vunpack.c.l.b16 %v4110
    %v4731 = vunpack.c.h.b16 %v4110
    %v4732 = vunpack.c.l.b16 %v4111
    %v4733 = vunpack.c.h.b16 %v4111
    %v4734 = vunpack.c.l.b16 %v4112
    %v4735 = vunpack.c.h.b16 %v4112
    %v4736 = vunpack.c.l.b16 %v4113
    %v4737 = vunpack.c.h.b16 %v4113
    %v4738 = vunpack.c.l.b16 %v4114
    %v4739 = vunpack.c.h.b16 %v4114
    %v4740 = vunpack.c.l.b16 %v4115
    %v4741 = vunpack.c.h.b16 %v4115
    %v4742 = vunpack.c.l.b16 %v4116
    %v4743 = vunpack.c.h.b16 %v4116
    %v4744 = vunpack.c.l.b16 %v4117
    %v4745 = vunpack.c.h.b16 %v4117
    %v4746 = vunpack.c.l.b16 %v4118
    %v4747 = vunpack.c.h.b16 %v4118
    %v4748 = vunpack.c.l.b16 %v4119
    %v4749 = vunpack.c.h.b16 %v4119
    %v4750 = vunpack.c.l.b16 %v4120
    %v4751 = vunpack.c.h.b16 %v4120
    %v4752 = vunpack.c.l.b16 %v4121
    %v4753 = vunpack.c.h.b16 %v4121
    %v4754 = vunpack.c.l.b16 %v4122
    %v4755 = vunpack.c.h.b16 %v4122
    %v4756 = vunpack.c.l.b16 %v4123
    %v4757 = vunpack.c.h.b16 %v4123
    %v4758 = vunpack.c.l.b16 %v4124
    %v4759 = vunpack.c.h.b16 %v4124
    %v4760 = vunpack.c.l.b16 %v4125
    %v4761 = vunpack.c.h.b16 %v4125
    %v4762 = vunpack.c.l.b16 %v4126
    %v4763 = vunpack.c.h.b16 %v4126
    %v4764 = vunpack.c.l.b16 %v4127
    %v4765 = vunpack.c.h.b16 %v4127
    %v4766 = vunpack.c.l.b16 %v4128
    %v4767 = vunpack.c.h.b16 %v4128
    %v4768 = vunpack.c.l.b16 %v4129
    %v4769 = vunpack.c.h.b16 %v4129
    %v4770 = vunpack.c.l.b16 %v4130
    %v4771 = vunpack.c.h.b16 %v4130
    %v4772 = vunpack.c.l.b16 %v4131
    %v4773 = vunpack.c.h.b16 %v4131
    %v4774 = vunpack.c.l.b16 %v4132
    %v4775 = vunpack.c.h.b16 %v4132
    %v4776 = vunpack.c.l.b16 %v4133
    %v4777 = vunpack.c.h.b16 %v4133
    %v4778 = vunpack.c.l.b16 %v4134
    %v4779 = vunpack.c.h.b16 %v4134
    %v4780 = vunpack.c.l.b16 %v4135
    %v4781 = vunpack.c.h.b16 %v4135
    %v4782 = vunpack.c.l.b16 %v4136
    %v4783 = vunpack.c.h.b16 %v4136
    %v4784 = vunpack.c.l.b16 %v4137
    %v4785 = vunpack.c.h.b16 %v4137
    %v4786 = vunpack.c.l.b16 %v4138
    %v4787 = vunpack.c.h.b16 %v4138
    %v4788 = vunpack.c.l.b16 %v4139
    %v4789 = vunpack.c.h.b16 %v4139
    %v4790 = vunpack.c.l.b16 %v4140
    %v4791 = vunpack.c.h.b16 %v4140
    %v4792 = vunpack.c.l.b16 %v4141
    %v4793 = vunpack.c.h.b16 %v4141
    %v4794 = vunpack.c.l.b16 %v4142
    %v4795 = vunpack.c.h.b16 %v4142
    %v4796 = vunpack.c.l.b16 %v4143
    %v4797 = vunpack.c.h.b16 %v4143
    %v4798 = vunpack.c.l.b16 %v4144
    %v4799 = vunpack.c.h.b16 %v4144
    %v4800 = vunpack.c.l.b16 %v4145
    %v4801 = vunpack.c.h.b16 %v4145
    %v4802 = vunpack.c.l.b16 %v4146
    %v4803 = vunpack.c.h.b16 %v4146
    %v4804 = vunpack.c.l.b16 %v4147
    %v4805 = vunpack.c.h.b16 %v4147
    %v4806 = vunpack.c.l.b16 %v4148
    %v4807 = vunpack.c.h.b16 %v4148
    %v4808 = vunpack.c.l.b16 %v4149
    %v4809 = vunpack.c.h.b16 %v4149
    %v4810 = vunpack.c.l.b16 %v4150
    %v4811 = vunpack.c.h.b16 %v4150
    %v4812 = vunpack.c.l.b16 %v4151
    %v4813 = vunpack.c.h.b16 %v4151
    %v4814 = vunpack.c.l.b16 %v4152
    %v4815 = vunpack.c.h.b16 %v4152
    %v4816 = vunpack.c.l.b16 %v4153
    %v4817 = vunpack.c.h.b16 %v4153
    %v4818 = vunpack.c.l.b16 %v4154
    %v4819 = vunpack.c.h.b16 %v4154
    %v4820 = vunpack.c.l.b16 %v4155
    %v4821 = vunpack.c.h.b16 %v4155
    %v4822 = vunpack.c.l.b16 %v4156
    %v4823 = vunpack.c.h.b16 %v4156
    %v4824 = vunpack.c.l.b16 %v4157
    %v4825 = vunpack.c.h.b16 %v4157
    %v4826 = vunpack.c.l.b16 %v4158
    %v4827 = vunpack.c.h.b16 %v4158
    %v4828 = vunpack.c.l.b16 %v4159
    %v4829 = vunpack.c.h.b16 %v4159
    %v4830 = vunpack.c.l.b16 %v4160
    %v4831 = vunpack.c.h.b16 %v4160
    %v4832 = vunpack.c.l.b16 %v4161
    %v4833 = vunpack.c.h.b16 %v4161
    %v4834 = vunpack.c.l.b16 %v4162
    %v4835 = vunpack.c.h.b16 %v4162
    %v4836 = vunpack.c.l.b16 %v4163
    %v4837 = vunpack.c.h.b16 %v4163
    %v4838 = vunpack.c.l.b16 %v4164
    %v4839 = vunpack.c.h.b16 %v4164
    %v4840 = vunpack.c.l.b16 %v4165
    %v4841 = vunpack.c.h.b16 %v4165
    %v4842 = vunpack.c.l.b16 %v4166
    %v4843 = vunpack.c.h.b16 %v4166
    %v4844 = vunpack.c.l.b16 %v4167
    %v4845 = vunpack.c.h.b16 %v4167
    %v4846 = vunpack.c.l.b16 %v4168
    %v4847 = vunpack.c.h.b16 %v4168
    %v4848 = vunpack.c.l.b16 %v4169
    %v4849 = vunpack.c.h.b16 %v4169
    %v4850 = vunpack.c.l.b16 %v4170
    %v4851 = vunpack.c.h.b16 %v4170
    %v4852 = vunpack.c.l.b16 %v4171
    %v4853 = vunpack.c.h.b16 %v4171
    %v4854 = vunpack.c.l.b16 %v4172
    %v4855 = vunpack.c.h.b16 %v4172
    %v4856 = vunpack.c.l.b16 %v4173
    %v4857 = vunpack.c.h.b16 %v4173
    %v4858 = vunpack.c.l.b16 %v4174
    %v4859 = vunpack.c.h.b16 %v4174
    %v4860 = vunpack.c.l.b16 %v4175
    %v4861 = vunpack.c.h.b16 %v4175
    %v4862 = vunpack.c.l.b16 %v4176
    %v4863 = vunpack.c.h.b16 %v4176
    %v4864 = vunpack.c.l.b16 %v4177
    %v4865 = vunpack.c.h.b16 %v4177
    %v4866 = vunpack.c.l.b16 %v4178
    %v4867 = vunpack.c.h.b16 %v4178
    %v4868 = vunpack.c.l.b16 %v4179
    %v4869 = vunpack.c.h.b16 %v4179
    %v4870 = vunpack.c.l.b16 %v4180
    %v4871 = vunpack.c.h.b16 %v4180
    %v4872 = vunpack.c.l.b16 %v4181
    %v4873 = vunpack.c.h.b16 %v4181
    %v4874 = vunpack.c.l.b16 %v4182
    %v4875 = vunpack.c.h.b16 %v4182
    %v4876 = vunpack.c.l.b16 %v4183
    %v4877 = vunpack.c.h.b16 %v4183
    %v4878 = vunpack.c.l.b16 %v4184
    %v4879 = vunpack.c.h.b16 %v4184
    %v4880 = vunpack.c.l.b16 %v4185
    %v4881 = vunpack.c.h.b16 %v4185
    %v4882 = vunpack.c.l.b16 %v4186
    %v4883 = vunpack.c.h.b16 %v4186
    %v4884 = vunpack.c.l.b16 %v4187
    %v4885 = vunpack.c.h.b16 %v4187
    %v4886 = vunpack.c.l.b16 %v4188
    %v4887 = vunpack.c.h.b16 %v4188
    %v4888 = vunpack.c.l.b16 %v4189
    %v4889 = vunpack.c.h.b16 %v4189
    %v4890 = vunpack.c.l.b16 %v4190
    %v4891 = vunpack.c.h.b16 %v4190
    %v4892 = vunpack.c.l.b16 %v4191
    %v4893 = vunpack.c.h.b16 %v4191
    %v4894 = vunpack.c.l.b16 %v4192
    %v4895 = vunpack.c.h.b16 %v4192
    %v4896 = vunpack.c.l.b16 %v4193
    %v4897 = vunpack.c.h.b16 %v4193
    %v4898 = vunpack.c.l.b16 %v4194
    %v4899 = vunpack.c.h.b16 %v4194
    %v4900 = vunpack.c.l.b16 %v4195
    %v4901 = vunpack.c.h.b16 %v4195
    %v4902 = vunpack.c.l.b16 %v4196
    %v4903 = vunpack.c.h.b16 %v4196
    %v4904 = vunpack.c.l.b16 %v4197
    %v4905 = vunpack.c.h.b16 %v4197
    %v4906 = vunpack.c.l.b16 %v4198
    %v4907 = vunpack.c.h.b16 %v4198
    %v4908 = vunpack.c.l.b16 %v4199
    %v4909 = vunpack.c.h.b16 %v4199
    %v4910 = vunpack.c.l.b16 %v4200
    %v4911 = vunpack.c.h.b16 %v4200
    %v4912 = vunpack.c.l.b16 %v4201
    %v4913 = vunpack.c.h.b16 %v4201
    %v4914 = vunpack.c.l.b16 %v4202
    %v4915 = vunpack.c.h.b16 %v4202
    %v4916 = vunpack.c.l.b16 %v4203
    %v4917 = vunpack.c.h.b16 %v4203
    %v4918 = vunpack.c.l.b16 %v4204
    %v4919 = vunpack.c.h.b16 %v4204
    %v4920 = vunpack.c.l.b16 %v4205
    %v4921 = vunpack.c.h.b16 %v4205
    %v4922 = vunpack.c.l.b16 %v4206
    %v4923 = vunpack.c.h.b16 %v4206
    %v4924 = vunpack.c.l.b16 %v4207
    %v4925 = vunpack.c.h.b16 %v4207
    %v4926 = vunpack.c.l.b16 %v4208
    %v4927 = vunpack.c.h.b16 %v4208
    %v4928 = vunpack.c.l.b16 %v4209
    %v4929 = vunpack.c.h.b16 %v4209
    %v4930 = vunpack.c.l.b16 %v4210
    %v4931 = vunpack.c.h.b16 %v4210
    %v4932 = vunpack.c.l.b16 %v4211
    %v4933 = vunpack.c.h.b16 %v4211
    %v4934 = vunpack.c.l.b16 %v4212
    %v4935 = vunpack.c.h.b16 %v4212
    %v4936 = vunpack.c.l.b16 %v4213
    %v4937 = vunpack.c.h.b16 %v4213
    %v4938 = vunpack.c.l.b16 %v4214
    %v4939 = vunpack.c.h.b16 %v4214
    %v4940 = vunpack.c.l.b16 %v4215
    %v4941 = vunpack.c.h.b16 %v4215
    %v4942 = vunpack.c.l.b16 %v4216
    %v4943 = vunpack.c.h.b16 %v4216
    %v4944 = vunpack.c.l.b16 %v4217
    %v4945 = vunpack.c.h.b16 %v4217
    %v4946 = vunpack.c.l.b16 %v4218
    %v4947 = vunpack.c.h.b16 %v4218
    %v4948 = vunpack.c.l.b16 %v4219
    %v4949 = vunpack.c.h.b16 %v4219
    %v4950 = vunpack.c.l.b16 %v4220
    %v4951 = vunpack.c.h.b16 %v4220
    %v4952 = vunpack.c.l.b16 %v4221
    %v4953 = vunpack.c.h.b16 %v4221
    %v4954 = vunpack.c.l.b16 %v4222
    %v4955 = vunpack.c.h.b16 %v4222
    %v4956 = vunpack.c.l.b16 %v4223
    %v4957 = vunpack.c.h.b16 %v4223
    %v4958 = vunpack.c.l.b16 %v4224
    %v4959 = vunpack.c.h.b16 %v4224
    %v4960 = vunpack.c.l.b16 %v4225
    %v4961 = vunpack.c.h.b16 %v4225
    %v4962 = vunpack.c.l.b16 %v4226
    %v4963 = vunpack.c.h.b16 %v4226
    %v4964 = vunpack.c.l.b16 %v4227
    %v4965 = vunpack.c.h.b16 %v4227
    %v4966 = vunpack.c.l.b16 %v4228
    %v4967 = vunpack.c.h.b16 %v4228
    %v4968 = vunpack.c.l.b16 %v4229
    %v4969 = vunpack.c.h.b16 %v4229
    %v4970 = vunpack.c.l.b16 %v4230
    %v4971 = vunpack.c.h.b16 %v4230
    %v4972 = vunpack.c.l.b16 %v4231
    %v4973 = vunpack.c.h.b16 %v4231
    %v4974 = vunpack.c.l.b16 %v4232
    %v4975 = vunpack.c.h.b16 %v4232
    %v4976 = vunpack.c.l.b16 %v4233
    %v4977 = vunpack.c.h.b16 %v4233
    %v4978 = vunpack.c.l.b16 %v4234
    %v4979 = vunpack.c.h.b16 %v4234
    %v4980 = vunpack.c.l.b16 %v4235
    %v4981 = vunpack.c.h.b16 %v4235
    %v4982 = vunpack.c.l.b16 %v4236
    %v4983 = vunpack.c.h.b16 %v4236
    %v4984 = vunpack.c.l.b16 %v4237
    %v4985 = vunpack.c.h.b16 %v4237
    %v4986 = vunpack.c.l.b16 %v4238
    %v4987 = vunpack.c.h.b16 %v4238
    %v4988 = vunpack.c.l.b16 %v4239
    %v4989 = vunpack.c.h.b16 %v4239
    %v4990 = vunpack.c.l.b16 %v4240
    %v4991 = vunpack.c.h.b16 %v4240
    %v4992 = vunpack.c.l.b16 %v4241
    %v4993 = vunpack.c.h.b16 %v4241
    %v4994 = vunpack.c.l.b16 %v4242
    %v4995 = vunpack.c.h.b16 %v4242
    %v4996 = vunpack.c.l.b16 %v4243
    %v4997 = vunpack.c.h.b16 %v4243
    %v4998 = vunpack.c.l.b16 %v4244
    %v4999 = vunpack.c.h.b16 %v4244
    %v5000 = vunpack.c.l.b16 %v4245
    %v5001 = vunpack.c.h.b16 %v4245
    %v5002 = vunpack.c.l.b16 %v4246
    %v5003 = vunpack.c.h.b16 %v4246
    %v5004 = vunpack.c.l.b16 %v4247
    %v5005 = vunpack.c.h.b16 %v4247
    %v5006 = vunpack.c.l.b16 %v4248
    %v5007 = vunpack.c.h.b16 %v4248
    %v5008 = vunpack.c.l.b16 %v4249
    %v5009 = vunpack.c.h.b16 %v4249
    %v5010 = vunpack.c.l.b16 %v4250
    %v5011 = vunpack.c.h.b16 %v4250
    %v5012 = vunpack.c.l.b16 %v4251
    %v5013 = vunpack.c.h.b16 %v4251
    %v5014 = vunpack.c.l.b16 %v4252
    %v5015 = vunpack.c.h.b16 %v4252
    %v5016 = vunpack.c.l.b16 %v4253
    %v5017 = vunpack.c.h.b16 %v4253
    %v5018 = vunpack.c.l.b16 %v4254
    %v5019 = vunpack.c.h.b16 %v4254
    %v5020 = vunpack.c.l.b16 %v4255
    %v5021 = vunpack.c.h.b16 %v4255
    %v5022 = vunpack.c.l.b16 %v4256
    %v5023 = vunpack.c.h.b16 %v4256
    %v5024 = vunpack.c.l.b16 %v4257
    %v5025 = vunpack.c.h.b16 %v4257
    %v5026 = vunpack.c.l.b16 %v4258
    %v5027 = vunpack.c.h.b16 %v4258
    %v5028 = vunpack.c.l.b16 %v4259
    %v5029 = vunpack.c.h.b16 %v4259
    %v5030 = vunpack.c.l.b16 %v4260
    %v5031 = vunpack.c.h.b16 %v4260
    %v5032 = vunpack.c.l.b16 %v4261
    %v5033 = vunpack.c.h.b16 %v4261
    %v5034 = vunpack.c.l.b16 %v4262
    %v5035 = vunpack.c.h.b16 %v4262
    %v5036 = vunpack.c.l.b16 %v4263
    %v5037 = vunpack.c.h.b16 %v4263
    %v5038 = vunpack.c.l.b16 %v4264
    %v5039 = vunpack.c.h.b16 %v4264
    %v5040 = vunpack.c.l.b16 %v4265
    %v5041 = vunpack.c.h.b16 %v4265
    %v5042 = vunpack.c.l.b16 %v4266
    %v5043 = vunpack.c.h.b16 %v4266
    %v5044 = vunpack.c.l.b16 %v4267
    %v5045 = vunpack.c.h.b16 %v4267
    %v5046 = vunpack.c.l.b16 %v4268
    %v5047 = vunpack.c.h.b16 %v4268
    %v5048 = vunpack.c.l.b16 %v4269
    %v5049 = vunpack.c.h.b16 %v4269
    %v5050 = vunpack.c.l.b16 %v4270
    %v5051 = vunpack.c.h.b16 %v4270
    %v5052 = vunpack.c.l.b16 %v4271
    %v5053 = vunpack.c.h.b16 %v4271
    %v5054 = vunpack.c.l.b16 %v4272
    %v5055 = vunpack.c.h.b16 %v4272
    %v5056 = vunpack.c.l.b16 %v4273
    %v5057 = vunpack.c.h.b16 %v4273
    %v5058 = vunpack.c.l.b16 %v4274
    %v5059 = vunpack.c.h.b16 %v4274
    %v5060 = vunpack.c.l.b16 %v4275
    %v5061 = vunpack.c.h.b16 %v4275
    %v5062 = vunpack.c.l.b16 %v4276
    %v5063 = vunpack.c.h.b16 %v4276
    %v5064 = vunpack.c.l.b16 %v4277
    %v5065 = vunpack.c.h.b16 %v4277
    %v5066 = vunpack.c.l.b16 %v4278
    %v5067 = vunpack.c.h.b16 %v4278
    %v5068 = vunpack.c.l.b16 %v4279
    %v5069 = vunpack.c.h.b16 %v4279
    %v5070 = vunpack.c.l.b16 %v4280
    %v5071 = vunpack.c.h.b16 %v4280
    %v5072 = vunpack.c.l.b16 %v4281
    %v5073 = vunpack.c.h.b16 %v4281
    %v5074 = vunpack.c.l.b16 %v4282
    %v5075 = vunpack.c.h.b16 %v4282
    %v5076 = vunpack.c.l.b16 %v4283
    %v5077 = vunpack.c.h.b16 %v4283
    %v5078 = vunpack.c.l.b16 %v4284
    %v5079 = vunpack.c.h.b16 %v4284
    %v5080 = vunpack.c.l.b16 %v4285
    %v5081 = vunpack.c.h.b16 %v4285
    %v5082 = vunpack.c.l.b16 %v4286
    %v5083 = vunpack.c.h.b16 %v4286
    %v5084 = vunpack.c.l.b16 %v4287
    %v5085 = vunpack.c.h.b16 %v4287
    %v5086 = vunpack.c.l.b16 %v4288
    %v5087 = vunpack.c.h.b16 %v4288
    %v5088 = vunpack.c.l.b16 %v4289
    %v5089 = vunpack.c.h.b16 %v4289
    %v5090 = vunpack.c.l.b16 %v4290
    %v5091 = vunpack.c.h.b16 %v4290
    %v5092 = vunpack.c.l.b16 %v4291
    %v5093 = vunpack.c.h.b16 %v4291
    %v5094 = vunpack.c.l.b16 %v4292
    %v5095 = vunpack.c.h.b16 %v4292
    %v5096 = vunpack.c.l.b16 %v4293
    %v5097 = vunpack.c.h.b16 %v4293
    %v5098 = vunpack.c.l.b16 %v4294
    %v5099 = vunpack.c.h.b16 %v4294
    %v5100 = vunpack.c.l.b16 %v4295
    %v5101 = vunpack.c.h.b16 %v4295
    %v5102 = vunpack.c.l.b16 %v4296
    %v5103 = vunpack.c.h.b16 %v4296
    %v5104 = vunpack.c.l.b16 %v4297
    %v5105 = vunpack.c.h.b16 %v4297
    %v5106 = vunpack.c.l.b16 %v4298
    %v5107 = vunpack.c.h.b16 %v4298
    %v5108 = vunpack.c.l.b16 %v4299
    %v5109 = vunpack.c.h.b16 %v4299
    %v5110 = vpack.c.b16 %v4606, %v4598
    %v5111 = vpack.c.b16 %v4607, %v4599
    %v5112 = vpack.c.b16 %v4608, %v4600
    %v5113 = vpack.c.b16 %v4609, %v4601
    %v5114 = vpack.c.b16 %v4610, %v4602
    %v5115 = vpack.c.b16 %v4611, %v4603
    %v5116 = vpack.c.b16 %v4612, %v4604
    %v5117 = vpack.c.b16 %v4613, %v4605
    %v5118 = vpack.c.b16 %v4622, %v4614
    %v5119 = vpack.c.b16 %v4623, %v4615
    %v5120 = vpack.c.b16 %v4624, %v4616
    %v5121 = vpack.c.b16 %v4625, %v4617
    %v5122 = vpack.c.b16 %v4626, %v4618
    %v5123 = vpack.c.b16 %v4627, %v4619
    %v5124 = vpack.c.b16 %v4628, %v4620
    %v5125 = vpack.c.b16 %v4629, %v4621
    %v5126 = vpack.c.b16 %v4638, %v4630
    %v5127 = vpack.c.b16 %v4639, %v4631
    %v5128 = vpack.c.b16 %v4640, %v4632
    %v5129 = vpack.c.b16 %v4641, %v4633
    %v5130 = vpack.c.b16 %v4642, %v4634
    %v5131 = vpack.c.b16 %v4643, %v4635
    %v5132 = vpack.c.b16 %v4644, %v4636
    %v5133 = vpack.c.b16 %v4645, %v4637
    %v5134 = vpack.c.b16 %v4654, %v4646
    %v5135 = vpack.c.b16 %v4655, %v4647
    %v5136 = vpack.c.b16 %v4656, %v4648
    %v5137 = vpack.c.b16 %v4657, %v4649
    %v5138 = vpack.c.b16 %v4658, %v4650
    %v5139 = vpack.c.b16 %v4659, %v4651
    %v5140 = vpack.c.b16 %v4660, %v4652
    %v5141 = vpack.c.b16 %v4661, %v4653
    %v5142 = vpack.c.b16 %v4670, %v4662
    %v5143 = vpack.c.b16 %v4671, %v4663
    %v5144 = vpack.c.b16 %v4672, %v4664
    %v5145 = vpack.c.b16 %v4673, %v4665
    %v5146 = vpack.c.b16 %v4674, %v4666
    %v5147 = vpack.c.b16 %v4675, %v4667
    %v5148 = vpack.c.b16 %v4676, %v4668
    %v5149 = vpack.c.b16 %v4677, %v4669
    %v5150 = vpack.c.b16 %v4686, %v4678
    %v5151 = vpack.c.b16 %v4687, %v4679
    %v5152 = vpack.c.b16 %v4688, %v4680
    %v5153 = vpack.c.b16 %v4689, %v4681
    %v5154 = vpack.c.b16 %v4690, %v4682
    %v5155 = vpack.c.b16 %v4691, %v4683
    %v5156 = vpack.c.b16 %v4692, %v4684
    %v5157 = vpack.c.b16 %v4693, %v4685
    %v5158 = vpack.c.b16 %v4702, %v4694
    %v5159 = vpack.c.b16 %v4703, %v4695
    %v5160 = vpack.c.b16 %v4704, %v4696
    %v5161 = vpack.c.b16 %v4705, %v4697
    %v5162 = vpack.c.b16 %v4706, %v4698
    %v5163 = vpack.c.b16 %v4707, %v4699
    %v5164 = vpack.c.b16 %v4708, %v4700
    %v5165 = vpack.c.b16 %v4709, %v4701
    %v5166 = vpack.c.b16 %v4718, %v4710
    %v5167 = vpack.c.b16 %v4719, %v4711
    %v5168 = vpack.c.b16 %v4720, %v4712
    %v5169 = vpack.c.b16 %v4721, %v4713
    %v5170 = vpack.c.b16 %v4722, %v4714
    %v5171 = vpack.c.b16 %v4723, %v4715
    %v5172 = vpack.c.b16 %v4724, %v4716
    %v5173 = vpack.c.b16 %v4725, %v4717
    %v5174 = vpack.c.b16 %v4734, %v4726
    %v5175 = vpack.c.b16 %v4735, %v4727
    %v5176 = vpack.c.b16 %v4736, %v4728
    %v5177 = vpack.c.b16 %v4737, %v4729
    %v5178 = vpack.c.b16 %v4738, %v4730
    %v5179 = vpack.c.b16 %v4739, %v4731
    %v5180 = vpack.c.b16 %v4740, %v4732
    %v5181 = vpack.c.b16 %v4741, %v4733
    %v5182 = vpack.c.b16 %v4750, %v4742
    %v5183 = vpack.c.b16 %v4751, %v4743
    %v5184 = vpack.c.b16 %v4752, %v4744
    %v5185 = vpack.c.b16 %v4753, %v4745
    %v5186 = vpack.c.b16 %v4754, %v4746
    %v5187 = vpack.c.b16 %v4755, %v4747
    %v5188 = vpack.c.b16 %v4756, %v4748
    %v5189 = vpack.c.b16 %v4757, %v4749
    %v5190 = vpack.c.b16 %v4766, %v4758
    %v5191 = vpack.c.b16 %v4767, %v4759
    %v5192 = vpack.c.b16 %v4768, %v4760
    %v5193 = vpack.c.b16 %v4769, %v4761
    %v5194 = vpack.c.b16 %v4770, %v4762
    %v5195 = vpack.c.b16 %v4771, %v4763
    %v5196 = vpack.c.b16 %v4772, %v4764
    %v5197 = vpack.c.b16 %v4773, %v4765
    %v5198 = vpack.c.b16 %v4782, %v4774
    %v5199 = vpack.c.b16 %v4783, %v4775
    %v5200 = vpack.c.b16 %v4784, %v4776
    %v5201 = vpack.c.b16 %v4785, %v4777
    %v5202 = vpack.c.b16 %v4786, %v4778
    %v5203 = vpack.c.b16 %v4787, %v4779
    %v5204 = vpack.c.b16 %v4788, %v4780
    %v5205 = vpack.c.b16 %v4789, %v4781
    %v5206 = vpack.c.b16 %v4798, %v4790
    %v5207 = vpack.c.b16 %v4799, %v4791
    %v5208 = vpack.c.b16 %v4800, %v4792
    %v5209 = vpack.c.b16 %v4801, %v4793
    %v5210 = vpack.c.b16 %v4802, %v4794
    %v5211 = vpack.c.b16 %v4803, %v4795
    %v5212 = vpack.c.b16 %v4804, %v4796
    %v5213 = vpack.c.b16 %v4805, %v4797
    %v5214 = vpack.c.b16 %v4814, %v4806
    %v5215 = vpack.c.b16 %v4815, %v4807
    %v5216 = vpack.c.b16 %v4816, %v4808
    %v5217 = vpack.c.b16 %v4817, %v4809
    %v5218 = vpack.c.b16 %v4818, %v4810
    %v5219 = vpack.c.b16 %v4819, %v4811
    %v5220 = vpack.c.b16 %v4820, %v4812
    %v5221 = vpack.c.b16 %v4821, %v4813
    %v5222 = vpack.c.b16 %v4830, %v4822
    %v5223 = vpack.c.b16 %v4831, %v4823
    %v5224 = vpack.c.b16 %v4832, %v4824
    %v5225 = vpack.c.b16 %v4833, %v4825
    %v5226 = vpack.c.b16 %v4834, %v4826
    %v5227 = vpack.c.b16 %v4835, %v4827
    %v5228 = vpack.c.b16 %v4836, %v4828
    %v5229 = vpack.c.b16 %v4837, %v4829
    %v5230 = vpack.c.b16 %v4846, %v4838
    %v5231 = vpack.c.b16 %v4847, %v4839
    %v5232 = vpack.c.b16 %v4848, %v4840
    %v5233 = vpack.c.b16 %v4849, %v4841
    %v5234 = vpack.c.b16 %v4850, %v4842
    %v5235 = vpack.c.b16 %v4851, %v4843
    %v5236 = vpack.c.b16 %v4852, %v4844
    %v5237 = vpack.c.b16 %v4853, %v4845
    %v5238 = vpack.c.b16 %v4862, %v4854
    %v5239 = vpack.c.b16 %v4863, %v4855
    %v5240 = vpack.c.b16 %v4864, %v4856
    %v5241 = vpack.c.b16 %v4865, %v4857
    %v5242 = vpack.c.b16 %v4866, %v4858
    %v5243 = vpack.c.b16 %v4867, %v4859
    %v5244 = vpack.c.b16 %v4868, %v4860
    %v5245 = vpack.c.b16 %v4869, %v4861
    %v5246 = vpack.c.b16 %v4878, %v4870
    %v5247 = vpack.c.b16 %v4879, %v4871
    %v5248 = vpack.c.b16 %v4880, %v4872
    %v5249 = vpack.c.b16 %v4881, %v4873
    %v5250 = vpack.c.b16 %v4882, %v4874
    %v5251 = vpack.c.b16 %v4883, %v4875
    %v5252 = vpack.c.b16 %v4884, %v4876
    %v5253 = vpack.c.b16 %v4885, %v4877
    %v5254 = vpack.c.b16 %v4894, %v4886
    %v5255 = vpack.c.b16 %v4895, %v4887
    %v5256 = vpack.c.b16 %v4896, %v4888
    %v5257 = vpack.c.b16 %v4897, %v4889
    %v5258 = vpack.c.b16 %v4898, %v4890
    %v5259 = vpack.c.b16 %v4899, %v4891
    %v5260 = vpack.c.b16 %v4900, %v4892
    %v5261 = vpack.c.b16 %v4901, %v4893
    %v5262 = vpack.c.b16 %v4910, %v4902
    %v5263 = vpack.c.b16 %v4911, %v4903
    %v5264 = vpack.c.b16 %v4912, %v4904
    %v5265 = vpack.c.b16 %v4913, %v4905
    %v5266 = vpack.c.b16 %v4914, %v4906
    %v5267 = vpack.c.b16 %v4915, %v4907
    %v5268 = vpack.c.b16 %v4916, %v4908
    %v5269 = vpack.c.b16 %v4917, %v4909
    %v5270 = vpack.c.b16 %v4926, %v4918
    %v5271 = vpack.c.b16 %v4927, %v4919
    %v5272 = vpack.c.b16 %v4928, %v4920
    %v5273 = vpack.c.b16 %v4929, %v4921
    %v5274 = vpack.c.b16 %v4930, %v4922
    %v5275 = vpack.c.b16 %v4931, %v4923
    %v5276 = vpack.c.b16 %v4932, %v4924
    %v5277 = vpack.c.b16 %v4933, %v4925
    %v5278 = vpack.c.b16 %v4942, %v4934
    %v5279 = vpack.c.b16 %v4943, %v4935
    %v5280 = vpack.c.b16 %v4944, %v4936
    %v5281 = vpack.c.b16 %v4945, %v4937
    %v5282 = vpack.c.b16 %v4946, %v4938
    %v5283 = vpack.c.b16 %v4947, %v4939
    %v5284 = vpack.c.b16 %v4948, %v4940
    %v5285 = vpack.c.b16 %v4949, %v4941
    %v5286 = vpack.c.b16 %v4958, %v4950
    %v5287 = vpack.c.b16 %v4959, %v4951
    %v5288 = vpack.c.b16 %v4960, %v4952
    %v5289 = vpack.c.b16 %v4961, %v4953
    %v5290 = vpack.c.b16 %v4962, %v4954
    %v5291 = vpack.c.b16 %v4963, %v4955
    %v5292 = vpack.c.b16 %v4964, %v4956
    %v5293 = vpack.c.b16 %v4965, %v4957
    %v5294 = vpack.c.b16 %v4974, %v4966
    %v5295 = vpack.c.b16 %v4975, %v4967
    %v5296 = vpack.c.b16 %v4976, %v4968
    %v5297 = vpack.c.b16 %v4977, %v4969
    %v5298 = vpack.c.b16 %v4978, %v4970
    %v5299 = vpack.c.b16 %v4979, %v4971
    %v5300 = vpack.c.b16 %v4980, %v4972
    %v5301 = vpack.c.b16 %v4981, %v4973
    %v5302 = vpack.c.b16 %v4990, %v4982
    %v5303 = vpack.c.b16 %v4991, %v4983
    %v5304 = vpack.c.b16 %v4992, %v4984
    %v5305 = vpack.c.b16 %v4993, %v4985
    %v5306 = vpack.c.b16 %v4994, %v4986
    %v5307 = vpack.c.b16 %v4995, %v4987
    %v5308 = vpack.c.b16 %v4996, %v4988
    %v5309 = vpack.c.b16 %v4997, %v4989
    %v5310 = vpack.c.b16 %v5006, %v4998
    %v5311 = vpack.c.b16 %v5007, %v4999
    %v5312 = vpack.c.b16 %v5008, %v5000
    %v5313 = vpack.c.b16 %v5009, %v5001
    %v5314 = vpack.c.b16 %v5010, %v5002
    %v5315 = vpack.c.b16 %v5011, %v5003
    %v5316 = vpack.c.b16 %v5012, %v5004
    %v5317 = vpack.c.b16 %v5013, %v5005
    %v5318 = vpack.c.b16 %v5022, %v5014
    %v5319 = vpack.c.b16 %v5023, %v5015
    %v5320 = vpack.c.b16 %v5024, %v5016
    %v5321 = vpack.c.b16 %v5025, %v5017
    %v5322 = vpack.c.b16 %v5026, %v5018
    %v5323 = vpack.c.b16 %v5027, %v5019
    %v5324 = vpack.c.b16 %v5028, %v5020
    %v5325 = vpack.c.b16 %v5029, %v5021
    %v5326 = vpack.c.b16 %v5038, %v5030
    %v5327 = vpack.c.b16 %v5039, %v5031
    %v5328 = vpack.c.b16 %v5040, %v5032
    %v5329 = vpack.c.b16 %v5041, %v5033
    %v5330 = vpack.c.b16 %v5042, %v5034
    %v5331 = vpack.c.b16 %v5043, %v5035
    %v5332 = vpack.c.b16 %v5044, %v5036
    %v5333 = vpack.c.b16 %v5045, %v5037
    %v5334 = vpack.c.b16 %v5054, %v5046
    %v5335 = vpack.c.b16 %v5055, %v5047
    %v5336 = vpack.c.b16 %v5056, %v5048
    %v5337 = vpack.c.b16 %v5057, %v5049
    %v5338 = vpack.c.b16 %v5058, %v5050
    %v5339 = vpack.c.b16 %v5059, %v5051
    %v5340 = vpack.c.b16 %v5060, %v5052
    %v5341 = vpack.c.b16 %v5061, %v5053
    %v5342 = vpack.c.b16 %v5070, %v5062
    %v5343 = vpack.c.b16 %v5071, %v5063
    %v5344 = vpack.c.b16 %v5072, %v5064
    %v5345 = vpack.c.b16 %v5073, %v5065
    %v5346 = vpack.c.b16 %v5074, %v5066
    %v5347 = vpack.c.b16 %v5075, %v5067
    %v5348 = vpack.c.b16 %v5076, %v5068
    %v5349 = vpack.c.b16 %v5077, %v5069
    %v5350 = vpack.c.b16 %v5086, %v5078
    %v5351 = vpack.c.b16 %v5087, %v5079
    %v5352 = vpack.c.b16 %v5088, %v5080
    %v5353 = vpack.c.b16 %v5089, %v5081
    %v5354 = vpack.c.b16 %v5090, %v5082
    %v5355 = vpack.c.b16 %v5091, %v5083
    %v5356 = vpack.c.b16 %v5092, %v5084
    %v5357 = vpack.c.b16 %v5093, %v5085
    %v5358 = vpack.c.b16 %v5102, %v5094
    %v5359 = vpack.c.b16 %v5103, %v5095
    %v5360 = vpack.c.b16 %v5104, %v5096
    %v5361 = vpack.c.b16 %v5105, %v5097
    %v5362 = vpack.c.b16 %v5106, %v5098
    %v5363 = vpack.c.b16 %v5107, %v5099
    %v5364 = vpack.c.b16 %v5108, %v5100
    %v5365 = vpack.c.b16 %v5109, %v5101
    %5622 = vmatprep.subr.bf16.mxu0 %v5111
    %5623 = vmatpush1.bf16.msra.mxu0 %v5110
    %5624 = vmatprep.subr.bf16.mxu0 %v5119
    %5625 = vmatpush1.bf16.msra.mxu0 %v5118
    %5626 = vmatprep.subr.bf16.mxu0 %v5127
    %5627 = vmatpush1.bf16.msra.mxu0 %v5126
    %5628 = vmatprep.subr.bf16.mxu0 %v5135
    %5629 = vmatpush1.bf16.msra.mxu0 %v5134
    %5630 = vmatprep.subr.bf16.mxu0 %v5143
    %5631 = vmatpush1.bf16.msra.mxu0 %v5142
    %5632 = vmatprep.subr.bf16.mxu0 %v5151
    %5633 = vmatpush1.bf16.msra.mxu0 %v5150
    %5634 = vmatprep.subr.bf16.mxu0 %v5159
    %5635 = vmatpush1.bf16.msra.mxu0 %v5158
    %5636 = vmatprep.subr.bf16.mxu0 %v5167
    %5637 = vmatpush1.bf16.msra.mxu0 %v5166
    %5638 = vmatprep.subr.bf16.mxu0 %v5175
    %5639 = vmatpush1.bf16.msra.mxu0 %v5174
    %5640 = vmatprep.subr.bf16.mxu0 %v5183
    %5641 = vmatpush1.bf16.msra.mxu0 %v5182
    %5642 = vmatprep.subr.bf16.mxu0 %v5191
    %5643 = vmatpush1.bf16.msra.mxu0 %v5190
    %5644 = vmatprep.subr.bf16.mxu0 %v5199
    %5645 = vmatpush1.bf16.msra.mxu0 %v5198
    %5646 = vmatprep.subr.bf16.mxu0 %v5207
    %5647 = vmatpush1.bf16.msra.mxu0 %v5206
    %5648 = vmatprep.subr.bf16.mxu0 %v5215
    %5649 = vmatpush1.bf16.msra.mxu0 %v5214
    %5650 = vmatprep.subr.bf16.mxu0 %v5223
    %5651 = vmatpush1.bf16.msra.mxu0 %v5222
    %5652 = vmatprep.subr.bf16.mxu0 %v5231
    %5653 = vmatpush1.bf16.msra.mxu0 %v5230
    %5654 = vmatprep.mubr.bf16.mxu0 %v4041
    %5655 = vmatmul.mubr.bf16.gmra.mrb[0].mxu0 %v4040
    %v5656 = vpop.f32.mrb[0].mxu0
    %v5657 = vadd.f32 %v4305, %v5656
    %v5658 = vpop.f32.mrb[0].mxu0
    %v5659 = vadd.f32 %v4309, %v5658
    %v5660 = vpop.f32.mrb[0].mxu0
    %v5661 = vpop.f32.mrb[0].mxu0
    %5662 = vdwg.mxu0
    %5663 = vmatprep.subr.bf16.mxu0 %v5239
    %5664 = vmatpush1.bf16.msra.mxu0 %v5238
    %5665 = vmatprep.subr.bf16.mxu0 %v5247
    %5666 = vmatpush1.bf16.msra.mxu0 %v5246
    %5667 = vmatprep.subr.bf16.mxu0 %v5255
    %5668 = vmatpush1.bf16.msra.mxu0 %v5254
    %5669 = vmatprep.subr.bf16.mxu0 %v5263
    %5670 = vmatpush1.bf16.msra.mxu0 %v5262
    %5671 = vmatprep.subr.bf16.mxu0 %v5271
    %5672 = vmatpush1.bf16.msra.mxu0 %v5270
    %5673 = vmatprep.subr.bf16.mxu0 %v5279
    %5674 = vmatpush1.bf16.msra.mxu0 %v5278
    %5675 = vmatprep.subr.bf16.mxu0 %v5287
    %5676 = vmatpush1.bf16.msra.mxu0 %v5286
    %5677 = vmatprep.subr.bf16.mxu0 %v5295
    %5678 = vmatpush1.bf16.msra.mxu0 %v5294
    %5679 = vmatprep.subr.bf16.mxu0 %v5303
    %5680 = vmatpush1.bf16.msra.mxu0 %v5302
    %5681 = vmatprep.subr.bf16.mxu0 %v5311
    %5682 = vmatpush1.bf16.msra.mxu0 %v5310
    %5683 = vmatprep.subr.bf16.mxu0 %v5319
    %5684 = vmatpush1.bf16.msra.mxu0 %v5318
    %5685 = vmatprep.subr.bf16.mxu0 %v5327
    %5686 = vmatpush1.bf16.msra.mxu0 %v5326
    %5687 = vmatprep.subr.bf16.mxu0 %v5335
    %5688 = vmatpush1.bf16.msra.mxu0 %v5334
    %5689 = vmatprep.subr.bf16.mxu0 %v5343
    %5690 = vmatpush1.bf16.msra.mxu0 %v5342
    %5691 = vmatprep.subr.bf16.mxu0 %v5351
    %5692 = vmatpush1.bf16.msra.mxu0 %v5350
    %5693 = vmatprep.subr.bf16.mxu0 %v5359
    %5694 = vmatpush1.bf16.msra.mxu0 %v5358
    %5695 = vmatprep.mubr.bf16.mxu0 %v4043
    %5696 = vmatmul.mubr.bf16.gmra.mrb[0].mxu0 %v4042
    %v5697 = vpop.f32.mrb[0].mxu0
    %v5698 = vadd.f32 %v5657, %v5697
    %v5699 = vpop.f32.mrb[0].mxu0
    %v5700 = vadd.f32 %v5659, %v5699
    %v5701 = vpop.f32.mrb[0].mxu0
    %v5702 = vpop.f32.mrb[0].mxu0
    %5703 = vdwg.mxu0
    %5704 = vmatprep.subr.bf16.mxu0 %v5113
    %5705 = vmatpush1.bf16.msra.mxu0 %v5112
    %5706 = vmatprep.subr.bf16.mxu0 %v5121
    %5707 = vmatpush1.bf16.msra.mxu0 %v5120
    %5708 = vmatprep.subr.bf16.mxu0 %v5129
    %5709 = vmatpush1.bf16.msra.mxu0 %v5128
    %5710 = vmatprep.subr.bf16.mxu0 %v5137
    %5711 = vmatpush1.bf16.msra.mxu0 %v5136
    %5712 = vmatprep.subr.bf16.mxu0 %v5145
    %5713 = vmatpush1.bf16.msra.mxu0 %v5144
    %5714 = vmatprep.subr.bf16.mxu0 %v5153
    %5715 = vmatpush1.bf16.msra.mxu0 %v5152
    %5716 = vmatprep.subr.bf16.mxu0 %v5161
    %5717 = vmatpush1.bf16.msra.mxu0 %v5160
    %5718 = vmatprep.subr.bf16.mxu0 %v5169
    %5719 = vmatpush1.bf16.msra.mxu0 %v5168
    %5720 = vmatprep.subr.bf16.mxu0 %v5177
    %5721 = vmatpush1.bf16.msra.mxu0 %v5176
    %5722 = vmatprep.subr.bf16.mxu0 %v5185
    %5723 = vmatpush1.bf16.msra.mxu0 %v5184
    %5724 = vmatprep.subr.bf16.mxu0 %v5193
    %5725 = vmatpush1.bf16.msra.mxu0 %v5192
    %5726 = vmatprep.subr.bf16.mxu0 %v5201
    %5727 = vmatpush1.bf16.msra.mxu0 %v5200
    %5728 = vmatprep.subr.bf16.mxu0 %v5209
    %5729 = vmatpush1.bf16.msra.mxu0 %v5208
    %5730 = vmatprep.subr.bf16.mxu0 %v5217
    %5731 = vmatpush1.bf16.msra.mxu0 %v5216
    %5732 = vmatprep.subr.bf16.mxu0 %v5225
    %5733 = vmatpush1.bf16.msra.mxu0 %v5224
    %5734 = vmatprep.subr.bf16.mxu0 %v5233
    %5735 = vmatpush1.bf16.msra.mxu0 %v5232
    %5736 = vmatprep.mubr.bf16.mxu0 %v4041
    %5737 = vmatmul.mubr.bf16.gmra.mrb[0].mxu0 %v4040
    %v5738 = vpop.f32.mrb[0].mxu0
    %v5739 = vadd.f32 %v4313, %v5738
    %v5740 = vpop.f32.mrb[0].mxu0
    %v5741 = vadd.f32 %v4317, %v5740
    %v5742 = vpop.f32.mrb[0].mxu0
    %v5743 = vpop.f32.mrb[0].mxu0
    %5744 = vdwg.mxu0
    %5745 = vmatprep.subr.bf16.mxu0 %v5241
    %5746 = vmatpush1.bf16.msra.mxu0 %v5240
    %5747 = vmatprep.subr.bf16.mxu0 %v5249
    %5748 = vmatpush1.bf16.msra.mxu0 %v5248
    %5749 = vmatprep.subr.bf16.mxu0 %v5257
    %5750 = vmatpush1.bf16.msra.mxu0 %v5256
    %5751 = vmatprep.subr.bf16.mxu0 %v5265
    %5752 = vmatpush1.bf16.msra.mxu0 %v5264
    %5753 = vmatprep.subr.bf16.mxu0 %v5273
    %5754 = vmatpush1.bf16.msra.mxu0 %v5272
    %5755 = vmatprep.subr.bf16.mxu0 %v5281
    %5756 = vmatpush1.bf16.msra.mxu0 %v5280
    %5757 = vmatprep.subr.bf16.mxu0 %v5289
    %5758 = vmatpush1.bf16.msra.mxu0 %v5288
    %5759 = vmatprep.subr.bf16.mxu0 %v5297
    %5760 = vmatpush1.bf16.msra.mxu0 %v5296
    %5761 = vmatprep.subr.bf16.mxu0 %v5305
    %5762 = vmatpush1.bf16.msra.mxu0 %v5304
    %5763 = vmatprep.subr.bf16.mxu0 %v5313
    %5764 = vmatpush1.bf16.msra.mxu0 %v5312
    %5765 = vmatprep.subr.bf16.mxu0 %v5321
    %5766 = vmatpush1.bf16.msra.mxu0 %v5320
    %5767 = vmatprep.subr.bf16.mxu0 %v5329
    %5768 = vmatpush1.bf16.msra.mxu0 %v5328
    %5769 = vmatprep.subr.bf16.mxu0 %v5337
    %5770 = vmatpush1.bf16.msra.mxu0 %v5336
    %5771 = vmatprep.subr.bf16.mxu0 %v5345
    %5772 = vmatpush1.bf16.msra.mxu0 %v5344
    %5773 = vmatprep.subr.bf16.mxu0 %v5353
    %5774 = vmatpush1.bf16.msra.mxu0 %v5352
    %5775 = vmatprep.subr.bf16.mxu0 %v5361
    %5776 = vmatpush1.bf16.msra.mxu0 %v5360
    %5777 = vmatprep.mubr.bf16.mxu0 %v4043
    %5778 = vmatmul.mubr.bf16.gmra.mrb[0].mxu0 %v4042
    %v5779 = vpop.f32.mrb[0].mxu0
    %v5780 = vadd.f32 %v5739, %v5779
    %v5781 = vpop.f32.mrb[0].mxu0
    %v5782 = vadd.f32 %v5741, %v5781
    %v5783 = vpop.f32.mrb[0].mxu0
    %v5784 = vpop.f32.mrb[0].mxu0
    %5785 = vdwg.mxu0
    %5786 = vmatprep.subr.bf16.mxu0 %v5115
    %5787 = vmatpush1.bf16.msra.mxu0 %v5114
    %5788 = vmatprep.subr.bf16.mxu0 %v5123
    %5789 = vmatpush1.bf16.msra.mxu0 %v5122
    %5790 = vmatprep.subr.bf16.mxu0 %v5131
    %5791 = vmatpush1.bf16.msra.mxu0 %v5130
    %5792 = vmatprep.subr.bf16.mxu0 %v5139
    %5793 = vmatpush1.bf16.msra.mxu0 %v5138
    %5794 = vmatprep.subr.bf16.mxu0 %v5147
    %5795 = vmatpush1.bf16.msra.mxu0 %v5146
    %5796 = vmatprep.subr.bf16.mxu0 %v5155
    %5797 = vmatpush1.bf16.msra.mxu0 %v5154
    %5798 = vmatprep.subr.bf16.mxu0 %v5163
    %5799 = vmatpush1.bf16.msra.mxu0 %v5162
    %5800 = vmatprep.subr.bf16.mxu0 %v5171
    %5801 = vmatpush1.bf16.msra.mxu0 %v5170
    %5802 = vmatprep.subr.bf16.mxu0 %v5179
    %5803 = vmatpush1.bf16.msra.mxu0 %v5178
    %5804 = vmatprep.subr.bf16.mxu0 %v5187
    %5805 = vmatpush1.bf16.msra.mxu0 %v5186
    %5806 = vmatprep.subr.bf16.mxu0 %v5195
    %5807 = vmatpush1.bf16.msra.mxu0 %v5194
    %5808 = vmatprep.subr.bf16.mxu0 %v5203
    %5809 = vmatpush1.bf16.msra.mxu0 %v5202
    %5810 = vmatprep.subr.bf16.mxu0 %v5211
    %5811 = vmatpush1.bf16.msra.mxu0 %v5210
    %5812 = vmatprep.subr.bf16.mxu0 %v5219
    %5813 = vmatpush1.bf16.msra.mxu0 %v5218
    %5814 = vmatprep.subr.bf16.mxu0 %v5227
    %5815 = vmatpush1.bf16.msra.mxu0 %v5226
    %5816 = vmatprep.subr.bf16.mxu0 %v5235
    %5817 = vmatpush1.bf16.msra.mxu0 %v5234
    %5818 = vmatprep.mubr.bf16.mxu0 %v4041
    %5819 = vmatmul.mubr.bf16.gmra.mrb[0].mxu0 %v4040
    %v5820 = vpop.f32.mrb[0].mxu0
    %v5821 = vadd.f32 %v4321, %v5820
    %v5822 = vpop.f32.mrb[0].mxu0
    %v5823 = vadd.f32 %v4325, %v5822
    %v5824 = vpop.f32.mrb[0].mxu0
    %v5825 = vpop.f32.mrb[0].mxu0
    %5826 = vdwg.mxu0
    %5827 = vmatprep.subr.bf16.mxu0 %v5243
    %5828 = vmatpush1.bf16.msra.mxu0 %v5242
    %5829 = vmatprep.subr.bf16.mxu0 %v5251
    %5830 = vmatpush1.bf16.msra.mxu0 %v5250
    %5831 = vmatprep.subr.bf16.mxu0 %v5259
    %5832 = vmatpush1.bf16.msra.mxu0 %v5258
    %5833 = vmatprep.subr.bf16.mxu0 %v5267
    %5834 = vmatpush1.bf16.msra.mxu0 %v5266
    %5835 = vmatprep.subr.bf16.mxu0 %v5275
    %5836 = vmatpush1.bf16.msra.mxu0 %v5274
    %5837 = vmatprep.subr.bf16.mxu0 %v5283
    %5838 = vmatpush1.bf16.msra.mxu0 %v5282
    %5839 = vmatprep.subr.bf16.mxu0 %v5291
    %5840 = vmatpush1.bf16.msra.mxu0 %v5290
    %5841 = vmatprep.subr.bf16.mxu0 %v5299
    %5842 = vmatpush1.bf16.msra.mxu0 %v5298
    %5843 = vmatprep.subr.bf16.mxu0 %v5307
    %5844 = vmatpush1.bf16.msra.mxu0 %v5306
    %5845 = vmatprep.subr.bf16.mxu0 %v5315
    %5846 = vmatpush1.bf16.msra.mxu0 %v5314
    %5847 = vmatprep.subr.bf16.mxu0 %v5323
    %5848 = vmatpush1.bf16.msra.mxu0 %v5322
    %5849 = vmatprep.subr.bf16.mxu0 %v5331
    %5850 = vmatpush1.bf16.msra.mxu0 %v5330
    %5851 = vmatprep.subr.bf16.mxu0 %v5339
    %5852 = vmatpush1.bf16.msra.mxu0 %v5338
    %5853 = vmatprep.subr.bf16.mxu0 %v5347
    %5854 = vmatpush1.bf16.msra.mxu0 %v5346
    %5855 = vmatprep.subr.bf16.mxu0 %v5355
    %5856 = vmatpush1.bf16.msra.mxu0 %v5354
    %5857 = vmatprep.subr.bf16.mxu0 %v5363
    %5858 = vmatpush1.bf16.msra.mxu0 %v5362
    %5859 = vmatprep.mubr.bf16.mxu0 %v4043
    %5860 = vmatmul.mubr.bf16.gmra.mrb[0].mxu0 %v4042
    %v5861 = vpop.f32.mrb[0].mxu0
    %v5862 = vadd.f32 %v5821, %v5861
    %v5863 = vpop.f32.mrb[0].mxu0
    %v5864 = vadd.f32 %v5823, %v5863
    %v5865 = vpop.f32.mrb[0].mxu0
    %v5866 = vpop.f32.mrb[0].mxu0
    %5867 = vdwg.mxu0
    %5868 = vmatprep.subr.bf16.mxu0 %v5117
    %5869 = vmatpush1.bf16.msra.mxu0 %v5116
    %5870 = vmatprep.subr.bf16.mxu0 %v5125
    %5871 = vmatpush1.bf16.msra.mxu0 %v5124
    %5872 = vmatprep.subr.bf16.mxu0 %v5133
    %5873 = vmatpush1.bf16.msra.mxu0 %v5132
    %5874 = vmatprep.subr.bf16.mxu0 %v5141
    %5875 = vmatpush1.bf16.msra.mxu0 %v5140
    %5876 = vmatprep.subr.bf16.mxu0 %v5149
    %5877 = vmatpush1.bf16.msra.mxu0 %v5148
    %5878 = vmatprep.subr.bf16.mxu0 %v5157
    %5879 = vmatpush1.bf16.msra.mxu0 %v5156
    %5880 = vmatprep.subr.bf16.mxu0 %v5165
    %5881 = vmatpush1.bf16.msra.mxu0 %v5164
    %5882 = vmatprep.subr.bf16.mxu0 %v5173
    %5883 = vmatpush1.bf16.msra.mxu0 %v5172
    %5884 = vmatprep.subr.bf16.mxu0 %v5181
    %5885 = vmatpush1.bf16.msra.mxu0 %v5180
    %5886 = vmatprep.subr.bf16.mxu0 %v5189
    %5887 = vmatpush1.bf16.msra.mxu0 %v5188
    %5888 = vmatprep.subr.bf16.mxu0 %v5197
    %5889 = vmatpush1.bf16.msra.mxu0 %v5196
    %5890 = vmatprep.subr.bf16.mxu0 %v5205
    %5891 = vmatpush1.bf16.msra.mxu0 %v5204
    %5892 = vmatprep.subr.bf16.mxu0 %v5213
    %5893 = vmatpush1.bf16.msra.mxu0 %v5212
    %5894 = vmatprep.subr.bf16.mxu0 %v5221
    %5895 = vmatpush1.bf16.msra.mxu0 %v5220
    %5896 = vmatprep.subr.bf16.mxu0 %v5229
    %5897 = vmatpush1.bf16.msra.mxu0 %v5228
    %5898 = vmatprep.subr.bf16.mxu0 %v5237
    %5899 = vmatpush1.bf16.msra.mxu0 %v5236
    %5900 = vmatprep.mubr.bf16.mxu0 %v4041
    %5901 = vmatmul.mubr.bf16.gmra.mrb[0].mxu0 %v4040
    %v5902 = vpop.f32.mrb[0].mxu0
    %v5903 = vadd.f32 %v4329, %v5902
    %v5904 = vpop.f32.mrb[0].mxu0
    %v5905 = vadd.f32 %v4333, %v5904
    %v5906 = vpop.f32.mrb[0].mxu0
    %v5907 = vpop.f32.mrb[0].mxu0
    %5908 = vdwg.mxu0
    %5909 = vmatprep.subr.bf16.mxu0 %v5245
    %5910 = vmatpush1.bf16.msra.mxu0 %v5244
    %5911 = vmatprep.subr.bf16.mxu0 %v5253
    %5912 = vmatpush1.bf16.msra.mxu0 %v5252
    %5913 = vmatprep.subr.bf16.mxu0 %v5261
    %5914 = vmatpush1.bf16.msra.mxu0 %v5260
    %5915 = vmatprep.subr.bf16.mxu0 %v5269
    %5916 = vmatpush1.bf16.msra.mxu0 %v5268
    %5917 = vmatprep.subr.bf16.mxu0 %v5277
    %5918 = vmatpush1.bf16.msra.mxu0 %v5276
    %5919 = vmatprep.subr.bf16.mxu0 %v5285
    %5920 = vmatpush1.bf16.msra.mxu0 %v5284
    %5921 = vmatprep.subr.bf16.mxu0 %v5293
    %5922 = vmatpush1.bf16.msra.mxu0 %v5292
    %5923 = vmatprep.subr.bf16.mxu0 %v5301
    %5924 = vmatpush1.bf16.msra.mxu0 %v5300
    %5925 = vmatprep.subr.bf16.mxu0 %v5309
    %5926 = vmatpush1.bf16.msra.mxu0 %v5308
    %5927 = vmatprep.subr.bf16.mxu0 %v5317
    %5928 = vmatpush1.bf16.msra.mxu0 %v5316
    %5929 = vmatprep.subr.bf16.mxu0 %v5325
    %5930 = vmatpush1.bf16.msra.mxu0 %v5324
    %5931 = vmatprep.subr.bf16.mxu0 %v5333
    %5932 = vmatpush1.bf16.msra.mxu0 %v5332
    %5933 = vmatprep.subr.bf16.mxu0 %v5341
    %5934 = vmatpush1.bf16.msra.mxu0 %v5340
    %5935 = vmatprep.subr.bf16.mxu0 %v5349
    %5936 = vmatpush1.bf16.msra.mxu0 %v5348
    %5937 = vmatprep.subr.bf16.mxu0 %v5357
    %5938 = vmatpush1.bf16.msra.mxu0 %v5356
    %5939 = vmatprep.subr.bf16.mxu0 %v5365
    %5940 = vmatpush1.bf16.msra.mxu0 %v5364
    %5941 = vmatprep.mubr.bf16.mxu0 %v4043
    %5942 = vmatmul.mubr.bf16.gmra.mrb[0].mxu0 %v4042
    %v5943 = vpop.f32.mrb[0].mxu0
    %v5944 = vadd.f32 %v5903, %v5943
    %v5945 = vpop.f32.mrb[0].mxu0
    %v5946 = vadd.f32 %v5905, %v5945
    %v5947 = vpop.f32.mrb[0].mxu0
    %v5948 = vpop.f32.mrb[0].mxu0
    %5949 = vdwg.mxu0
    %5950 = vst [vmem:[#allocation16] sm:$0xff] %v5698
    %5951 = vst [vmem:[#allocation16 + $0x8] sm:$0xff] %v5700
    %5952 = vst [vmem:[#allocation16 + $0x10] sm:$0xff] %v5780
    %5953 = vst [vmem:[#allocation16 + $0x18] sm:$0xff] %v5782
    %5954 = vst [vmem:[#allocation16 + $0x20] sm:$0xff] %v5862
    %5955 = vst [vmem:[#allocation16 + $0x28] sm:$0xff] %v5864
    %5956 = vst [vmem:[#allocation16 + $0x30] sm:$0xff] %v5944
    %5957 = vst [vmem:[#allocation16 + $0x38] sm:$0xff] %v5946
    // Predicated region
    $region150: #{tpu_custom_call.1} parent=1 // pred_check
      _
    $region151: #{tpu_custom_call.1} parent=1 // pred_check_branch
      %5959 = sbr.rel (0) target = $region153
    $region152: #{tpu_custom_call.1} parent=1 // pred_region
      %s5961 = ssub.s32 1024, 1024
      %5962 = vsyncadd [#allocation4], %s5961
      %s5964 = sshll.u32 [#allocation16], 4
      %s5965 = int_to_ptr.vmem [resolvable:$true] %s5964
      %5967 = dma.vmem_to_hbm [thread:$0]  %s5965, 1024, %s59, [#allocation4]
    $region153: #{tpu_custom_call.1} parent=1 // pred_fallthru
      _
    // Predicated region
    $region154: #{tpu_custom_call.1} parent=1 // pred_check
      _
    $region155: #{tpu_custom_call.1} parent=1 // pred_check_branch
      %5969 = sbr.rel (0) target = $region157
    $region156: #{tpu_custom_call.1} parent=1 // pred_region
      %5970 = dma.done [#allocation4], 1024
    $region157: #{tpu_custom_call.1} parent=1 // pred_fallthru
      _
    %5971 = vsyncpa [#allocation3], 1
    %5972 = vsyncpa [#allocation6], 1
    %5973 = vsyncpa [#allocation9], 1
    %5974 = vsyncpa [#allocation12], 1
    %5975 = vsyncpa [#allocation15], 1
    %5976 = vsyncpa [#allocation4], 1

</llo_original>
